<compile_context>
chip_gen: v5e
topology: v5e:2x2
jax: 0.10.0
libtpu: 0.0.40
codegen_flags: <defaults>
</compile_context>

<pallas_src>
import functools

import jax
import jax.numpy as jnp
from jax import lax
from jax.experimental import pallas as pl
from jax.experimental.pallas import tpu as pltpu

EXPANSION = 4
BN_EPS = 1e-5


# ---------------------------------------------------------------------------
# Static helpers
# ---------------------------------------------------------------------------
def _round_up(v, m):
    return (v + m - 1) // m * m


def _conv2_plan(stride):
    """Static per-phase-plane tap plan for the 3x3 conv.

    Returns a list of (plane_idx, pr, pc, drs, dcs).  The 3x3 taps covered by a
    plane are the cartesian product drs x dcs with kh = stride*dr + pr and
    kw = stride*dc + pc.  stride=1 -> one plane holding all 9 taps; stride=2 ->
    four space-to-depth planes holding 4 + 2 + 2 + 1 = 9 taps.
    """
    if stride == 1:
        return [(0, 0, 0, (0, 1, 2), (0, 1, 2))]
    plan = []
    for pr in (0, 1):
        for pc in (0, 1):
            drs = (0, 1) if pr == 0 else (0,)
            dcs = (0, 1) if pc == 0 else (0,)
            plan.append((2 * pr + pc, pr, pc, drs, dcs))
    return plan


# ---------------------------------------------------------------------------
# Fused Pallas kernel (n_img images per grid step)
# ---------------------------------------------------------------------------
def _bottleneck_kernel(xph_ref, w1_ref, s1_ref, b1_ref, w2p_ref, s2_ref, b2_ref,
                       w3_ref, s3_ref, b3_ref, *rest,
                       stride, proj, n_img, hq, wq, ho, wo_p, img_h, img_w):
    if proj:
        ws_ref, ss_ref, bs_ref, out_ref, h1s_ref = rest
    else:
        out_ref, h1s_ref = rest

    plan = _conv2_plan(stride)
    nph = len(plan)
    rows = nph * hq
    cin_p = xph_ref.shape[-1]
    cmid_p = w1_ref.shape[1]
    cexp_p = w3_ref.shape[1]

    for img in range(n_img):
        # ---- conv1 (1x1) + BN + ReLU over the whole phase block (bf16 MXU,
        #      f32 accumulate), stored into the bf16 VMEM scratch --------------
        x2d = xph_ref[img].reshape(rows * wq, cin_p)
        h1 = jnp.dot(x2d, w1_ref[...], preferred_element_type=jnp.float32)
        h1 = jnp.maximum(h1 * s1_ref[...] + b1_ref[...], 0.0)
        h1s_ref[...] = h1.reshape(rows, wq, cmid_p).astype(jnp.bfloat16)

        # ---- zero only the invalid perimeter bands of each plane: the 3x3
        #      "same" padding must see exact zeros, not relu(bn1 bias) ---------
        for (p, pr, pc, _drs, _dcs) in plan:
            base = p * hq
            r_lo = 1 if pr == 0 else 0
            r_hi = (img_h - pr) // stride           # last valid plane row
            c_lo = 1 if pc == 0 else 0
            c_hi = (img_w - pc) // stride           # last valid plane col
            if r_lo > 0:
                h1s_ref[base:base + r_lo] = jnp.zeros(
                    (r_lo, wq, cmid_p), jnp.bfloat16)
            if r_hi + 1 < hq:
                h1s_ref[base + r_hi + 1:base + hq] = jnp.zeros(
                    (hq - r_hi - 1, wq, cmid_p), jnp.bfloat16)
            if c_lo > 0:
                h1s_ref[base:base + hq, 0:c_lo] = jnp.zeros(
                    (hq, c_lo, cmid_p), jnp.bfloat16)
            if c_hi + 1 < wq:
                h1s_ref[base:base + hq, c_hi + 1:wq] = jnp.zeros(
                    (hq, wq - c_hi - 1, cmid_p), jnp.bfloat16)

        # ---- conv2 (3x3, stride): column shifts hoisted + K-packed taps ------
        #      weights are pre-packed in (plane, dr, dc) order in w2p_ref.
        acc = None
        koff = 0
        for (p, pr, pc, drs, dcs) in plan:
            base = p * hq
            shifted = [h1s_ref[base:base + hq, dc:dc + wo_p, :] for dc in dcs]
            wide = shifted[0] if len(shifted) == 1 else jnp.concatenate(
                shifted, axis=-1)                   # (hq, wo_p, len(dcs)*cmid_p)
            kdim = len(dcs) * cmid_p
            for dr in drs:
                tap = wide[dr:dr + ho].reshape(ho * wo_p, kdim)
                part = jnp.dot(tap, w2p_ref[koff:koff + kdim, :],
                               preferred_element_type=jnp.float32)
                acc = part if acc is None else acc + part
                koff += kdim
        h2 = jnp.maximum(acc * s2_ref[...] + b2_ref[...], 0.0)

        # ---- conv3 (1x1) + BN -------------------------------------------------
        main = jnp.dot(h2.astype(jnp.bfloat16), w3_ref[...],
                       preferred_element_type=jnp.float32)
        main = main * s3_ref[...] + b3_ref[...]

        # ---- shortcut (projection 1x1 + BN, or identity), add, ReLU -----------
        if stride == 2:
            # (odd,odd) phase plane == x[:, ::2, ::2]
            xs = xph_ref[img, 3 * hq:3 * hq + ho, 0:wo_p, :]
        else:
            # interior of the padded image == x
            xs = xph_ref[img, 1:1 + ho, 1:1 + wo_p, :]
        xs = xs.reshape(ho * wo_p, cin_p)
        if proj:
            sc = jnp.dot(xs, ws_ref[...], preferred_element_type=jnp.float32)
            sc = sc * ss_ref[...] + bs_ref[...]
        else:
            sc = xs.astype(jnp.float32)             # identity: cin_p == cexp_p

        out = jnp.maximum(main + sc, 0.0).reshape(ho, wo_p, cexp_p)
        out_ref[img] = out.astype(out_ref.dtype)


# ---------------------------------------------------------------------------
# Wrapper helpers
# ---------------------------------------------------------------------------
def _fold_bn(bnp, c_pad):
    gamma, beta, mean, var = bnp
    scale = gamma / jnp.sqrt(var + BN_EPS)
    bias = beta - mean * scale
    scale = jnp.pad(scale, (0, c_pad - scale.shape[0]), constant_values=1.0)
    bias = jnp.pad(bias, (0, c_pad - bias.shape[0]))
    return (scale.reshape(1, c_pad).astype(jnp.float32),
            bias.reshape(1, c_pad).astype(jnp.float32))


def _pad_mat(m, r_pad, c_pad):
    return jnp.pad(m, ((0, r_pad - m.shape[0]), (0, c_pad - m.shape[1])))


def _full_spec(shape):
    zeros = (0,) * len(shape)
    return pl.BlockSpec(shape, lambda b, _z=zeros: _z)


def _pick_images_per_block(n, block_bytes, fixed_bytes,
                           budget=16 * 1024 * 1024):
    """Largest per-step image count that fits the VMEM budget, keeps >=2 grid
    steps (so both v7x TensorCores stay busy) and divides the batch."""
    best = 1
    for cand in range(1, min(n, 8) + 1):
        if n % cand:
            continue
        if n > 1 and n // cand < 2:
            continue
        if fixed_bytes + cand * block_bytes > budget:
            continue
        best = cand
    return best


# ---------------------------------------------------------------------------
# Forward pass wrapper
# ---------------------------------------------------------------------------
@functools.partial(jax.jit, static_argnames=("stride",))
def bottleneck_forward(params, x_nchw, stride):
    assert stride in (1, 2), "ResNet bottlenecks only use stride 1 or 2"
    n, cin, img_h, img_w = x_nchw.shape
    cmid = params["conv1_w"].shape[0]
    cexp = params["conv3_w"].shape[0]
    proj = "conv_s_w" in params
    if not proj:
        assert cin == cexp, "identity shortcut requires in_channels == out*4"

    ho = (img_h - 1) // stride + 1
    wo = (img_w - 1) // stride + 1
    cin_p, cmid_p, cexp_p = (_round_up(c, 128) for c in (cin, cmid, cexp))
    wo_p = _round_up(wo, 8)
    wq = wo_p + 8                                   # plane width (aligned + halo)
    nph = 4 if stride == 2 else 1                   # space-to-depth phase planes
    hq = ho + 1 if stride == 2 else img_h + 2       # plane height (incl. halo)

    # ---- layout glue (bf16, one transpose + ONE combined pad [+ phase split]) -
    x = jnp.transpose(x_nchw, (0, 2, 3, 1)).astype(jnp.bfloat16)   # NHWC bf16
    if stride == 2:
        xpad = jnp.pad(x, ((0, 0), (1, 2 * hq - 1 - img_h),
                           (1, 2 * wq - 1 - img_w), (0, cin_p - cin)))
        xph = jnp.concatenate([xpad[:, pr::2, pc::2, :]
                               for pr in (0, 1) for pc in (0, 1)], axis=1)
    else:
        xpad = jnp.pad(x, ((0, 0), (1, hq - 1 - img_h),
                           (1, wq - 1 - img_w), (0, cin_p - cin)))
        xph = xpad                                  # (N, nph*hq, wq, cin_p) bf16

    # ---- weights: fold BN, pad to lane multiples, pack conv2 taps by plane ----
    w1 = _pad_mat(params["conv1_w"][:, :, 0, 0].T, cin_p, cmid_p).astype(jnp.bfloat16)
    s1, b1 = _fold_bn(params["bn1"], cmid_p)
    w2_hwio = jnp.transpose(params["conv2_w"], (2, 3, 1, 0))        # (3,3,ci,co)
    w2_hwio = jnp.pad(w2_hwio, ((0, 0), (0, 0),
                                (0, cmid_p - cmid), (0, cmid_p - cmid)))
    blocks = []
    for (_p, pr, pc, drs, dcs) in _conv2_plan(stride):
        for dr in drs:
            for dc in dcs:
                blocks.append(w2_hwio[stride * dr + pr, stride * dc + pc])
    w2p = jnp.concatenate(blocks, axis=0).astype(jnp.bfloat16)      # (9*cmid_p, cmid_p)
    s2, b2 = _fold_bn(params["bn2"], cmid_p)
    w3 = _pad_mat(params["conv3_w"][:, :, 0, 0].T, cmid_p, cexp_p).astype(jnp.bfloat16)
    s3, b3 = _fold_bn(params["bn3"], cexp_p)

    operands = [xph, w1, s1, b1, w2p, s2, b2, w3, s3, b3]
    weight_bytes = 2 * (cin_p * cmid_p + 9 * cmid_p * cmid_p + cmid_p * cexp_p
                        + (cin_p * cexp_p if proj else 0))
    if proj:
        ws = _pad_mat(params["conv_s_w"][:, :, 0, 0].T, cin_p, cexp_p).astype(jnp.bfloat16)
        ss, bs = _fold_bn(params["bn_s"], cexp_p)
        operands += [ws, ss, bs]

    # ---- per-step image blocking (amortize grid overhead at small spatial) ----
    block_bytes = 2 * (nph * hq * wq * cin_p + ho * wo_p * cexp_p) * 2   # bf16, dbl-buffered
    fixed_bytes = (nph * hq * wq * cmid_p * 2                            # h1 scratch
                   + ho * wo_p * (3 * cmid_p + 2 * cexp_p) * 4           # f32 transients
                   + weight_bytes)
    n_img = _pick_images_per_block(n, block_bytes, fixed_bytes)

    in_specs = [
        pl.BlockSpec((n_img, nph * hq, wq, cin_p), lambda b: (b, 0, 0, 0)),
        _full_spec((cin_p, cmid_p)), _full_spec((1, cmid_p)), _full_spec((1, cmid_p)),
        _full_spec((9 * cmid_p, cmid_p)), _full_spec((1, cmid_p)), _full_spec((1, cmid_p)),
        _full_spec((cmid_p, cexp_p)), _full_spec((1, cexp_p)), _full_spec((1, cexp_p)),
    ]
    if proj:
        in_specs += [_full_spec((cin_p, cexp_p)),
                     _full_spec((1, cexp_p)), _full_spec((1, cexp_p))]

    # ---- cost estimate: conv1 at full (pre-stride) resolution, bf16 I/O bytes -
    mm_per_out_pix = (9 * cmid_p * cmid_p + cmid_p * cexp_p
                      + (cin_p * cexp_p if proj else 0))
    flops = 2 * n * (nph * hq * wq * cin_p * cmid_p + ho * wo_p * mm_per_out_pix)
    bytes_accessed = (n * (nph * hq * wq * cin_p + ho * wo_p * cexp_p) * 2
                      + weight_bytes)

    kernel = functools.partial(
        _bottleneck_kernel, stride=stride, proj=proj, n_img=n_img, hq=hq, wq=wq,
        ho=ho, wo_p=wo_p, img_h=img_h, img_w=img_w)

    out = pl.pallas_call(
        kernel,
        out_shape=jax.ShapeDtypeStruct((n, ho, wo_p, cexp_p), jnp.bfloat16),
        grid=(n // n_img,),
        in_specs=in_specs,
        out_specs=pl.BlockSpec((n_img, ho, wo_p, cexp_p), lambda b: (b, 0, 0, 0)),
        scratch_shapes=[pltpu.VMEM((nph * hq, wq, cmid_p), jnp.bfloat16)],
        compiler_params=pltpu.CompilerParams(
            dimension_semantics=("parallel",),
            vmem_limit_bytes=64 * 1024 * 1024),
        cost_estimate=pl.CostEstimate(flops=flops, transcendentals=0,
                                      bytes_accessed=bytes_accessed),
    )(*operands)

    out = out[:, :, :wo, :cexp]                     # drop width / channel padding
    return jnp.transpose(out, (0, 3, 1, 2)).astype(jnp.float32)   # NCHW f32


# ---------------------------------------------------------------------------
# Parameter construction (deterministic, synthetic)
# ---------------------------------------------------------------------------
def _init_bn(key, c):
    k1, k2, k3, k4 = jax.random.split(key, 4)
    gamma = 1.0 + 0.1 * jax.random.normal(k1, (c,), jnp.float32)
    beta = 0.1 * jax.random.normal(k2, (c,), jnp.float32)
    mean = 0.1 * jax.random.normal(k3, (c,), jnp.float32)
    var = 0.5 + 0.5 * jnp.abs(jax.random.normal(k4, (c,), jnp.float32))
    return gamma, beta, mean, var


def init_bottleneck_params(key, in_channels, out_channels, stride):
    cmid = out_channels
    cexp = out_channels * EXPANSION
    ks = jax.random.split(key, 8)
    p = {
        "conv1_w": 0.1 * jax.random.normal(ks[0], (cmid, in_channels, 1, 1), jnp.float32),
        "bn1": _init_bn(ks[1], cmid),
        "conv2_w": 0.1 * jax.random.normal(ks[2], (cmid, cmid, 3, 3), jnp.float32),
        "bn2": _init_bn(ks[3], cmid),
        "conv3_w": 0.1 * jax.random.normal(ks[4], (cexp, cmid, 1, 1), jnp.float32),
        "bn3": _init_bn(ks[5], cexp),
    }
    if stride != 1 or in_channels != cexp:
        p["conv_s_w"] = 0.1 * jax.random.normal(ks[6], (cexp, in_channels, 1, 1), jnp.float32)
        p["bn_s"] = _init_bn(ks[7], cexp)
    return p


# ---------------------------------------------------------------------------
# Pure-JAX reference (mirrors the PyTorch module, eval-mode BN)
# ---------------------------------------------------------------------------
def bottleneck_reference(params, x_nchw, stride):
    def bn(y, bnp):
        g, b, m, v = (t.reshape(1, -1, 1, 1) for t in bnp)
        return (y - m) / jnp.sqrt(v + BN_EPS) * g + b

    def conv(y, wt, s, pad):
        return lax.conv_general_dilated(
            y, wt, (s, s), pad, dimension_numbers=("NCHW", "OIHW", "NCHW"),
            precision=lax.Precision.HIGHEST)

    h = jax.nn.relu(bn(conv(x_nchw, params["conv1_w"], 1, "VALID"), params["bn1"]))
    h = jax.nn.relu(bn(conv(h, params["conv2_w"], stride, ((1, 1), (1, 1))), params["bn2"]))
    h = bn(conv(h, params["conv3_w"], 1, "VALID"), params["bn3"])
    if "conv_s_w" in params:
        s = bn(conv(x_nchw, params["conv_s_w"], stride, "VALID"), params["bn_s"])
    else:
        s = x_nchw
    return jax.nn.relu(h + s)


# ---------------------------------------------------------------------------
if __name__ == "__main__":
    key = jax.random.PRNGKey(0)
    cases = [
        dict(n=2, cin=8, cout=4, h=16, w=16, stride=2),    # projection shortcut
        dict(n=2, cin=16, cout=4, h=16, w=16, stride=1),   # identity shortcut
    ]
    for i, c in enumerate(cases):
        kp, kx, key = jax.random.split(key, 3)
        x = jax.random.normal(kx, (c["n"], c["cin"], c["h"], c["w"]), jnp.float32)
        params = init_bottleneck_params(kp, c["cin"], c["cout"], c["stride"])

        out = jax.block_until_ready(bottleneck_forward(params, x, stride=c["stride"]))
        ref = bottleneck_reference(params, x, c["stride"])

        ho = (c["h"] - 1) // c["stride"] + 1
        wo = (c["w"] - 1) // c["stride"] + 1
        assert out.shape == ref.shape == (c["n"], c["cout"] * EXPANSION, ho, wo)
        assert jnp.allclose(out, ref, atol=5e-2, rtol=5e-2), f"mismatch in case {i}"

    print("KERNEL_OK")
</pallas_src>

<mosaic_0001>
module attributes {stable_mosaic.version = 11 : i64} {
  func.func @_bottleneck_kernel(%arg0: i32, %arg1: memref<1x36x16x128xbf16, #tpu.memory_space<vmem>>, %arg2: memref<128x128xbf16, #tpu.memory_space<vmem>>, %arg3: memref<1x128xf32, #tpu.memory_space<vmem>>, %arg4: memref<1x128xf32, #tpu.memory_space<vmem>>, %arg5: memref<1152x128xbf16, #tpu.memory_space<vmem>>, %arg6: memref<1x128xf32, #tpu.memory_space<vmem>>, %arg7: memref<1x128xf32, #tpu.memory_space<vmem>>, %arg8: memref<128x128xbf16, #tpu.memory_space<vmem>>, %arg9: memref<1x128xf32, #tpu.memory_space<vmem>>, %arg10: memref<1x128xf32, #tpu.memory_space<vmem>>, %arg11: memref<128x128xbf16, #tpu.memory_space<vmem>>, %arg12: memref<1x128xf32, #tpu.memory_space<vmem>>, %arg13: memref<1x128xf32, #tpu.memory_space<vmem>>, %arg14: memref<1x8x8x128xbf16, #tpu.memory_space<vmem>>, %arg15: memref<36x16x128xbf16, #tpu.memory_space<vmem>>) attributes {dimension_semantics = [#tpu.dimension_semantics<parallel>], iteration_bounds = array<i64: 2>, scalar_prefetch = 0 : i64, scratch_operands = 1 : i64, tpu.core_type = #tpu.core_type<tc>, window_params = [{transform_indices = @transform_0, window_bounds = array<i64: 1, 36, 16, 128>}, {pipeline_mode = #tpu.pipeline_mode<synchronous>, transform_indices = @transform_1, window_bounds = array<i64: 128, 128>}, {pipeline_mode = #tpu.pipeline_mode<synchronous>, transform_indices = @transform_2, window_bounds = array<i64: 1, 128>}, {pipeline_mode = #tpu.pipeline_mode<synchronous>, transform_indices = @transform_3, window_bounds = array<i64: 1, 128>}, {pipeline_mode = #tpu.pipeline_mode<synchronous>, transform_indices = @transform_4, window_bounds = array<i64: 1152, 128>}, {pipeline_mode = #tpu.pipeline_mode<synchronous>, transform_indices = @transform_5, window_bounds = array<i64: 1, 128>}, {pipeline_mode = #tpu.pipeline_mode<synchronous>, transform_indices = @transform_6, window_bounds = array<i64: 1, 128>}, {pipeline_mode = #tpu.pipeline_mode<synchronous>, transform_indices = @transform_7, window_bounds = array<i64: 128, 128>}, {pipeline_mode = #tpu.pipeline_mode<synchronous>, transform_indices = @transform_8, window_bounds = array<i64: 1, 128>}, {pipeline_mode = #tpu.pipeline_mode<synchronous>, transform_indices = @transform_9, window_bounds = array<i64: 1, 128>}, {pipeline_mode = #tpu.pipeline_mode<synchronous>, transform_indices = @transform_10, window_bounds = array<i64: 128, 128>}, {pipeline_mode = #tpu.pipeline_mode<synchronous>, transform_indices = @transform_11, window_bounds = array<i64: 1, 128>}, {pipeline_mode = #tpu.pipeline_mode<synchronous>, transform_indices = @transform_12, window_bounds = array<i64: 1, 128>}, {transform_indices = @transform_13, window_bounds = array<i64: 1, 8, 8, 128>}]} {
    %c0 = arith.constant 0 : index
    %c0_0 = arith.constant 0 : index
    %c0_1 = arith.constant 0 : index
    %c0_2 = arith.constant 0 : index
    %0 = vector.load %arg1[%c0, %c0_0, %c0_1, %c0_2] : memref<1x36x16x128xbf16, #tpu.memory_space<vmem>>, vector<1x36x16x128xbf16>
    %1 = vector.shape_cast %0 : vector<1x36x16x128xbf16> to vector<36x16x128xbf16>
    %2 = vector.shape_cast %1 : vector<36x16x128xbf16> to vector<576x128xbf16>
    %c0_3 = arith.constant 0 : index
    %c0_4 = arith.constant 0 : index
    %3 = vector.load %arg2[%c0_3, %c0_4] : memref<128x128xbf16, #tpu.memory_space<vmem>>, vector<128x128xbf16>
    %cst = arith.constant dense<0.000000e+00> : vector<576x128xf32>
    %4 = tpu.matmul %2, %3, %cst {dimension_numbers = #tpu.dot_dimension_numbers<[1], [0], [0], [1], [0, 0, 1, 1], [], []>} : vector<576x128xbf16>, vector<128x128xbf16>, vector<576x128xf32> -> vector<576x128xf32>
    %c0_5 = arith.constant 0 : index
    %c0_6 = arith.constant 0 : index
    %5 = vector.load %arg3[%c0_5, %c0_6] : memref<1x128xf32, #tpu.memory_space<vmem>>, vector<1x128xf32>
    %6 = vector.broadcast %5 : vector<1x128xf32> to vector<576x128xf32>
    %7 = arith.mulf %4, %6 : vector<576x128xf32>
    %c0_7 = arith.constant 0 : index
    %c0_8 = arith.constant 0 : index
    %8 = vector.load %arg4[%c0_7, %c0_8] : memref<1x128xf32, #tpu.memory_space<vmem>>, vector<1x128xf32>
    %9 = vector.broadcast %8 : vector<1x128xf32> to vector<576x128xf32>
    %10 = arith.addf %7, %9 : vector<576x128xf32>
    %cst_9 = arith.constant 0.000000e+00 : f32
    %11 = vector.broadcast %cst_9 : f32 to vector<576x128xf32>
    %12 = arith.maximumf %10, %11 : vector<576x128xf32>
    %13 = vector.shape_cast %12 : vector<576x128xf32> to vector<36x16x128xf32>
    %14 = arith.truncf %13 : vector<36x16x128xf32> to vector<36x16x128xbf16>
    %c0_10 = arith.constant 0 : index
    %c0_11 = arith.constant 0 : index
    %c0_12 = arith.constant 0 : index
    %15 = vector.load %arg15[%c0_10, %c0_11, %c0_12] : memref<36x16x128xbf16, #tpu.memory_space<vmem>>, vector<36x16x128xbf16>
    tpu.vector_store %arg15[%c0_10, %c0_11, %c0_12], %14 {strides = array<i32>} : memref<36x16x128xbf16, #tpu.memory_space<vmem>>, vector<36x16x128xbf16>,
    %cst_13 = arith.constant 0.000000e+00 : bf16
    %16 = vector.broadcast %cst_13 : bf16 to vector<1x16x128xbf16>
    %c0_14 = arith.constant 0 : index
    %c0_15 = arith.constant 0 : index
    %c0_16 = arith.constant 0 : index
    %17 = vector.load %arg15[%c0_14, %c0_15, %c0_16] : memref<36x16x128xbf16, #tpu.memory_space<vmem>>, vector<1x16x128xbf16>
    tpu.vector_store %arg15[%c0_14, %c0_15, %c0_16], %16 {strides = array<i32>} : memref<36x16x128xbf16, #tpu.memory_space<vmem>>, vector<1x16x128xbf16>,
    %cst_17 = arith.constant 0.000000e+00 : bf16
    %18 = vector.broadcast %cst_17 : bf16 to vector<9x1x128xbf16>
    %c0_18 = arith.constant 0 : index
    %c0_19 = arith.constant 0 : index
    %c0_20 = arith.constant 0 : index
    %19 = vector.load %arg15[%c0_18, %c0_19, %c0_20] : memref<36x16x128xbf16, #tpu.memory_space<vmem>>, vector<9x1x128xbf16>
    tpu.vector_store %arg15[%c0_18, %c0_19, %c0_20], %18 {strides = array<i32>} : memref<36x16x128xbf16, #tpu.memory_space<vmem>>, vector<9x1x128xbf16>,
    %cst_21 = arith.constant 0.000000e+00 : bf16
    %20 = vector.broadcast %cst_21 : bf16 to vector<9x7x128xbf16>
    %c0_22 = arith.constant 0 : index
    %c9 = arith.constant 9 : index
    %c0_23 = arith.constant 0 : index
    %21 = vector.load %arg15[%c0_22, %c9, %c0_23] : memref<36x16x128xbf16, #tpu.memory_space<vmem>>, vector<9x7x128xbf16>
    tpu.vector_store %arg15[%c0_22, %c9, %c0_23], %20 {strides = array<i32>} : memref<36x16x128xbf16, #tpu.memory_space<vmem>>, vector<9x7x128xbf16>,
    %cst_24 = arith.constant 0.000000e+00 : bf16
    %22 = vector.broadcast %cst_24 : bf16 to vector<1x16x128xbf16>
    %c9_25 = arith.constant 9 : index
    %c0_26 = arith.constant 0 : index
    %c0_27 = arith.constant 0 : index
    %23 = vector.load %arg15[%c9_25, %c0_26, %c0_27] : memref<36x16x128xbf16, #tpu.memory_space<vmem>>, vector<1x16x128xbf16>
    tpu.vector_store %arg15[%c9_25, %c0_26, %c0_27], %22 {strides = array<i32>} : memref<36x16x128xbf16, #tpu.memory_space<vmem>>, vector<1x16x128xbf16>,
    %cst_28 = arith.constant 0.000000e+00 : bf16
    %24 = vector.broadcast %cst_28 : bf16 to vector<9x8x128xbf16>
    %c9_29 = arith.constant 9 : index
    %c8 = arith.constant 8 : index
    %c0_30 = arith.constant 0 : index
    %25 = vector.load %arg15[%c9_29, %c8, %c0_30] : memref<36x16x128xbf16, #tpu.memory_space<vmem>>, vector<9x8x128xbf16>
    tpu.vector_store %arg15[%c9_29, %c8, %c0_30], %24 {strides = array<i32>} : memref<36x16x128xbf16, #tpu.memory_space<vmem>>, vector<9x8x128xbf16>,
    %cst_31 = arith.constant 0.000000e+00 : bf16
    %26 = vector.broadcast %cst_31 : bf16 to vector<1x16x128xbf16>
    %c26 = arith.constant 26 : index
    %c0_32 = arith.constant 0 : index
    %c0_33 = arith.constant 0 : index
    %27 = vector.load %arg15[%c26, %c0_32, %c0_33] : memref<36x16x128xbf16, #tpu.memory_space<vmem>>, vector<1x16x128xbf16>
    tpu.vector_store %arg15[%c26, %c0_32, %c0_33], %26 {strides = array<i32>} : memref<36x16x128xbf16, #tpu.memory_space<vmem>>, vector<1x16x128xbf16>,
    %cst_34 = arith.constant 0.000000e+00 : bf16
    %28 = vector.broadcast %cst_34 : bf16 to vector<9x1x128xbf16>
    %c18 = arith.constant 18 : index
    %c0_35 = arith.constant 0 : index
    %c0_36 = arith.constant 0 : index
    %29 = vector.load %arg15[%c18, %c0_35, %c0_36] : memref<36x16x128xbf16, #tpu.memory_space<vmem>>, vector<9x1x128xbf16>
    tpu.vector_store %arg15[%c18, %c0_35, %c0_36], %28 {strides = array<i32>} : memref<36x16x128xbf16, #tpu.memory_space<vmem>>, vector<9x1x128xbf16>,
    %cst_37 = arith.constant 0.000000e+00 : bf16
    %30 = vector.broadcast %cst_37 : bf16 to vector<9x7x128xbf16>
    %c18_38 = arith.constant 18 : index
    %c9_39 = arith.constant 9 : index
    %c0_40 = arith.constant 0 : index
    %31 = vector.load %arg15[%c18_38, %c9_39, %c0_40] : memref<36x16x128xbf16, #tpu.memory_space<vmem>>, vector<9x7x128xbf16>
    tpu.vector_store %arg15[%c18_38, %c9_39, %c0_40], %30 {strides = array<i32>} : memref<36x16x128xbf16, #tpu.memory_space<vmem>>, vector<9x7x128xbf16>,
    %cst_41 = arith.constant 0.000000e+00 : bf16
    %32 = vector.broadcast %cst_41 : bf16 to vector<1x16x128xbf16>
    %c35 = arith.constant 35 : index
    %c0_42 = arith.constant 0 : index
    %c0_43 = arith.constant 0 : index
    %33 = vector.load %arg15[%c35, %c0_42, %c0_43] : memref<36x16x128xbf16, #tpu.memory_space<vmem>>, vector<1x16x128xbf16>
    tpu.vector_store %arg15[%c35, %c0_42, %c0_43], %32 {strides = array<i32>} : memref<36x16x128xbf16, #tpu.memory_space<vmem>>, vector<1x16x128xbf16>,
    %cst_44 = arith.constant 0.000000e+00 : bf16
    %34 = vector.broadcast %cst_44 : bf16 to vector<9x8x128xbf16>
    %c27 = arith.constant 27 : index
    %c8_45 = arith.constant 8 : index
    %c0_46 = arith.constant 0 : index
    %35 = vector.load %arg15[%c27, %c8_45, %c0_46] : memref<36x16x128xbf16, #tpu.memory_space<vmem>>, vector<9x8x128xbf16>
    tpu.vector_store %arg15[%c27, %c8_45, %c0_46], %34 {strides = array<i32>} : memref<36x16x128xbf16, #tpu.memory_space<vmem>>, vector<9x8x128xbf16>,
    %c0_47 = arith.constant 0 : index
    %c0_48 = arith.constant 0 : index
    %c0_49 = arith.constant 0 : index
    %36 = vector.load %arg15[%c0_47, %c0_48, %c0_49] : memref<36x16x128xbf16, #tpu.memory_space<vmem>>, vector<9x8x128xbf16>
    %c0_50 = arith.constant 0 : index
    %c1 = arith.constant 1 : index
    %c0_51 = arith.constant 0 : index
    %37 = vector.load %arg15[%c0_50, %c1, %c0_51] : memref<36x16x128xbf16, #tpu.memory_space<vmem>>, vector<9x8x128xbf16>
    %38 = tpu.concatenate %36, %37 in 2 : vector<9x8x128xbf16>, vector<9x8x128xbf16> -> vector<9x8x256xbf16>
    %39 = vector.extract_strided_slice %38 {offsets = [0, 0, 0], sizes = [8, 8, 256], strides = [1, 1, 1]} : vector<9x8x256xbf16> to vector<8x8x256xbf16>
    %40 = vector.shape_cast %39 : vector<8x8x256xbf16> to vector<64x256xbf16>
    %c0_52 = arith.constant 0 : index
    %c0_53 = arith.constant 0 : index
    %41 = vector.load %arg5[%c0_52, %c0_53] : memref<1152x128xbf16, #tpu.memory_space<vmem>>, vector<256x128xbf16>
    %cst_54 = arith.constant dense<0.000000e+00> : vector<64x128xf32>
    %42 = tpu.matmul %40, %41, %cst_54 {dimension_numbers = #tpu.dot_dimension_numbers<[1], [0], [0], [1], [0, 0, 1, 1], [], []>} : vector<64x256xbf16>, vector<256x128xbf16>, vector<64x128xf32> -> vector<64x128xf32>
    %43 = vector.extract_strided_slice %38 {offsets = [1, 0, 0], sizes = [8, 8, 256], strides = [1, 1, 1]} : vector<9x8x256xbf16> to vector<8x8x256xbf16>
    %44 = vector.shape_cast %43 : vector<8x8x256xbf16> to vector<64x256xbf16>
    %c256 = arith.constant 256 : index
    %c0_55 = arith.constant 0 : index
    %45 = vector.load %arg5[%c256, %c0_55] : memref<1152x128xbf16, #tpu.memory_space<vmem>>, vector<256x128xbf16>
    %cst_56 = arith.constant dense<0.000000e+00> : vector<64x128xf32>
    %46 = tpu.matmul %44, %45, %cst_56 {dimension_numbers = #tpu.dot_dimension_numbers<[1], [0], [0], [1], [0, 0, 1, 1], [], []>} : vector<64x256xbf16>, vector<256x128xbf16>, vector<64x128xf32> -> vector<64x128xf32>
    %47 = arith.addf %42, %46 : vector<64x128xf32>
    %c9_57 = arith.constant 9 : index
    %c0_58 = arith.constant 0 : index
    %c0_59 = arith.constant 0 : index
    %48 = vector.load %arg15[%c9_57, %c0_58, %c0_59] : memref<36x16x128xbf16, #tpu.memory_space<vmem>>, vector<9x8x128xbf16>
    %49 = vector.extract_strided_slice %48 {offsets = [0, 0, 0], sizes = [8, 8, 128], strides = [1, 1, 1]} : vector<9x8x128xbf16> to vector<8x8x128xbf16>
    %50 = vector.shape_cast %49 : vector<8x8x128xbf16> to vector<64x128xbf16>
    %c512 = arith.constant 512 : index
    %c0_60 = arith.constant 0 : index
    %51 = vector.load %arg5[%c512, %c0_60] : memref<1152x128xbf16, #tpu.memory_space<vmem>>, vector<128x128xbf16>
    %cst_61 = arith.constant dense<0.000000e+00> : vector<64x128xf32>
    %52 = tpu.matmul %50, %51, %cst_61 {dimension_numbers = #tpu.dot_dimension_numbers<[1], [0], [0], [1], [0, 0, 1, 1], [], []>} : vector<64x128xbf16>, vector<128x128xbf16>, vector<64x128xf32> -> vector<64x128xf32>
    %53 = arith.addf %47, %52 : vector<64x128xf32>
    %54 = vector.extract_strided_slice %48 {offsets = [1, 0, 0], sizes = [8, 8, 128], strides = [1, 1, 1]} : vector<9x8x128xbf16> to vector<8x8x128xbf16>
    %55 = vector.shape_cast %54 : vector<8x8x128xbf16> to vector<64x128xbf16>
    %c640 = arith.constant 640 : index
    %c0_62 = arith.constant 0 : index
    %56 = vector.load %arg5[%c640, %c0_62] : memref<1152x128xbf16, #tpu.memory_space<vmem>>, vector<128x128xbf16>
    %cst_63 = arith.constant dense<0.000000e+00> : vector<64x128xf32>
    %57 = tpu.matmul %55, %56, %cst_63 {dimension_numbers = #tpu.dot_dimension_numbers<[1], [0], [0], [1], [0, 0, 1, 1], [], []>} : vector<64x128xbf16>, vector<128x128xbf16>, vector<64x128xf32> -> vector<64x128xf32>
    %58 = arith.addf %53, %57 : vector<64x128xf32>
    %c18_64 = arith.constant 18 : index
    %c0_65 = arith.constant 0 : index
    %c0_66 = arith.constant 0 : index
    %59 = vector.load %arg15[%c18_64, %c0_65, %c0_66] : memref<36x16x128xbf16, #tpu.memory_space<vmem>>, vector<9x8x128xbf16>
    %c18_67 = arith.constant 18 : index
    %c1_68 = arith.constant 1 : index
    %c0_69 = arith.constant 0 : index
    %60 = vector.load %arg15[%c18_67, %c1_68, %c0_69] : memref<36x16x128xbf16, #tpu.memory_space<vmem>>, vector<9x8x128xbf16>
    %61 = tpu.concatenate %59, %60 in 2 : vector<9x8x128xbf16>, vector<9x8x128xbf16> -> vector<9x8x256xbf16>
    %62 = vector.extract_strided_slice %61 {offsets = [0, 0, 0], sizes = [8, 8, 256], strides = [1, 1, 1]} : vector<9x8x256xbf16> to vector<8x8x256xbf16>
    %63 = vector.shape_cast %62 : vector<8x8x256xbf16> to vector<64x256xbf16>
    %c768 = arith.constant 768 : index
    %c0_70 = arith.constant 0 : index
    %64 = vector.load %arg5[%c768, %c0_70] : memref<1152x128xbf16, #tpu.memory_space<vmem>>, vector<256x128xbf16>
    %cst_71 = arith.constant dense<0.000000e+00> : vector<64x128xf32>
    %65 = tpu.matmul %63, %64, %cst_71 {dimension_numbers = #tpu.dot_dimension_numbers<[1], [0], [0], [1], [0, 0, 1, 1], [], []>} : vector<64x256xbf16>, vector<256x128xbf16>, vector<64x128xf32> -> vector<64x128xf32>
    %66 = arith.addf %58, %65 : vector<64x128xf32>
    %c27_72 = arith.constant 27 : index
    %c0_73 = arith.constant 0 : index
    %c0_74 = arith.constant 0 : index
    %67 = vector.load %arg15[%c27_72, %c0_73, %c0_74] : memref<36x16x128xbf16, #tpu.memory_space<vmem>>, vector<9x8x128xbf16>
    %68 = vector.extract_strided_slice %67 {offsets = [0, 0, 0], sizes = [8, 8, 128], strides = [1, 1, 1]} : vector<9x8x128xbf16> to vector<8x8x128xbf16>
    %69 = vector.shape_cast %68 : vector<8x8x128xbf16> to vector<64x128xbf16>
    %c1024 = arith.constant 1024 : index
    %c0_75 = arith.constant 0 : index
    %70 = vector.load %arg5[%c1024, %c0_75] : memref<1152x128xbf16, #tpu.memory_space<vmem>>, vector<128x128xbf16>
    %cst_76 = arith.constant dense<0.000000e+00> : vector<64x128xf32>
    %71 = tpu.matmul %69, %70, %cst_76 {dimension_numbers = #tpu.dot_dimension_numbers<[1], [0], [0], [1], [0, 0, 1, 1], [], []>} : vector<64x128xbf16>, vector<128x128xbf16>, vector<64x128xf32> -> vector<64x128xf32>
    %72 = arith.addf %66, %71 : vector<64x128xf32>
    %c0_77 = arith.constant 0 : index
    %c0_78 = arith.constant 0 : index
    %73 = vector.load %arg6[%c0_77, %c0_78] : memref<1x128xf32, #tpu.memory_space<vmem>>, vector<1x128xf32>
    %74 = vector.broadcast %73 : vector<1x128xf32> to vector<64x128xf32>
    %75 = arith.mulf %72, %74 : vector<64x128xf32>
    %c0_79 = arith.constant 0 : index
    %c0_80 = arith.constant 0 : index
    %76 = vector.load %arg7[%c0_79, %c0_80] : memref<1x128xf32, #tpu.memory_space<vmem>>, vector<1x128xf32>
    %77 = vector.broadcast %76 : vector<1x128xf32> to vector<64x128xf32>
    %78 = arith.addf %75, %77 : vector<64x128xf32>
    %cst_81 = arith.constant 0.000000e+00 : f32
    %79 = vector.broadcast %cst_81 : f32 to vector<64x128xf32>
    %80 = arith.maximumf %78, %79 : vector<64x128xf32>
    %81 = arith.truncf %80 : vector<64x128xf32> to vector<64x128xbf16>
    %c0_82 = arith.constant 0 : index
    %c0_83 = arith.constant 0 : index
    %82 = vector.load %arg8[%c0_82, %c0_83] : memref<128x128xbf16, #tpu.memory_space<vmem>>, vector<128x128xbf16>
    %cst_84 = arith.constant dense<0.000000e+00> : vector<64x128xf32>
    %83 = tpu.matmul %81, %82, %cst_84 {dimension_numbers = #tpu.dot_dimension_numbers<[1], [0], [0], [1], [0, 0, 1, 1], [], []>} : vector<64x128xbf16>, vector<128x128xbf16>, vector<64x128xf32> -> vector<64x128xf32>
    %c0_85 = arith.constant 0 : index
    %c0_86 = arith.constant 0 : index
    %84 = vector.load %arg9[%c0_85, %c0_86] : memref<1x128xf32, #tpu.memory_space<vmem>>, vector<1x128xf32>
    %85 = vector.broadcast %84 : vector<1x128xf32> to vector<64x128xf32>
    %86 = arith.mulf %83, %85 : vector<64x128xf32>
    %c0_87 = arith.constant 0 : index
    %c0_88 = arith.constant 0 : index
    %87 = vector.load %arg10[%c0_87, %c0_88] : memref<1x128xf32, #tpu.memory_space<vmem>>, vector<1x128xf32>
    %88 = vector.broadcast %87 : vector<1x128xf32> to vector<64x128xf32>
    %89 = arith.addf %86, %88 : vector<64x128xf32>
    %c0_89 = arith.constant 0 : index
    %c27_90 = arith.constant 27 : index
    %c0_91 = arith.constant 0 : index
    %c0_92 = arith.constant 0 : index
    %90 = vector.load %arg1[%c0_89, %c27_90, %c0_91, %c0_92] : memref<1x36x16x128xbf16, #tpu.memory_space<vmem>>, vector<1x8x8x128xbf16>
    %91 = vector.shape_cast %90 : vector<1x8x8x128xbf16> to vector<8x8x128xbf16>
    %92 = vector.shape_cast %91 : vector<8x8x128xbf16> to vector<64x128xbf16>
    %c0_93 = arith.constant 0 : index
    %c0_94 = arith.constant 0 : index
    %93 = vector.load %arg11[%c0_93, %c0_94] : memref<128x128xbf16, #tpu.memory_space<vmem>>, vector<128x128xbf16>
    %cst_95 = arith.constant dense<0.000000e+00> : vector<64x128xf32>
    %94 = tpu.matmul %92, %93, %cst_95 {dimension_numbers = #tpu.dot_dimension_numbers<[1], [0], [0], [1], [0, 0, 1, 1], [], []>} : vector<64x128xbf16>, vector<128x128xbf16>, vector<64x128xf32> -> vector<64x128xf32>
    %c0_96 = arith.constant 0 : index
    %c0_97 = arith.constant 0 : index
    %95 = vector.load %arg12[%c0_96, %c0_97] : memref<1x128xf32, #tpu.memory_space<vmem>>, vector<1x128xf32>
    %96 = vector.broadcast %95 : vector<1x128xf32> to vector<64x128xf32>
    %97 = arith.mulf %94, %96 : vector<64x128xf32>
    %c0_98 = arith.constant 0 : index
    %c0_99 = arith.constant 0 : index
    %98 = vector.load %arg13[%c0_98, %c0_99] : memref<1x128xf32, #tpu.memory_space<vmem>>, vector<1x128xf32>
    %99 = vector.broadcast %98 : vector<1x128xf32> to vector<64x128xf32>
    %100 = arith.addf %97, %99 : vector<64x128xf32>
    %101 = arith.addf %89, %100 : vector<64x128xf32>
    %cst_100 = arith.constant 0.000000e+00 : f32
    %102 = vector.broadcast %cst_100 : f32 to vector<64x128xf32>
    %103 = arith.maximumf %101, %102 : vector<64x128xf32>
    %104 = vector.shape_cast %103 : vector<64x128xf32> to vector<8x8x128xf32>
    %105 = arith.truncf %104 : vector<8x8x128xf32> to vector<8x8x128xbf16>
    %c0_101 = arith.constant 0 : index
    %c0_102 = arith.constant 0 : index
    %c0_103 = arith.constant 0 : index
    %c0_104 = arith.constant 0 : index
    %106 = vector.load %arg14[%c0_101, %c0_102, %c0_103, %c0_104] : memref<1x8x8x128xbf16, #tpu.memory_space<vmem>>, vector<1x8x8x128xbf16>
    %107 = vector.shape_cast %106 : vector<1x8x8x128xbf16> to vector<8x8x128xbf16>
    %108 = vector.shape_cast %105 : vector<8x8x128xbf16> to vector<1x8x8x128xbf16>
    tpu.vector_store %arg14[%c0_101, %c0_102, %c0_103, %c0_104], %108 {strides = array<i32>} : memref<1x8x8x128xbf16, #tpu.memory_space<vmem>>, vector<1x8x8x128xbf16>,
    return
  }
  func.func @transform_0(%arg0: i32) -> (i32, i32, i32, i32) {
    %c0_i32 = arith.constant 0 : i32
    %c0_i32_0 = arith.constant 0 : i32
    %c0_i32_1 = arith.constant 0 : i32
    %c0_i32_2 = arith.constant 0 : i32
    return %arg0, %c0_i32, %c0_i32_0, %c0_i32_1 : i32, i32, i32, i32
  }
  func.func @transform_1(%arg0: i32) -> (i32, i32) {
    %c0_i32 = arith.constant 0 : i32
    %c0_i32_0 = arith.constant 0 : i32
    %c0_i32_1 = arith.constant 0 : i32
    return %c0_i32, %c0_i32_0 : i32, i32
  }
  func.func @transform_2(%arg0: i32) -> (i32, i32) {
    %c0_i32 = arith.constant 0 : i32
    %c0_i32_0 = arith.constant 0 : i32
    %c0_i32_1 = arith.constant 0 : i32
    return %c0_i32, %c0_i32_0 : i32, i32
  }
  func.func @transform_3(%arg0: i32) -> (i32, i32) {
    %c0_i32 = arith.constant 0 : i32
    %c0_i32_0 = arith.constant 0 : i32
    %c0_i32_1 = arith.constant 0 : i32
    return %c0_i32, %c0_i32_0 : i32, i32
  }
  func.func @transform_4(%arg0: i32) -> (i32, i32) {
    %c0_i32 = arith.constant 0 : i32
    %c0_i32_0 = arith.constant 0 : i32
    %c0_i32_1 = arith.constant 0 : i32
    return %c0_i32, %c0_i32_0 : i32, i32
  }
  func.func @transform_5(%arg0: i32) -> (i32, i32) {
    %c0_i32 = arith.constant 0 : i32
    %c0_i32_0 = arith.constant 0 : i32
    %c0_i32_1 = arith.constant 0 : i32
    return %c0_i32, %c0_i32_0 : i32, i32
  }
  func.func @transform_6(%arg0: i32) -> (i32, i32) {
    %c0_i32 = arith.constant 0 : i32
    %c0_i32_0 = arith.constant 0 : i32
    %c0_i32_1 = arith.constant 0 : i32
    return %c0_i32, %c0_i32_0 : i32, i32
  }
  func.func @transform_7(%arg0: i32) -> (i32, i32) {
    %c0_i32 = arith.constant 0 : i32
    %c0_i32_0 = arith.constant 0 : i32
    %c0_i32_1 = arith.constant 0 : i32
    return %c0_i32, %c0_i32_0 : i32, i32
  }
  func.func @transform_8(%arg0: i32) -> (i32, i32) {
    %c0_i32 = arith.constant 0 : i32
    %c0_i32_0 = arith.constant 0 : i32
    %c0_i32_1 = arith.constant 0 : i32
    return %c0_i32, %c0_i32_0 : i32, i32
  }
  func.func @transform_9(%arg0: i32) -> (i32, i32) {
    %c0_i32 = arith.constant 0 : i32
    %c0_i32_0 = arith.constant 0 : i32
    %c0_i32_1 = arith.constant 0 : i32
    return %c0_i32, %c0_i32_0 : i32, i32
  }
  func.func @transform_10(%arg0: i32) -> (i32, i32) {
    %c0_i32 = arith.constant 0 : i32
    %c0_i32_0 = arith.constant 0 : i32
    %c0_i32_1 = arith.constant 0 : i32
    return %c0_i32, %c0_i32_0 : i32, i32
  }
  func.func @transform_11(%arg0: i32) -> (i32, i32) {
    %c0_i32 = arith.constant 0 : i32
    %c0_i32_0 = arith.constant 0 : i32
    %c0_i32_1 = arith.constant 0 : i32
    return %c0_i32, %c0_i32_0 : i32, i32
  }
  func.func @transform_12(%arg0: i32) -> (i32, i32) {
    %c0_i32 = arith.constant 0 : i32
    %c0_i32_0 = arith.constant 0 : i32
    %c0_i32_1 = arith.constant 0 : i32
    return %c0_i32, %c0_i32_0 : i32, i32
  }
  func.func @transform_13(%arg0: i32) -> (i32, i32, i32, i32) {
    %c0_i32 = arith.constant 0 : i32
    %c0_i32_0 = arith.constant 0 : i32
    %c0_i32_1 = arith.constant 0 : i32
    %c0_i32_2 = arith.constant 0 : i32
    return %arg0, %c0_i32, %c0_i32_0, %c0_i32_1 : i32, i32, i32, i32
  }
}

</mosaic_0001>

<llo_original>
// kernel: bottleneck_forward.1
$region0: #{bottleneck_forward.1}
  #allocation0 [shape = 'u32[]', space=smem, size = 0x4, offset = 0x4, fixed_abs, tag = 'smem constant byte address 0x4 - core index']
  #allocation1 [shape = 'u32[72,128]{1,0:T(1,128)}', space=vmem, size = 0x9000, scoped, tag = 'internal scratch']
  #allocation2 [shape = 'bf16[36,16,128]{2,1,0:T(8,128)(2,1)}', space=vmem, size = 0x24000, scoped, tag = 'scratch operand']
  %s0 = inlined_call_operand.vmem [shape: bf16[2,36,16,128], index: 0, kind: input, shape index: {}]
  %s1 = inlined_call_operand.vmem [shape: bf16[128,128], index: 1, kind: input, shape index: {}]
  %s2 = inlined_call_operand.vmem [shape: f32[1,128], index: 2, kind: input, shape index: {}]
  %s3 = inlined_call_operand.vmem [shape: f32[1,128], index: 3, kind: input, shape index: {}]
  %s4 = inlined_call_operand.vmem [shape: bf16[1152,128], index: 4, kind: input, shape index: {}]
  %s5 = inlined_call_operand.vmem [shape: f32[1,128], index: 5, kind: input, shape index: {}]
  %s6 = inlined_call_operand.vmem [shape: f32[1,128], index: 6, kind: input, shape index: {}]
  %s7 = inlined_call_operand.vmem [shape: bf16[128,128], index: 7, kind: input, shape index: {}]
  %s8 = inlined_call_operand.vmem [shape: f32[1,128], index: 8, kind: input, shape index: {}]
  %s9 = inlined_call_operand.vmem [shape: f32[1,128], index: 9, kind: input, shape index: {}]
  %s10 = inlined_call_operand.vmem [shape: bf16[128,128], index: 10, kind: input, shape index: {}]
  %s11 = inlined_call_operand.vmem [shape: f32[1,128], index: 11, kind: input, shape index: {}]
  %s12 = inlined_call_operand.vmem [shape: f32[1,128], index: 12, kind: input, shape index: {}]
  %s13 = inlined_call_operand.vmem [shape: bf16[2,8,8,128], index: 13, kind: output, shape index: {}]
  %s14 = sld [smem:[#allocation0]]
  $region85: #{bottleneck_forward.1} parent=0
    _
  %s16 = ssub.s32 1, %s14
  %s17 = scalar_select 0, %s16, %s14
  loop: start=0, step=1, limit=4
  $region2: #{bottleneck_forward.1} parent=0 // loop_pre_header
    _
  $region3: #{bottleneck_forward.1} parent=0 // loop_header
    %s19 = sphi 0, %s23
    %p20 = scmp.ge.s32.totalorder %s19, 4
    %s29 = sphi 0, %s31
    %s32 = sphi 0, %s29
    %s33 = sphi 0, %s32
    %s49 = sphi 0, %s33
    %s53 = sphi 0, %s53
    %s55 = sphi 0, %s53
    %s56 = sphi 0, %s55
    %s70 = sphi 0, %s56
    %s74 = sphi 0, %s74
    %s76 = sphi 0, %s74
    %s77 = sphi 0, %s76
    %s91 = sphi 0, %s77
    %s95 = sphi 0, %s95
    %s97 = sphi 0, %s95
    %s98 = sphi 0, %s97
    %s112 = sphi 0, %s98
    %s116 = sphi 0, %s116
    %s118 = sphi 0, %s116
    %s119 = sphi 0, %s118
    %s133 = sphi 0, %s119
    %s137 = sphi 0, %s137
    %s139 = sphi 0, %s137
    %s140 = sphi 0, %s139
    %s154 = sphi 0, %s140
    %s158 = sphi 0, %s158
    %s160 = sphi 0, %s158
    %s161 = sphi 0, %s160
    %s175 = sphi 0, %s161
    %s179 = sphi 0, %s179
    %s181 = sphi 0, %s179
    %s182 = sphi 0, %s181
    %s196 = sphi 0, %s182
    %s200 = sphi 0, %s200
    %s202 = sphi 0, %s200
    %s203 = sphi 0, %s202
    %s217 = sphi 0, %s203
    %s221 = sphi 0, %s221
    %s223 = sphi 0, %s221
    %s224 = sphi 0, %s223
    %s238 = sphi 0, %s224
    %s242 = sphi 0, %s242
    %s244 = sphi 0, %s242
    %s245 = sphi 0, %s244
    %s259 = sphi 0, %s245
    %s263 = sphi 0, %s263
    %s265 = sphi 0, %s263
    %s266 = sphi 0, %s265
    %s280 = sphi 0, %s266
    %s284 = sphi 0, %s284
    %s286 = sphi 0, %s284
    %s287 = sphi 0, %s286
    %s301 = sphi 0, %s287
    %s307 = sphi 0, %s309
    %s310 = sphi 0, %s307
    %s311 = sphi 0, %s310
    %s327 = sphi 0, %s311
  $region4: #{bottleneck_forward.1} parent=0 // loop_header_branch
    %22 = sbr.rel (%p20) target = $region8
  $region5: #{bottleneck_forward.1} parent=0 // loop_body
    %s24 = ssub.s32 %s19, 1
    %s25 = ssub.s32 %s19, 2
    %s26 = sadd.s32 %s19, 1
    %s27 = ssub.s32 %s19, %s26
    %p28 = scmp.eq.s32.totalorder %s27, 0
    %s30 = sadd.s32 %s29, 1
    %s31 = scalar_select %p28, %s29, %s30
    %p34 = pneg %p28
    %p35 = scmp.eq.s32.totalorder %s19, 1
    %p36 = por %p34, %p35
    %p37 = scmp.ne.s32.totalorder %s29, %s32
    %p38 = scmp.eq.s32.totalorder %s19, 0
    %p39 = por %p37, %p38
    %p40 = scmp.ne.s32.totalorder %s29, %s32
    %p41 = scmp.eq.s32.totalorder %s24, 1
    %p42 = por %p40, %p41
    %p43 = scmp.ne.s32.totalorder %s32, %s33
    %p44 = scmp.eq.s32.totalorder %s24, 0
    %p45 = por %p43, %p44
    %p46 = scmp.ne.s32.totalorder %s32, %s33
    %p47 = scmp.eq.s32.totalorder %s25, 1
    %p48 = por %p46, %p47
    %p50 = scmp.ne.s32.totalorder %s33, %s49
    %p51 = scmp.eq.s32.totalorder %s25, 0
    %p52 = por %p50, %p51
    %s54 = sadd.s32 %s53, 1
    %p57 = scmp.eq.s32.totalorder %s19, 1
    %p58 = scmp.ne.s32.totalorder %s53, %s55
    %p59 = scmp.eq.s32.totalorder %s19, 0
    %p60 = por %p58, %p59
    %p61 = scmp.ne.s32.totalorder %s53, %s55
    %p62 = scmp.eq.s32.totalorder %s24, 1
    %p63 = por %p61, %p62
    %p64 = scmp.ne.s32.totalorder %s55, %s56
    %p65 = scmp.eq.s32.totalorder %s24, 0
    %p66 = por %p64, %p65
    %p67 = scmp.ne.s32.totalorder %s55, %s56
    %p68 = scmp.eq.s32.totalorder %s25, 1
    %p69 = por %p67, %p68
    %p71 = scmp.ne.s32.totalorder %s56, %s70
    %p72 = scmp.eq.s32.totalorder %s25, 0
    %p73 = por %p71, %p72
    %s75 = sadd.s32 %s74, 1
    %p78 = scmp.eq.s32.totalorder %s19, 1
    %p79 = scmp.ne.s32.totalorder %s74, %s76
    %p80 = scmp.eq.s32.totalorder %s19, 0
    %p81 = por %p79, %p80
    %p82 = scmp.ne.s32.totalorder %s74, %s76
    %p83 = scmp.eq.s32.totalorder %s24, 1
    %p84 = por %p82, %p83
    %p85 = scmp.ne.s32.totalorder %s76, %s77
    %p86 = scmp.eq.s32.totalorder %s24, 0
    %p87 = por %p85, %p86
    %p88 = scmp.ne.s32.totalorder %s76, %s77
    %p89 = scmp.eq.s32.totalorder %s25, 1
    %p90 = por %p88, %p89
    %p92 = scmp.ne.s32.totalorder %s77, %s91
    %p93 = scmp.eq.s32.totalorder %s25, 0
    %p94 = por %p92, %p93
    %s96 = sadd.s32 %s95, 1
    %p99 = scmp.eq.s32.totalorder %s19, 1
    %p100 = scmp.ne.s32.totalorder %s95, %s97
    %p101 = scmp.eq.s32.totalorder %s19, 0
    %p102 = por %p100, %p101
    %p103 = scmp.ne.s32.totalorder %s95, %s97
    %p104 = scmp.eq.s32.totalorder %s24, 1
    %p105 = por %p103, %p104
    %p106 = scmp.ne.s32.totalorder %s97, %s98
    %p107 = scmp.eq.s32.totalorder %s24, 0
    %p108 = por %p106, %p107
    %p109 = scmp.ne.s32.totalorder %s97, %s98
    %p110 = scmp.eq.s32.totalorder %s25, 1
    %p111 = por %p109, %p110
    %p113 = scmp.ne.s32.totalorder %s98, %s112
    %p114 = scmp.eq.s32.totalorder %s25, 0
    %p115 = por %p113, %p114
    %s117 = sadd.s32 %s116, 1
    %p120 = scmp.eq.s32.totalorder %s19, 1
    %p121 = scmp.ne.s32.totalorder %s116, %s118
    %p122 = scmp.eq.s32.totalorder %s19, 0
    %p123 = por %p121, %p122
    %p124 = scmp.ne.s32.totalorder %s116, %s118
    %p125 = scmp.eq.s32.totalorder %s24, 1
    %p126 = por %p124, %p125
    %p127 = scmp.ne.s32.totalorder %s118, %s119
    %p128 = scmp.eq.s32.totalorder %s24, 0
    %p129 = por %p127, %p128
    %p130 = scmp.ne.s32.totalorder %s118, %s119
    %p131 = scmp.eq.s32.totalorder %s25, 1
    %p132 = por %p130, %p131
    %p134 = scmp.ne.s32.totalorder %s119, %s133
    %p135 = scmp.eq.s32.totalorder %s25, 0
    %p136 = por %p134, %p135
    %s138 = sadd.s32 %s137, 1
    %p141 = scmp.eq.s32.totalorder %s19, 1
    %p142 = scmp.ne.s32.totalorder %s137, %s139
    %p143 = scmp.eq.s32.totalorder %s19, 0
    %p144 = por %p142, %p143
    %p145 = scmp.ne.s32.totalorder %s137, %s139
    %p146 = scmp.eq.s32.totalorder %s24, 1
    %p147 = por %p145, %p146
    %p148 = scmp.ne.s32.totalorder %s139, %s140
    %p149 = scmp.eq.s32.totalorder %s24, 0
    %p150 = por %p148, %p149
    %p151 = scmp.ne.s32.totalorder %s139, %s140
    %p152 = scmp.eq.s32.totalorder %s25, 1
    %p153 = por %p151, %p152
    %p155 = scmp.ne.s32.totalorder %s140, %s154
    %p156 = scmp.eq.s32.totalorder %s25, 0
    %p157 = por %p155, %p156
    %s159 = sadd.s32 %s158, 1
    %p162 = scmp.eq.s32.totalorder %s19, 1
    %p163 = scmp.ne.s32.totalorder %s158, %s160
    %p164 = scmp.eq.s32.totalorder %s19, 0
    %p165 = por %p163, %p164
    %p166 = scmp.ne.s32.totalorder %s158, %s160
    %p167 = scmp.eq.s32.totalorder %s24, 1
    %p168 = por %p166, %p167
    %p169 = scmp.ne.s32.totalorder %s160, %s161
    %p170 = scmp.eq.s32.totalorder %s24, 0
    %p171 = por %p169, %p170
    %p172 = scmp.ne.s32.totalorder %s160, %s161
    %p173 = scmp.eq.s32.totalorder %s25, 1
    %p174 = por %p172, %p173
    %p176 = scmp.ne.s32.totalorder %s161, %s175
    %p177 = scmp.eq.s32.totalorder %s25, 0
    %p178 = por %p176, %p177
    %s180 = sadd.s32 %s179, 1
    %p183 = scmp.eq.s32.totalorder %s19, 1
    %p184 = scmp.ne.s32.totalorder %s179, %s181
    %p185 = scmp.eq.s32.totalorder %s19, 0
    %p186 = por %p184, %p185
    %p187 = scmp.ne.s32.totalorder %s179, %s181
    %p188 = scmp.eq.s32.totalorder %s24, 1
    %p189 = por %p187, %p188
    %p190 = scmp.ne.s32.totalorder %s181, %s182
    %p191 = scmp.eq.s32.totalorder %s24, 0
    %p192 = por %p190, %p191
    %p193 = scmp.ne.s32.totalorder %s181, %s182
    %p194 = scmp.eq.s32.totalorder %s25, 1
    %p195 = por %p193, %p194
    %p197 = scmp.ne.s32.totalorder %s182, %s196
    %p198 = scmp.eq.s32.totalorder %s25, 0
    %p199 = por %p197, %p198
    %s201 = sadd.s32 %s200, 1
    %p204 = scmp.eq.s32.totalorder %s19, 1
    %p205 = scmp.ne.s32.totalorder %s200, %s202
    %p206 = scmp.eq.s32.totalorder %s19, 0
    %p207 = por %p205, %p206
    %p208 = scmp.ne.s32.totalorder %s200, %s202
    %p209 = scmp.eq.s32.totalorder %s24, 1
    %p210 = por %p208, %p209
    %p211 = scmp.ne.s32.totalorder %s202, %s203
    %p212 = scmp.eq.s32.totalorder %s24, 0
    %p213 = por %p211, %p212
    %p214 = scmp.ne.s32.totalorder %s202, %s203
    %p215 = scmp.eq.s32.totalorder %s25, 1
    %p216 = por %p214, %p215
    %p218 = scmp.ne.s32.totalorder %s203, %s217
    %p219 = scmp.eq.s32.totalorder %s25, 0
    %p220 = por %p218, %p219
    %s222 = sadd.s32 %s221, 1
    %p225 = scmp.eq.s32.totalorder %s19, 1
    %p226 = scmp.ne.s32.totalorder %s221, %s223
    %p227 = scmp.eq.s32.totalorder %s19, 0
    %p228 = por %p226, %p227
    %p229 = scmp.ne.s32.totalorder %s221, %s223
    %p230 = scmp.eq.s32.totalorder %s24, 1
    %p231 = por %p229, %p230
    %p232 = scmp.ne.s32.totalorder %s223, %s224
    %p233 = scmp.eq.s32.totalorder %s24, 0
    %p234 = por %p232, %p233
    %p235 = scmp.ne.s32.totalorder %s223, %s224
    %p236 = scmp.eq.s32.totalorder %s25, 1
    %p237 = por %p235, %p236
    %p239 = scmp.ne.s32.totalorder %s224, %s238
    %p240 = scmp.eq.s32.totalorder %s25, 0
    %p241 = por %p239, %p240
    %s243 = sadd.s32 %s242, 1
    %p246 = scmp.eq.s32.totalorder %s19, 1
    %p247 = scmp.ne.s32.totalorder %s242, %s244
    %p248 = scmp.eq.s32.totalorder %s19, 0
    %p249 = por %p247, %p248
    %p250 = scmp.ne.s32.totalorder %s242, %s244
    %p251 = scmp.eq.s32.totalorder %s24, 1
    %p252 = por %p250, %p251
    %p253 = scmp.ne.s32.totalorder %s244, %s245
    %p254 = scmp.eq.s32.totalorder %s24, 0
    %p255 = por %p253, %p254
    %p256 = scmp.ne.s32.totalorder %s244, %s245
    %p257 = scmp.eq.s32.totalorder %s25, 1
    %p258 = por %p256, %p257
    %p260 = scmp.ne.s32.totalorder %s245, %s259
    %p261 = scmp.eq.s32.totalorder %s25, 0
    %p262 = por %p260, %p261
    %s264 = sadd.s32 %s263, 1
    %p267 = scmp.eq.s32.totalorder %s19, 1
    %p268 = scmp.ne.s32.totalorder %s263, %s265
    %p269 = scmp.eq.s32.totalorder %s19, 0
    %p270 = por %p268, %p269
    %p271 = scmp.ne.s32.totalorder %s263, %s265
    %p272 = scmp.eq.s32.totalorder %s24, 1
    %p273 = por %p271, %p272
    %p274 = scmp.ne.s32.totalorder %s265, %s266
    %p275 = scmp.eq.s32.totalorder %s24, 0
    %p276 = por %p274, %p275
    %p277 = scmp.ne.s32.totalorder %s265, %s266
    %p278 = scmp.eq.s32.totalorder %s25, 1
    %p279 = por %p277, %p278
    %p281 = scmp.ne.s32.totalorder %s266, %s280
    %p282 = scmp.eq.s32.totalorder %s25, 0
    %p283 = por %p281, %p282
    %s285 = sadd.s32 %s284, 1
    %p288 = scmp.eq.s32.totalorder %s19, 1
    %p289 = scmp.ne.s32.totalorder %s284, %s286
    %p290 = scmp.eq.s32.totalorder %s19, 0
    %p291 = por %p289, %p290
    %p292 = scmp.ne.s32.totalorder %s284, %s286
    %p293 = scmp.eq.s32.totalorder %s24, 1
    %p294 = por %p292, %p293
    %p295 = scmp.ne.s32.totalorder %s286, %s287
    %p296 = scmp.eq.s32.totalorder %s24, 0
    %p297 = por %p295, %p296
    %p298 = scmp.ne.s32.totalorder %s286, %s287
    %p299 = scmp.eq.s32.totalorder %s25, 1
    %p300 = por %p298, %p299
    %p302 = scmp.ne.s32.totalorder %s287, %s301
    %p303 = scmp.eq.s32.totalorder %s25, 0
    %p304 = por %p302, %p303
    %s305 = ssub.s32 %s19, %s26
    %p306 = scmp.eq.s32.totalorder %s305, 0
    %s308 = sadd.s32 %s307, 1
    %s309 = scalar_select %p306, %s307, %s308
    %p312 = pneg %p306
    %p313 = scmp.eq.s32.totalorder %s19, 1
    %p314 = por %p312, %p313
    %p315 = scmp.ne.s32.totalorder %s307, %s310
    %p316 = scmp.eq.s32.totalorder %s19, 0
    %p317 = por %p315, %p316
    %p318 = scmp.ne.s32.totalorder %s307, %s310
    %p319 = scmp.eq.s32.totalorder %s24, 1
    %p320 = por %p318, %p319
    %p321 = scmp.ne.s32.totalorder %s310, %s311
    %p322 = scmp.eq.s32.totalorder %s24, 0
    %p323 = por %p321, %p322
    %p324 = scmp.ne.s32.totalorder %s310, %s311
    %p325 = scmp.eq.s32.totalorder %s25, 1
    %p326 = por %p324, %p325
    %p328 = scmp.ne.s32.totalorder %s311, %s327
    %p329 = scmp.eq.s32.totalorder %s25, 0
    %p330 = por %p328, %p329
    %p331 = scmp.le.s32.totalorder 1, %s19
    %p332 = scmp.lt.s32.totalorder %s19, 3
    %p333 = pnand %p331, %p332
    %p334 = pneg %p333
    // Predicated region
    $region9: #{bottleneck_forward.1} parent=5 // pred_check
      _
    $region10: #{bottleneck_forward.1} parent=5 // pred_check_branch
      %336 = sbr.rel (%p333) target = $region12
    $region11: #{bottleneck_forward.1} parent=5 // pred_region
      %s337 = ssub.s32 %s19, 1
      // Predicated region
      $region13: #{bottleneck_forward.1} parent=11 // pred_check
        %p338 = pneg %p66
      $region14: #{bottleneck_forward.1} parent=11 // pred_check_branch
        %340 = sbr.rel (%p338) target = $region16
      $region15: #{bottleneck_forward.1} parent=11 // pred_region
        _
      $region16: #{bottleneck_forward.1} parent=11 // pred_fallthru
        _
      // Predicated region
      $region17: #{bottleneck_forward.1} parent=11 // pred_check
        %p341 = pneg %p87
      $region18: #{bottleneck_forward.1} parent=11 // pred_check_branch
        %343 = sbr.rel (%p341) target = $region20
      $region19: #{bottleneck_forward.1} parent=11 // pred_region
        _
      $region20: #{bottleneck_forward.1} parent=11 // pred_fallthru
        _
      // Predicated region
      $region21: #{bottleneck_forward.1} parent=11 // pred_check
        %p344 = pneg %p108
      $region22: #{bottleneck_forward.1} parent=11 // pred_check_branch
        %346 = sbr.rel (%p344) target = $region24
      $region23: #{bottleneck_forward.1} parent=11 // pred_region
        _
      $region24: #{bottleneck_forward.1} parent=11 // pred_fallthru
        _
      // Predicated region
      $region25: #{bottleneck_forward.1} parent=11 // pred_check
        %p347 = pneg %p129
      $region26: #{bottleneck_forward.1} parent=11 // pred_check_branch
        %349 = sbr.rel (%p347) target = $region28
      $region27: #{bottleneck_forward.1} parent=11 // pred_region
        _
      $region28: #{bottleneck_forward.1} parent=11 // pred_fallthru
        _
      // Predicated region
      $region29: #{bottleneck_forward.1} parent=11 // pred_check
        %p350 = pneg %p150
      $region30: #{bottleneck_forward.1} parent=11 // pred_check_branch
        %352 = sbr.rel (%p350) target = $region32
      $region31: #{bottleneck_forward.1} parent=11 // pred_region
        _
      $region32: #{bottleneck_forward.1} parent=11 // pred_fallthru
        _
      // Predicated region
      $region33: #{bottleneck_forward.1} parent=11 // pred_check
        %p353 = pneg %p171
      $region34: #{bottleneck_forward.1} parent=11 // pred_check_branch
        %355 = sbr.rel (%p353) target = $region36
      $region35: #{bottleneck_forward.1} parent=11 // pred_region
        _
      $region36: #{bottleneck_forward.1} parent=11 // pred_fallthru
        _
      // Predicated region
      $region37: #{bottleneck_forward.1} parent=11 // pred_check
        %p356 = pneg %p192
      $region38: #{bottleneck_forward.1} parent=11 // pred_check_branch
        %358 = sbr.rel (%p356) target = $region40
      $region39: #{bottleneck_forward.1} parent=11 // pred_region
        _
      $region40: #{bottleneck_forward.1} parent=11 // pred_fallthru
        _
      // Predicated region
      $region41: #{bottleneck_forward.1} parent=11 // pred_check
        %p359 = pneg %p213
      $region42: #{bottleneck_forward.1} parent=11 // pred_check_branch
        %361 = sbr.rel (%p359) target = $region44
      $region43: #{bottleneck_forward.1} parent=11 // pred_region
        _
      $region44: #{bottleneck_forward.1} parent=11 // pred_fallthru
        _
      // Predicated region
      $region45: #{bottleneck_forward.1} parent=11 // pred_check
        %p362 = pneg %p234
      $region46: #{bottleneck_forward.1} parent=11 // pred_check_branch
        %364 = sbr.rel (%p362) target = $region48
      $region47: #{bottleneck_forward.1} parent=11 // pred_region
        _
      $region48: #{bottleneck_forward.1} parent=11 // pred_fallthru
        _
      // Predicated region
      $region49: #{bottleneck_forward.1} parent=11 // pred_check
        %p365 = pneg %p255
      $region50: #{bottleneck_forward.1} parent=11 // pred_check_branch
        %367 = sbr.rel (%p365) target = $region52
      $region51: #{bottleneck_forward.1} parent=11 // pred_region
        _
      $region52: #{bottleneck_forward.1} parent=11 // pred_fallthru
        _
      // Predicated region
      $region53: #{bottleneck_forward.1} parent=11 // pred_check
        %p368 = pneg %p276
      $region54: #{bottleneck_forward.1} parent=11 // pred_check_branch
        %370 = sbr.rel (%p368) target = $region56
      $region55: #{bottleneck_forward.1} parent=11 // pred_region
        _
      $region56: #{bottleneck_forward.1} parent=11 // pred_fallthru
        _
      // Predicated region
      $region57: #{bottleneck_forward.1} parent=11 // pred_check
        %p371 = pneg %p297
      $region58: #{bottleneck_forward.1} parent=11 // pred_check_branch
        %373 = sbr.rel (%p371) target = $region60
      $region59: #{bottleneck_forward.1} parent=11 // pred_region
        _
      $region60: #{bottleneck_forward.1} parent=11 // pred_fallthru
        _
    $region12: #{bottleneck_forward.1} parent=5 // pred_fallthru
      _
    %p374 = scmp.lt.s32.totalorder %s19, 2
    // Predicated region
    $region61: #{bottleneck_forward.1} parent=5 // pred_check
      %p375 = pneg %p374
    $region62: #{bottleneck_forward.1} parent=5 // pred_check_branch
      %377 = sbr.rel (%p375) target = $region64
    $region63: #{bottleneck_forward.1} parent=5 // pred_region
      // Predicated region
      $region65: #{bottleneck_forward.1} parent=63 // pred_check
        %p378 = pneg %p39
      $region66: #{bottleneck_forward.1} parent=63 // pred_check_branch
        %380 = sbr.rel (%p378) target = $region68
      $region67: #{bottleneck_forward.1} parent=63 // pred_region
        %p381 = scmp.lt.s32.totalorder %s19, 1
        %s382 = scalar_select %p381, %s19, 1
        %s383 = smul.addr %s382, 72
        %s384 = smul.addr %s383, 4
        %s385 = scalar_lea.vmem %s0, %s384
      $region68: #{bottleneck_forward.1} parent=63 // pred_fallthru
        _
    $region64: #{bottleneck_forward.1} parent=5 // pred_fallthru
      _
    %p386 = scmp.le.s32.totalorder 1, %s19
    %p387 = scmp.lt.s32.totalorder %s19, 3
    %p388 = pnand %p386, %p387
    %p389 = pneg %p388
    // Predicated region
    $region69: #{bottleneck_forward.1} parent=5 // pred_check
      _
    $region70: #{bottleneck_forward.1} parent=5 // pred_check_branch
      %391 = sbr.rel (%p388) target = $region72
    $region71: #{bottleneck_forward.1} parent=5 // pred_region
      %s392 = ssub.s32 %s19, 1
      %p393 = scmp.lt.s32.totalorder %s24, 1
      %s394 = scalar_select %p393, %s24, 1
      %s395 = smul.addr %s394, 72
      %s396 = smul.addr %s395, 4
      %s397 = scalar_lea.vmem %s0, %s396
      %p398 = pneg %p45
      %p399 = pneg %p42
      %p400 = pneg %p66
      %p401 = pneg %p63
      %p402 = pneg %p87
      %p403 = pneg %p84
      %p404 = pneg %p108
      %p405 = pneg %p105
      %p406 = pneg %p129
      %p407 = pneg %p126
      %p408 = pneg %p150
      %p409 = pneg %p147
      %p410 = pneg %p171
      %p411 = pneg %p168
      %p412 = pneg %p192
      %p413 = pneg %p189
      %p414 = pneg %p213
      %p415 = pneg %p210
      %p416 = pneg %p234
      %p417 = pneg %p231
      %p418 = pneg %p255
      %p419 = pneg %p252
      %p420 = pneg %p276
      %p421 = pneg %p273
      %p422 = pneg %p297
      %p423 = pneg %p294
      %p424 = pneg %p323
      %p425 = pneg %p320
      %p426 = scmp.lt.s32.totalorder %s24, 1
      %s427 = scalar_select %p426, %s24, 1
      %s428 = smul.addr %s427, 8
      %s429 = smul.addr %s428, 4
      %s430 = scalar_lea.vmem %s13, %s429
      %p431 = scmp.lt.s32.totalorder %s24, 1
      %s432 = scalar_select %p431, %s24, 1
      %s433 = smul.addr %s432, 72
      %s434 = smul.addr %s433, 4
      %s435 = scalar_lea.vmem %s0, %s434
      %p436 = scmp.lt.s32.totalorder %s24, 1
      %s437 = scalar_select %p436, %s24, 1
      %s438 = smul.addr %s437, 8
      %s439 = smul.addr %s438, 4
      %s440 = scalar_lea.vmem %s13, %s439
      %v442 = vld [vmem:[%s435] sm:$0xf]
      %v443 = vld [vmem:[%s435 + $0x4] sm:$0xf]
      %v444 = vld [vmem:[%s435 + $0x8] sm:$0xf]
      %v445 = vld [vmem:[%s435 + $0xc] sm:$0xf]
      %v446 = vld [vmem:[%s435 + $0x10] sm:$0xf]
      %v447 = vld [vmem:[%s435 + $0x14] sm:$0xf]
      %v448 = vld [vmem:[%s435 + $0x18] sm:$0xf]
      %v449 = vld [vmem:[%s435 + $0x1c] sm:$0xf]
      %v450 = vld [vmem:[%s435 + $0x20] sm:$0xf]
      %v451 = vld [vmem:[%s435 + $0x24] sm:$0xf]
      %v452 = vld [vmem:[%s435 + $0x28] sm:$0xf]
      %v453 = vld [vmem:[%s435 + $0x2c] sm:$0xf]
      %v454 = vld [vmem:[%s435 + $0x30] sm:$0xf]
      %v455 = vld [vmem:[%s435 + $0x34] sm:$0xf]
      %v456 = vld [vmem:[%s435 + $0x38] sm:$0xf]
      %v457 = vld [vmem:[%s435 + $0x3c] sm:$0xf]
      %v458 = vld [vmem:[%s435 + $0x40] sm:$0xf]
      %v459 = vld [vmem:[%s435 + $0x44] sm:$0xf]
      %v460 = vld [vmem:[%s435 + $0x48] sm:$0xf]
      %v461 = vld [vmem:[%s435 + $0x4c] sm:$0xf]
      %v462 = vld [vmem:[%s435 + $0x50] sm:$0xf]
      %v463 = vld [vmem:[%s435 + $0x54] sm:$0xf]
      %v464 = vld [vmem:[%s435 + $0x58] sm:$0xf]
      %v465 = vld [vmem:[%s435 + $0x5c] sm:$0xf]
      %v466 = vld [vmem:[%s435 + $0x60] sm:$0xf]
      %v467 = vld [vmem:[%s435 + $0x64] sm:$0xf]
      %v468 = vld [vmem:[%s435 + $0x68] sm:$0xf]
      %v469 = vld [vmem:[%s435 + $0x6c] sm:$0xf]
      %v470 = vld [vmem:[%s435 + $0x70] sm:$0xf]
      %v471 = vld [vmem:[%s435 + $0x74] sm:$0xf]
      %v472 = vld [vmem:[%s435 + $0x78] sm:$0xf]
      %v473 = vld [vmem:[%s435 + $0x7c] sm:$0xf]
      %v474 = vld [vmem:[%s435 + $0x80] sm:$0xf]
      %v475 = vld [vmem:[%s435 + $0x84] sm:$0xf]
      %v476 = vld [vmem:[%s435 + $0x88] sm:$0xf]
      %v477 = vld [vmem:[%s435 + $0x8c] sm:$0xf]
      %v478 = vld [vmem:[%s435 + $0x90] sm:$0xf]
      %v479 = vld [vmem:[%s435 + $0x94] sm:$0xf]
      %v480 = vld [vmem:[%s435 + $0x98] sm:$0xf]
      %v481 = vld [vmem:[%s435 + $0x9c] sm:$0xf]
      %v482 = vld [vmem:[%s435 + $0xa0] sm:$0xf]
      %v483 = vld [vmem:[%s435 + $0xa4] sm:$0xf]
      %v484 = vld [vmem:[%s435 + $0xa8] sm:$0xf]
      %v485 = vld [vmem:[%s435 + $0xac] sm:$0xf]
      %v486 = vld [vmem:[%s435 + $0xb0] sm:$0xf]
      %v487 = vld [vmem:[%s435 + $0xb4] sm:$0xf]
      %v488 = vld [vmem:[%s435 + $0xb8] sm:$0xf]
      %v489 = vld [vmem:[%s435 + $0xbc] sm:$0xf]
      %v490 = vld [vmem:[%s435 + $0xc0] sm:$0xf]
      %v491 = vld [vmem:[%s435 + $0xc4] sm:$0xf]
      %v492 = vld [vmem:[%s435 + $0xc8] sm:$0xf]
      %v493 = vld [vmem:[%s435 + $0xcc] sm:$0xf]
      %v494 = vld [vmem:[%s435 + $0xd0] sm:$0xf]
      %v495 = vld [vmem:[%s435 + $0xd4] sm:$0xf]
      %v496 = vld [vmem:[%s435 + $0xd8] sm:$0xf]
      %v497 = vld [vmem:[%s435 + $0xdc] sm:$0xf]
      %v498 = vld [vmem:[%s435 + $0xe0] sm:$0xf]
      %v499 = vld [vmem:[%s435 + $0xe4] sm:$0xf]
      %v500 = vld [vmem:[%s435 + $0xe8] sm:$0xf]
      %v501 = vld [vmem:[%s435 + $0xec] sm:$0xf]
      %v502 = vld [vmem:[%s435 + $0xf0] sm:$0xf]
      %v503 = vld [vmem:[%s435 + $0xf4] sm:$0xf]
      %v504 = vld [vmem:[%s435 + $0xf8] sm:$0xf]
      %v505 = vld [vmem:[%s435 + $0xfc] sm:$0xf]
      %v506 = vld [vmem:[%s435 + $0x100] sm:$0xf]
      %v507 = vld [vmem:[%s435 + $0x104] sm:$0xf]
      %v508 = vld [vmem:[%s435 + $0x108] sm:$0xf]
      %v509 = vld [vmem:[%s435 + $0x10c] sm:$0xf]
      %v510 = vld [vmem:[%s435 + $0x110] sm:$0xf]
      %v511 = vld [vmem:[%s435 + $0x114] sm:$0xf]
      %v512 = vld [vmem:[%s435 + $0x118] sm:$0xf]
      %v513 = vld [vmem:[%s435 + $0x11c] sm:$0xf]
      %v514 = vld [vmem:[%s1] sm:$0xf]
      %v515 = vld [vmem:[%s1 + $0x4] sm:$0xf]
      %v516 = vld [vmem:[%s1 + $0x8] sm:$0xf]
      %v517 = vld [vmem:[%s1 + $0xc] sm:$0xf]
      %v518 = vld [vmem:[%s1 + $0x10] sm:$0xf]
      %v519 = vld [vmem:[%s1 + $0x14] sm:$0xf]
      %v520 = vld [vmem:[%s1 + $0x18] sm:$0xf]
      %v521 = vld [vmem:[%s1 + $0x1c] sm:$0xf]
      %v522 = vld [vmem:[%s1 + $0x20] sm:$0xf]
      %v523 = vld [vmem:[%s1 + $0x24] sm:$0xf]
      %v524 = vld [vmem:[%s1 + $0x28] sm:$0xf]
      %v525 = vld [vmem:[%s1 + $0x2c] sm:$0xf]
      %v526 = vld [vmem:[%s1 + $0x30] sm:$0xf]
      %v527 = vld [vmem:[%s1 + $0x34] sm:$0xf]
      %v528 = vld [vmem:[%s1 + $0x38] sm:$0xf]
      %v529 = vld [vmem:[%s1 + $0x3c] sm:$0xf]
      %v602 = vunpack.c.l.b16 %v442
      %v603 = vunpack.c.l.b16 %v443
      %v604 = vunpack.c.l.b16 %v444
      %v605 = vunpack.c.l.b16 %v445
      %v606 = vunpack.c.l.b16 %v446
      %v607 = vunpack.c.l.b16 %v447
      %v608 = vunpack.c.l.b16 %v448
      %v609 = vunpack.c.l.b16 %v449
      %v610 = vunpack.c.l.b16 %v450
      %v611 = vunpack.c.l.b16 %v451
      %v612 = vunpack.c.l.b16 %v452
      %v613 = vunpack.c.l.b16 %v453
      %v614 = vunpack.c.l.b16 %v454
      %v615 = vunpack.c.l.b16 %v455
      %v616 = vunpack.c.l.b16 %v456
      %v617 = vunpack.c.l.b16 %v457
      %v618 = vunpack.c.l.b16 %v458
      %v619 = vunpack.c.l.b16 %v459
      %v620 = vunpack.c.l.b16 %v460
      %v621 = vunpack.c.l.b16 %v461
      %v622 = vunpack.c.l.b16 %v462
      %v623 = vunpack.c.l.b16 %v463
      %v624 = vunpack.c.l.b16 %v464
      %v625 = vunpack.c.l.b16 %v465
      %v626 = vunpack.c.l.b16 %v466
      %v627 = vunpack.c.l.b16 %v467
      %v628 = vunpack.c.l.b16 %v468
      %v629 = vunpack.c.l.b16 %v469
      %v630 = vunpack.c.l.b16 %v470
      %v631 = vunpack.c.l.b16 %v471
      %v632 = vunpack.c.l.b16 %v472
      %v633 = vunpack.c.l.b16 %v473
      %v634 = vunpack.c.l.b16 %v474
      %v635 = vunpack.c.l.b16 %v475
      %v636 = vunpack.c.l.b16 %v476
      %v637 = vunpack.c.l.b16 %v477
      %v638 = vunpack.c.l.b16 %v478
      %v639 = vunpack.c.l.b16 %v479
      %v640 = vunpack.c.l.b16 %v480
      %v641 = vunpack.c.l.b16 %v481
      %v642 = vunpack.c.l.b16 %v482
      %v643 = vunpack.c.l.b16 %v483
      %v644 = vunpack.c.l.b16 %v484
      %v645 = vunpack.c.l.b16 %v485
      %v646 = vunpack.c.l.b16 %v486
      %v647 = vunpack.c.l.b16 %v487
      %v648 = vunpack.c.l.b16 %v488
      %v649 = vunpack.c.l.b16 %v489
      %v650 = vunpack.c.l.b16 %v490
      %v651 = vunpack.c.l.b16 %v491
      %v652 = vunpack.c.l.b16 %v492
      %v653 = vunpack.c.l.b16 %v493
      %v654 = vunpack.c.l.b16 %v494
      %v655 = vunpack.c.l.b16 %v495
      %v656 = vunpack.c.l.b16 %v496
      %v657 = vunpack.c.l.b16 %v497
      %v658 = vunpack.c.l.b16 %v498
      %v659 = vunpack.c.l.b16 %v499
      %v660 = vunpack.c.l.b16 %v500
      %v661 = vunpack.c.l.b16 %v501
      %v662 = vunpack.c.l.b16 %v502
      %v663 = vunpack.c.l.b16 %v503
      %v664 = vunpack.c.l.b16 %v504
      %v665 = vunpack.c.l.b16 %v505
      %v666 = vunpack.c.l.b16 %v506
      %v667 = vunpack.c.l.b16 %v507
      %v668 = vunpack.c.l.b16 %v508
      %v669 = vunpack.c.l.b16 %v509
      %v670 = vunpack.c.l.b16 %v510
      %v671 = vunpack.c.l.b16 %v511
      %v672 = vunpack.c.l.b16 %v512
      %v673 = vunpack.c.l.b16 %v513
      %v674 = vpack.c.b16 %v603, %v602
      %v675 = vpack.c.b16 %v605, %v604
      %v676 = vpack.c.b16 %v607, %v606
      %v677 = vpack.c.b16 %v609, %v608
      %v678 = vpack.c.b16 %v611, %v610
      %v679 = vpack.c.b16 %v613, %v612
      %v680 = vpack.c.b16 %v615, %v614
      %v681 = vpack.c.b16 %v617, %v616
      %v682 = vpack.c.b16 %v619, %v618
      %v683 = vpack.c.b16 %v621, %v620
      %v684 = vpack.c.b16 %v623, %v622
      %v685 = vpack.c.b16 %v625, %v624
      %v686 = vpack.c.b16 %v627, %v626
      %v687 = vpack.c.b16 %v629, %v628
      %v688 = vpack.c.b16 %v631, %v630
      %v689 = vpack.c.b16 %v633, %v632
      %v690 = vpack.c.b16 %v635, %v634
      %v691 = vpack.c.b16 %v637, %v636
      %v692 = vpack.c.b16 %v639, %v638
      %v693 = vpack.c.b16 %v641, %v640
      %v694 = vpack.c.b16 %v643, %v642
      %v695 = vpack.c.b16 %v645, %v644
      %v696 = vpack.c.b16 %v647, %v646
      %v697 = vpack.c.b16 %v649, %v648
      %v698 = vpack.c.b16 %v651, %v650
      %v699 = vpack.c.b16 %v653, %v652
      %v700 = vpack.c.b16 %v655, %v654
      %v701 = vpack.c.b16 %v657, %v656
      %v702 = vpack.c.b16 %v659, %v658
      %v703 = vpack.c.b16 %v661, %v660
      %v704 = vpack.c.b16 %v663, %v662
      %v705 = vpack.c.b16 %v665, %v664
      %v706 = vpack.c.b16 %v667, %v666
      %v707 = vpack.c.b16 %v669, %v668
      %v708 = vpack.c.b16 %v671, %v670
      %v709 = vpack.c.b16 %v673, %v672
      %v762 = vunpack.c.l.b16 %v514
      %v763 = vunpack.c.l.b16 %v515
      %v764 = vunpack.c.l.b16 %v516
      %v765 = vunpack.c.l.b16 %v517
      %v766 = vunpack.c.l.b16 %v518
      %v767 = vunpack.c.l.b16 %v519
      %v768 = vunpack.c.l.b16 %v520
      %v769 = vunpack.c.l.b16 %v521
      %v770 = vunpack.c.l.b16 %v522
      %v771 = vunpack.c.l.b16 %v523
      %v772 = vunpack.c.l.b16 %v524
      %v773 = vunpack.c.l.b16 %v525
      %v774 = vunpack.c.l.b16 %v526
      %v775 = vunpack.c.l.b16 %v527
      %v776 = vunpack.c.l.b16 %v528
      %v777 = vunpack.c.l.b16 %v529
      %v778 = vpack.c.b16 %v763, %v762
      %v779 = vpack.c.b16 %v765, %v764
      %v780 = vpack.c.b16 %v767, %v766
      %v781 = vpack.c.b16 %v769, %v768
      %v782 = vpack.c.b16 %v771, %v770
      %v783 = vpack.c.b16 %v773, %v772
      %v784 = vpack.c.b16 %v775, %v774
      %v785 = vpack.c.b16 %v777, %v776
      %794 = vmatpush.bf16.msra.mxu0 %v785
      %795 = vmatpush.bf16.msra.mxu0 %v784
      %796 = vmatpush.bf16.msra.mxu0 %v783
      %797 = vmatpush.bf16.msra.mxu0 %v782
      %798 = vmatpush.bf16.msra.mxu0 %v781
      %799 = vmatpush.bf16.msra.mxu0 %v780
      %800 = vmatpush.bf16.msra.mxu0 %v779
      %801 = vmatpush.bf16.msra.mxu0 %v778
      %802 = vmatmul.bf16.gmra.mxu0 %v674
      %v803 = vpop.f32.mrf.mxu0
      %v804 = vadd.f32 0.0, %v803
      %v805 = vpop.f32.mrf.mxu0
      %v806 = vadd.f32 0.0, %v805
      %807 = vmatmul.bf16.gmra.mxu0 %v675
      %v808 = vpop.f32.mrf.mxu0
      %v809 = vadd.f32 0.0, %v808
      %v810 = vpop.f32.mrf.mxu0
      %v811 = vadd.f32 0.0, %v810
      %812 = vmatmul.bf16.gmra.mxu0 %v676
      %v813 = vpop.f32.mrf.mxu0
      %v814 = vadd.f32 0.0, %v813
      %v815 = vpop.f32.mrf.mxu0
      %v816 = vadd.f32 0.0, %v815
      %817 = vmatmul.bf16.gmra.mxu0 %v677
      %v818 = vpop.f32.mrf.mxu0
      %v819 = vadd.f32 0.0, %v818
      %v820 = vpop.f32.mrf.mxu0
      %v821 = vadd.f32 0.0, %v820
      %822 = vmatmul.bf16.gmra.mxu0 %v678
      %v823 = vpop.f32.mrf.mxu0
      %v824 = vadd.f32 0.0, %v823
      %v825 = vpop.f32.mrf.mxu0
      %v826 = vadd.f32 0.0, %v825
      %827 = vmatmul.bf16.gmra.mxu0 %v679
      %v828 = vpop.f32.mrf.mxu0
      %v829 = vadd.f32 0.0, %v828
      %v830 = vpop.f32.mrf.mxu0
      %v831 = vadd.f32 0.0, %v830
      %832 = vmatmul.bf16.gmra.mxu0 %v680
      %v833 = vpop.f32.mrf.mxu0
      %v834 = vadd.f32 0.0, %v833
      %v835 = vpop.f32.mrf.mxu0
      %v836 = vadd.f32 0.0, %v835
      %837 = vmatmul.bf16.gmra.mxu0 %v681
      %v838 = vpop.f32.mrf.mxu0
      %v839 = vadd.f32 0.0, %v838
      %v840 = vpop.f32.mrf.mxu0
      %v841 = vadd.f32 0.0, %v840
      %842 = vmatmul.bf16.gmra.mxu0 %v682
      %v843 = vpop.f32.mrf.mxu0
      %v844 = vadd.f32 0.0, %v843
      %v845 = vpop.f32.mrf.mxu0
      %v846 = vadd.f32 0.0, %v845
      %847 = vmatmul.bf16.gmra.mxu0 %v683
      %v848 = vpop.f32.mrf.mxu0
      %v849 = vadd.f32 0.0, %v848
      %v850 = vpop.f32.mrf.mxu0
      %v851 = vadd.f32 0.0, %v850
      %852 = vmatmul.bf16.gmra.mxu0 %v684
      %v853 = vpop.f32.mrf.mxu0
      %v854 = vadd.f32 0.0, %v853
      %v855 = vpop.f32.mrf.mxu0
      %v856 = vadd.f32 0.0, %v855
      %857 = vmatmul.bf16.gmra.mxu0 %v685
      %v858 = vpop.f32.mrf.mxu0
      %v859 = vadd.f32 0.0, %v858
      %v860 = vpop.f32.mrf.mxu0
      %v861 = vadd.f32 0.0, %v860
      %862 = vmatmul.bf16.gmra.mxu0 %v686
      %v863 = vpop.f32.mrf.mxu0
      %v864 = vadd.f32 0.0, %v863
      %v865 = vpop.f32.mrf.mxu0
      %v866 = vadd.f32 0.0, %v865
      %867 = vmatmul.bf16.gmra.mxu0 %v687
      %v868 = vpop.f32.mrf.mxu0
      %v869 = vadd.f32 0.0, %v868
      %v870 = vpop.f32.mrf.mxu0
      %v871 = vadd.f32 0.0, %v870
      %872 = vmatmul.bf16.gmra.mxu0 %v688
      %v873 = vpop.f32.mrf.mxu0
      %v874 = vadd.f32 0.0, %v873
      %v875 = vpop.f32.mrf.mxu0
      %v876 = vadd.f32 0.0, %v875
      %877 = vmatmul.bf16.gmra.mxu0 %v689
      %v878 = vpop.f32.mrf.mxu0
      %v879 = vadd.f32 0.0, %v878
      %v880 = vpop.f32.mrf.mxu0
      %v881 = vadd.f32 0.0, %v880
      %882 = vmatmul.bf16.gmra.mxu0 %v690
      %v883 = vpop.f32.mrf.mxu0
      %v884 = vadd.f32 0.0, %v883
      %v885 = vpop.f32.mrf.mxu0
      %v886 = vadd.f32 0.0, %v885
      %887 = vmatmul.bf16.gmra.mxu0 %v691
      %v888 = vpop.f32.mrf.mxu0
      %v889 = vadd.f32 0.0, %v888
      %v890 = vpop.f32.mrf.mxu0
      %v891 = vadd.f32 0.0, %v890
      %892 = vmatmul.bf16.gmra.mxu0 %v692
      %v893 = vpop.f32.mrf.mxu0
      %v894 = vadd.f32 0.0, %v893
      %v895 = vpop.f32.mrf.mxu0
      %v896 = vadd.f32 0.0, %v895
      %897 = vmatmul.bf16.gmra.mxu0 %v693
      %v898 = vpop.f32.mrf.mxu0
      %v899 = vadd.f32 0.0, %v898
      %v900 = vpop.f32.mrf.mxu0
      %v901 = vadd.f32 0.0, %v900
      %902 = vmatmul.bf16.gmra.mxu0 %v694
      %v903 = vpop.f32.mrf.mxu0
      %v904 = vadd.f32 0.0, %v903
      %v905 = vpop.f32.mrf.mxu0
      %v906 = vadd.f32 0.0, %v905
      %907 = vmatmul.bf16.gmra.mxu0 %v695
      %v908 = vpop.f32.mrf.mxu0
      %v909 = vadd.f32 0.0, %v908
      %v910 = vpop.f32.mrf.mxu0
      %v911 = vadd.f32 0.0, %v910
      %912 = vmatmul.bf16.gmra.mxu0 %v696
      %v913 = vpop.f32.mrf.mxu0
      %v914 = vadd.f32 0.0, %v913
      %v915 = vpop.f32.mrf.mxu0
      %v916 = vadd.f32 0.0, %v915
      %917 = vmatmul.bf16.gmra.mxu0 %v697
      %v918 = vpop.f32.mrf.mxu0
      %v919 = vadd.f32 0.0, %v918
      %v920 = vpop.f32.mrf.mxu0
      %v921 = vadd.f32 0.0, %v920
      %922 = vmatmul.bf16.gmra.mxu0 %v698
      %v923 = vpop.f32.mrf.mxu0
      %v924 = vadd.f32 0.0, %v923
      %v925 = vpop.f32.mrf.mxu0
      %v926 = vadd.f32 0.0, %v925
      %927 = vmatmul.bf16.gmra.mxu0 %v699
      %v928 = vpop.f32.mrf.mxu0
      %v929 = vadd.f32 0.0, %v928
      %v930 = vpop.f32.mrf.mxu0
      %v931 = vadd.f32 0.0, %v930
      %932 = vmatmul.bf16.gmra.mxu0 %v700
      %v933 = vpop.f32.mrf.mxu0
      %v934 = vadd.f32 0.0, %v933
      %v935 = vpop.f32.mrf.mxu0
      %v936 = vadd.f32 0.0, %v935
      %937 = vmatmul.bf16.gmra.mxu0 %v701
      %v938 = vpop.f32.mrf.mxu0
      %v939 = vadd.f32 0.0, %v938
      %v940 = vpop.f32.mrf.mxu0
      %v941 = vadd.f32 0.0, %v940
      %942 = vmatmul.bf16.gmra.mxu0 %v702
      %v943 = vpop.f32.mrf.mxu0
      %v944 = vadd.f32 0.0, %v943
      %v945 = vpop.f32.mrf.mxu0
      %v946 = vadd.f32 0.0, %v945
      %947 = vmatmul.bf16.gmra.mxu0 %v703
      %v948 = vpop.f32.mrf.mxu0
      %v949 = vadd.f32 0.0, %v948
      %v950 = vpop.f32.mrf.mxu0
      %v951 = vadd.f32 0.0, %v950
      %952 = vmatmul.bf16.gmra.mxu0 %v704
      %v953 = vpop.f32.mrf.mxu0
      %v954 = vadd.f32 0.0, %v953
      %v955 = vpop.f32.mrf.mxu0
      %v956 = vadd.f32 0.0, %v955
      %957 = vmatmul.bf16.gmra.mxu0 %v705
      %v958 = vpop.f32.mrf.mxu0
      %v959 = vadd.f32 0.0, %v958
      %v960 = vpop.f32.mrf.mxu0
      %v961 = vadd.f32 0.0, %v960
      %962 = vmatmul.bf16.gmra.mxu0 %v706
      %v963 = vpop.f32.mrf.mxu0
      %v964 = vadd.f32 0.0, %v963
      %v965 = vpop.f32.mrf.mxu0
      %v966 = vadd.f32 0.0, %v965
      %967 = vmatmul.bf16.gmra.mxu0 %v707
      %v968 = vpop.f32.mrf.mxu0
      %v969 = vadd.f32 0.0, %v968
      %v970 = vpop.f32.mrf.mxu0
      %v971 = vadd.f32 0.0, %v970
      %972 = vmatmul.bf16.gmra.mxu0 %v708
      %v973 = vpop.f32.mrf.mxu0
      %v974 = vadd.f32 0.0, %v973
      %v975 = vpop.f32.mrf.mxu0
      %v976 = vadd.f32 0.0, %v975
      %977 = vmatmul.bf16.gmra.mxu0 %v709
      %v978 = vpop.f32.mrf.mxu0
      %v979 = vadd.f32 0.0, %v978
      %v980 = vpop.f32.mrf.mxu0
      %v981 = vadd.f32 0.0, %v980
      %982 = vdwg.mxu0
      %v983 = vld [vmem:[%s2] sm:$0x1]
      %v985 = vperm.slane %v983, 0
      %v987 = vmul.f32 %v804, %v985
      %v988 = vmul.f32 %v806, %v985
      %v989 = vmul.f32 %v809, %v985
      %v990 = vmul.f32 %v811, %v985
      %v991 = vmul.f32 %v814, %v985
      %v992 = vmul.f32 %v816, %v985
      %v993 = vmul.f32 %v819, %v985
      %v994 = vmul.f32 %v821, %v985
      %v995 = vmul.f32 %v824, %v985
      %v996 = vmul.f32 %v826, %v985
      %v997 = vmul.f32 %v829, %v985
      %v998 = vmul.f32 %v831, %v985
      %v999 = vmul.f32 %v834, %v985
      %v1000 = vmul.f32 %v836, %v985
      %v1001 = vmul.f32 %v839, %v985
      %v1002 = vmul.f32 %v841, %v985
      %v1003 = vmul.f32 %v844, %v985
      %v1004 = vmul.f32 %v846, %v985
      %v1005 = vmul.f32 %v849, %v985
      %v1006 = vmul.f32 %v851, %v985
      %v1007 = vmul.f32 %v854, %v985
      %v1008 = vmul.f32 %v856, %v985
      %v1009 = vmul.f32 %v859, %v985
      %v1010 = vmul.f32 %v861, %v985
      %v1011 = vmul.f32 %v864, %v985
      %v1012 = vmul.f32 %v866, %v985
      %v1013 = vmul.f32 %v869, %v985
      %v1014 = vmul.f32 %v871, %v985
      %v1015 = vmul.f32 %v874, %v985
      %v1016 = vmul.f32 %v876, %v985
      %v1017 = vmul.f32 %v879, %v985
      %v1018 = vmul.f32 %v881, %v985
      %v1019 = vmul.f32 %v884, %v985
      %v1020 = vmul.f32 %v886, %v985
      %v1021 = vmul.f32 %v889, %v985
      %v1022 = vmul.f32 %v891, %v985
      %v1023 = vmul.f32 %v894, %v985
      %v1024 = vmul.f32 %v896, %v985
      %v1025 = vmul.f32 %v899, %v985
      %v1026 = vmul.f32 %v901, %v985
      %v1027 = vmul.f32 %v904, %v985
      %v1028 = vmul.f32 %v906, %v985
      %v1029 = vmul.f32 %v909, %v985
      %v1030 = vmul.f32 %v911, %v985
      %v1031 = vmul.f32 %v914, %v985
      %v1032 = vmul.f32 %v916, %v985
      %v1033 = vmul.f32 %v919, %v985
      %v1034 = vmul.f32 %v921, %v985
      %v1035 = vmul.f32 %v924, %v985
      %v1036 = vmul.f32 %v926, %v985
      %v1037 = vmul.f32 %v929, %v985
      %v1038 = vmul.f32 %v931, %v985
      %v1039 = vmul.f32 %v934, %v985
      %v1040 = vmul.f32 %v936, %v985
      %v1041 = vmul.f32 %v939, %v985
      %v1042 = vmul.f32 %v941, %v985
      %v1043 = vmul.f32 %v944, %v985
      %v1044 = vmul.f32 %v946, %v985
      %v1045 = vmul.f32 %v949, %v985
      %v1046 = vmul.f32 %v951, %v985
      %v1047 = vmul.f32 %v954, %v985
      %v1048 = vmul.f32 %v956, %v985
      %v1049 = vmul.f32 %v959, %v985
      %v1050 = vmul.f32 %v961, %v985
      %v1051 = vmul.f32 %v964, %v985
      %v1052 = vmul.f32 %v966, %v985
      %v1053 = vmul.f32 %v969, %v985
      %v1054 = vmul.f32 %v971, %v985
      %v1055 = vmul.f32 %v974, %v985
      %v1056 = vmul.f32 %v976, %v985
      %v1057 = vmul.f32 %v979, %v985
      %v1058 = vmul.f32 %v981, %v985
      %v1059 = vld [vmem:[%s3] sm:$0x1]
      %v1061 = vperm.slane %v1059, 0
      %v1063 = vadd.f32 %v987, %v1061
      %v1064 = vadd.f32 %v988, %v1061
      %v1065 = vadd.f32 %v989, %v1061
      %v1066 = vadd.f32 %v990, %v1061
      %v1067 = vadd.f32 %v991, %v1061
      %v1068 = vadd.f32 %v992, %v1061
      %v1069 = vadd.f32 %v993, %v1061
      %v1070 = vadd.f32 %v994, %v1061
      %v1071 = vadd.f32 %v995, %v1061
      %v1072 = vadd.f32 %v996, %v1061
      %v1073 = vadd.f32 %v997, %v1061
      %v1074 = vadd.f32 %v998, %v1061
      %v1075 = vadd.f32 %v999, %v1061
      %v1076 = vadd.f32 %v1000, %v1061
      %v1077 = vadd.f32 %v1001, %v1061
      %v1078 = vadd.f32 %v1002, %v1061
      %v1079 = vadd.f32 %v1003, %v1061
      %v1080 = vadd.f32 %v1004, %v1061
      %v1081 = vadd.f32 %v1005, %v1061
      %v1082 = vadd.f32 %v1006, %v1061
      %v1083 = vadd.f32 %v1007, %v1061
      %v1084 = vadd.f32 %v1008, %v1061
      %v1085 = vadd.f32 %v1009, %v1061
      %v1086 = vadd.f32 %v1010, %v1061
      %v1087 = vadd.f32 %v1011, %v1061
      %v1088 = vadd.f32 %v1012, %v1061
      %v1089 = vadd.f32 %v1013, %v1061
      %v1090 = vadd.f32 %v1014, %v1061
      %v1091 = vadd.f32 %v1015, %v1061
      %v1092 = vadd.f32 %v1016, %v1061
      %v1093 = vadd.f32 %v1017, %v1061
      %v1094 = vadd.f32 %v1018, %v1061
      %v1095 = vadd.f32 %v1019, %v1061
      %v1096 = vadd.f32 %v1020, %v1061
      %v1097 = vadd.f32 %v1021, %v1061
      %v1098 = vadd.f32 %v1022, %v1061
      %v1099 = vadd.f32 %v1023, %v1061
      %v1100 = vadd.f32 %v1024, %v1061
      %v1101 = vadd.f32 %v1025, %v1061
      %v1102 = vadd.f32 %v1026, %v1061
      %v1103 = vadd.f32 %v1027, %v1061
      %v1104 = vadd.f32 %v1028, %v1061
      %v1105 = vadd.f32 %v1029, %v1061
      %v1106 = vadd.f32 %v1030, %v1061
      %v1107 = vadd.f32 %v1031, %v1061
      %v1108 = vadd.f32 %v1032, %v1061
      %v1109 = vadd.f32 %v1033, %v1061
      %v1110 = vadd.f32 %v1034, %v1061
      %v1111 = vadd.f32 %v1035, %v1061
      %v1112 = vadd.f32 %v1036, %v1061
      %v1113 = vadd.f32 %v1037, %v1061
      %v1114 = vadd.f32 %v1038, %v1061
      %v1115 = vadd.f32 %v1039, %v1061
      %v1116 = vadd.f32 %v1040, %v1061
      %v1117 = vadd.f32 %v1041, %v1061
      %v1118 = vadd.f32 %v1042, %v1061
      %v1119 = vadd.f32 %v1043, %v1061
      %v1120 = vadd.f32 %v1044, %v1061
      %v1121 = vadd.f32 %v1045, %v1061
      %v1122 = vadd.f32 %v1046, %v1061
      %v1123 = vadd.f32 %v1047, %v1061
      %v1124 = vadd.f32 %v1048, %v1061
      %v1125 = vadd.f32 %v1049, %v1061
      %v1126 = vadd.f32 %v1050, %v1061
      %v1127 = vadd.f32 %v1051, %v1061
      %v1128 = vadd.f32 %v1052, %v1061
      %v1129 = vadd.f32 %v1053, %v1061
      %v1130 = vadd.f32 %v1054, %v1061
      %v1131 = vadd.f32 %v1055, %v1061
      %v1132 = vadd.f32 %v1056, %v1061
      %v1133 = vadd.f32 %v1057, %v1061
      %v1134 = vadd.f32 %v1058, %v1061
      %v1135 = vmax.f32 %v1063, 0.0
      %v1136 = vmax.f32 %v1064, 0.0
      %v1137 = vmax.f32 %v1065, 0.0
      %v1138 = vmax.f32 %v1066, 0.0
      %v1139 = vmax.f32 %v1067, 0.0
      %v1140 = vmax.f32 %v1068, 0.0
      %v1141 = vmax.f32 %v1069, 0.0
      %v1142 = vmax.f32 %v1070, 0.0
      %v1143 = vmax.f32 %v1071, 0.0
      %v1144 = vmax.f32 %v1072, 0.0
      %v1145 = vmax.f32 %v1073, 0.0
      %v1146 = vmax.f32 %v1074, 0.0
      %v1147 = vmax.f32 %v1075, 0.0
      %v1148 = vmax.f32 %v1076, 0.0
      %v1149 = vmax.f32 %v1077, 0.0
      %v1150 = vmax.f32 %v1078, 0.0
      %v1151 = vmax.f32 %v1079, 0.0
      %v1152 = vmax.f32 %v1080, 0.0
      %v1153 = vmax.f32 %v1081, 0.0
      %v1154 = vmax.f32 %v1082, 0.0
      %v1155 = vmax.f32 %v1083, 0.0
      %v1156 = vmax.f32 %v1084, 0.0
      %v1157 = vmax.f32 %v1085, 0.0
      %v1158 = vmax.f32 %v1086, 0.0
      %v1159 = vmax.f32 %v1087, 0.0
      %v1160 = vmax.f32 %v1088, 0.0
      %v1161 = vmax.f32 %v1089, 0.0
      %v1162 = vmax.f32 %v1090, 0.0
      %v1163 = vmax.f32 %v1091, 0.0
      %v1164 = vmax.f32 %v1092, 0.0
      %v1165 = vmax.f32 %v1093, 0.0
      %v1166 = vmax.f32 %v1094, 0.0
      %v1167 = vmax.f32 %v1095, 0.0
      %v1168 = vmax.f32 %v1096, 0.0
      %v1169 = vmax.f32 %v1097, 0.0
      %v1170 = vmax.f32 %v1098, 0.0
      %v1171 = vmax.f32 %v1099, 0.0
      %v1172 = vmax.f32 %v1100, 0.0
      %v1173 = vmax.f32 %v1101, 0.0
      %v1174 = vmax.f32 %v1102, 0.0
      %v1175 = vmax.f32 %v1103, 0.0
      %v1176 = vmax.f32 %v1104, 0.0
      %v1177 = vmax.f32 %v1105, 0.0
      %v1178 = vmax.f32 %v1106, 0.0
      %v1179 = vmax.f32 %v1107, 0.0
      %v1180 = vmax.f32 %v1108, 0.0
      %v1181 = vmax.f32 %v1109, 0.0
      %v1182 = vmax.f32 %v1110, 0.0
      %v1183 = vmax.f32 %v1111, 0.0
      %v1184 = vmax.f32 %v1112, 0.0
      %v1185 = vmax.f32 %v1113, 0.0
      %v1186 = vmax.f32 %v1114, 0.0
      %v1187 = vmax.f32 %v1115, 0.0
      %v1188 = vmax.f32 %v1116, 0.0
      %v1189 = vmax.f32 %v1117, 0.0
      %v1190 = vmax.f32 %v1118, 0.0
      %v1191 = vmax.f32 %v1119, 0.0
      %v1192 = vmax.f32 %v1120, 0.0
      %v1193 = vmax.f32 %v1121, 0.0
      %v1194 = vmax.f32 %v1122, 0.0
      %v1195 = vmax.f32 %v1123, 0.0
      %v1196 = vmax.f32 %v1124, 0.0
      %v1197 = vmax.f32 %v1125, 0.0
      %v1198 = vmax.f32 %v1126, 0.0
      %v1199 = vmax.f32 %v1127, 0.0
      %v1200 = vmax.f32 %v1128, 0.0
      %v1201 = vmax.f32 %v1129, 0.0
      %v1202 = vmax.f32 %v1130, 0.0
      %v1203 = vmax.f32 %v1131, 0.0
      %v1204 = vmax.f32 %v1132, 0.0
      %v1205 = vmax.f32 %v1133, 0.0
      %v1206 = vmax.f32 %v1134, 0.0
      %v1207 = vpack.c.bf16 %v1135, %v1135
      %v1208 = vpack.c.bf16 %v1136, %v1136
      %v1209 = vpack.c.bf16 %v1137, %v1137
      %v1210 = vpack.c.bf16 %v1138, %v1138
      %v1211 = vpack.c.bf16 %v1139, %v1139
      %v1212 = vpack.c.bf16 %v1140, %v1140
      %v1213 = vpack.c.bf16 %v1141, %v1141
      %v1214 = vpack.c.bf16 %v1142, %v1142
      %v1215 = vpack.c.bf16 %v1143, %v1143
      %v1216 = vpack.c.bf16 %v1144, %v1144
      %v1217 = vpack.c.bf16 %v1145, %v1145
      %v1218 = vpack.c.bf16 %v1146, %v1146
      %v1219 = vpack.c.bf16 %v1147, %v1147
      %v1220 = vpack.c.bf16 %v1148, %v1148
      %v1221 = vpack.c.bf16 %v1149, %v1149
      %v1222 = vpack.c.bf16 %v1150, %v1150
      %v1223 = vpack.c.bf16 %v1151, %v1151
      %v1224 = vpack.c.bf16 %v1152, %v1152
      %v1225 = vpack.c.bf16 %v1153, %v1153
      %v1226 = vpack.c.bf16 %v1154, %v1154
      %v1227 = vpack.c.bf16 %v1155, %v1155
      %v1228 = vpack.c.bf16 %v1156, %v1156
      %v1229 = vpack.c.bf16 %v1157, %v1157
      %v1230 = vpack.c.bf16 %v1158, %v1158
      %v1231 = vpack.c.bf16 %v1159, %v1159
      %v1232 = vpack.c.bf16 %v1160, %v1160
      %v1233 = vpack.c.bf16 %v1161, %v1161
      %v1234 = vpack.c.bf16 %v1162, %v1162
      %v1235 = vpack.c.bf16 %v1163, %v1163
      %v1236 = vpack.c.bf16 %v1164, %v1164
      %v1237 = vpack.c.bf16 %v1165, %v1165
      %v1238 = vpack.c.bf16 %v1166, %v1166
      %v1239 = vpack.c.bf16 %v1167, %v1167
      %v1240 = vpack.c.bf16 %v1168, %v1168
      %v1241 = vpack.c.bf16 %v1169, %v1169
      %v1242 = vpack.c.bf16 %v1170, %v1170
      %v1243 = vpack.c.bf16 %v1171, %v1171
      %v1244 = vpack.c.bf16 %v1172, %v1172
      %v1245 = vpack.c.bf16 %v1173, %v1173
      %v1246 = vpack.c.bf16 %v1174, %v1174
      %v1247 = vpack.c.bf16 %v1175, %v1175
      %v1248 = vpack.c.bf16 %v1176, %v1176
      %v1249 = vpack.c.bf16 %v1177, %v1177
      %v1250 = vpack.c.bf16 %v1178, %v1178
      %v1251 = vpack.c.bf16 %v1179, %v1179
      %v1252 = vpack.c.bf16 %v1180, %v1180
      %v1253 = vpack.c.bf16 %v1181, %v1181
      %v1254 = vpack.c.bf16 %v1182, %v1182
      %v1255 = vpack.c.bf16 %v1183, %v1183
      %v1256 = vpack.c.bf16 %v1184, %v1184
      %v1257 = vpack.c.bf16 %v1185, %v1185
      %v1258 = vpack.c.bf16 %v1186, %v1186
      %v1259 = vpack.c.bf16 %v1187, %v1187
      %v1260 = vpack.c.bf16 %v1188, %v1188
      %v1261 = vpack.c.bf16 %v1189, %v1189
      %v1262 = vpack.c.bf16 %v1190, %v1190
      %v1263 = vpack.c.bf16 %v1191, %v1191
      %v1264 = vpack.c.bf16 %v1192, %v1192
      %v1265 = vpack.c.bf16 %v1193, %v1193
      %v1266 = vpack.c.bf16 %v1194, %v1194
      %v1267 = vpack.c.bf16 %v1195, %v1195
      %v1268 = vpack.c.bf16 %v1196, %v1196
      %v1269 = vpack.c.bf16 %v1197, %v1197
      %v1270 = vpack.c.bf16 %v1198, %v1198
      %v1271 = vpack.c.bf16 %v1199, %v1199
      %v1272 = vpack.c.bf16 %v1200, %v1200
      %v1273 = vpack.c.bf16 %v1201, %v1201
      %v1274 = vpack.c.bf16 %v1202, %v1202
      %v1275 = vpack.c.bf16 %v1203, %v1203
      %v1276 = vpack.c.bf16 %v1204, %v1204
      %v1277 = vpack.c.bf16 %v1205, %v1205
      %v1278 = vpack.c.bf16 %v1206, %v1206
      %1279 = vst [vmem:[#allocation2] sm:$0xf] %v1207
      %1280 = vst [vmem:[#allocation2 + $0x4] sm:$0xf] %v1208
      %1281 = vst [vmem:[#allocation2 + $0x8] sm:$0xf] %v1209
      %1282 = vst [vmem:[#allocation2 + $0xc] sm:$0xf] %v1210
      %1283 = vst [vmem:[#allocation2 + $0x10] sm:$0xf] %v1211
      %1284 = vst [vmem:[#allocation2 + $0x14] sm:$0xf] %v1212
      %1285 = vst [vmem:[#allocation2 + $0x18] sm:$0xf] %v1213
      %1286 = vst [vmem:[#allocation2 + $0x1c] sm:$0xf] %v1214
      %1287 = vst [vmem:[#allocation2 + $0x20] sm:$0xf] %v1215
      %1288 = vst [vmem:[#allocation2 + $0x24] sm:$0xf] %v1216
      %1289 = vst [vmem:[#allocation2 + $0x28] sm:$0xf] %v1217
      %1290 = vst [vmem:[#allocation2 + $0x2c] sm:$0xf] %v1218
      %1291 = vst [vmem:[#allocation2 + $0x30] sm:$0xf] %v1219
      %1292 = vst [vmem:[#allocation2 + $0x34] sm:$0xf] %v1220
      %1293 = vst [vmem:[#allocation2 + $0x38] sm:$0xf] %v1221
      %1294 = vst [vmem:[#allocation2 + $0x3c] sm:$0xf] %v1222
      %1295 = vst [vmem:[#allocation2 + $0x40] sm:$0xf] %v1223
      %1296 = vst [vmem:[#allocation2 + $0x44] sm:$0xf] %v1224
      %1297 = vst [vmem:[#allocation2 + $0x48] sm:$0xf] %v1225
      %1298 = vst [vmem:[#allocation2 + $0x4c] sm:$0xf] %v1226
      %1299 = vst [vmem:[#allocation2 + $0x50] sm:$0xf] %v1227
      %1300 = vst [vmem:[#allocation2 + $0x54] sm:$0xf] %v1228
      %1301 = vst [vmem:[#allocation2 + $0x58] sm:$0xf] %v1229
      %1302 = vst [vmem:[#allocation2 + $0x5c] sm:$0xf] %v1230
      %1303 = vst [vmem:[#allocation2 + $0x60] sm:$0xf] %v1231
      %1304 = vst [vmem:[#allocation2 + $0x64] sm:$0xf] %v1232
      %1305 = vst [vmem:[#allocation2 + $0x68] sm:$0xf] %v1233
      %1306 = vst [vmem:[#allocation2 + $0x6c] sm:$0xf] %v1234
      %1307 = vst [vmem:[#allocation2 + $0x70] sm:$0xf] %v1235
      %1308 = vst [vmem:[#allocation2 + $0x74] sm:$0xf] %v1236
      %1309 = vst [vmem:[#allocation2 + $0x78] sm:$0xf] %v1237
      %1310 = vst [vmem:[#allocation2 + $0x7c] sm:$0xf] %v1238
      %1311 = vst [vmem:[#allocation2 + $0x80] sm:$0xf] %v1239
      %1312 = vst [vmem:[#allocation2 + $0x84] sm:$0xf] %v1240
      %1313 = vst [vmem:[#allocation2 + $0x88] sm:$0xf] %v1241
      %1314 = vst [vmem:[#allocation2 + $0x8c] sm:$0xf] %v1242
      %1315 = vst [vmem:[#allocation2 + $0x90] sm:$0xf] %v1243
      %1316 = vst [vmem:[#allocation2 + $0x94] sm:$0xf] %v1244
      %1317 = vst [vmem:[#allocation2 + $0x98] sm:$0xf] %v1245
      %1318 = vst [vmem:[#allocation2 + $0x9c] sm:$0xf] %v1246
      %1319 = vst [vmem:[#allocation2 + $0xa0] sm:$0xf] %v1247
      %1320 = vst [vmem:[#allocation2 + $0xa4] sm:$0xf] %v1248
      %1321 = vst [vmem:[#allocation2 + $0xa8] sm:$0xf] %v1249
      %1322 = vst [vmem:[#allocation2 + $0xac] sm:$0xf] %v1250
      %1323 = vst [vmem:[#allocation2 + $0xb0] sm:$0xf] %v1251
      %1324 = vst [vmem:[#allocation2 + $0xb4] sm:$0xf] %v1252
      %1325 = vst [vmem:[#allocation2 + $0xb8] sm:$0xf] %v1253
      %1326 = vst [vmem:[#allocation2 + $0xbc] sm:$0xf] %v1254
      %1327 = vst [vmem:[#allocation2 + $0xc0] sm:$0xf] %v1255
      %1328 = vst [vmem:[#allocation2 + $0xc4] sm:$0xf] %v1256
      %1329 = vst [vmem:[#allocation2 + $0xc8] sm:$0xf] %v1257
      %1330 = vst [vmem:[#allocation2 + $0xcc] sm:$0xf] %v1258
      %1331 = vst [vmem:[#allocation2 + $0xd0] sm:$0xf] %v1259
      %1332 = vst [vmem:[#allocation2 + $0xd4] sm:$0xf] %v1260
      %1333 = vst [vmem:[#allocation2 + $0xd8] sm:$0xf] %v1261
      %1334 = vst [vmem:[#allocation2 + $0xdc] sm:$0xf] %v1262
      %1335 = vst [vmem:[#allocation2 + $0xe0] sm:$0xf] %v1263
      %1336 = vst [vmem:[#allocation2 + $0xe4] sm:$0xf] %v1264
      %1337 = vst [vmem:[#allocation2 + $0xe8] sm:$0xf] %v1265
      %1338 = vst [vmem:[#allocation2 + $0xec] sm:$0xf] %v1266
      %1339 = vst [vmem:[#allocation2 + $0xf0] sm:$0xf] %v1267
      %1340 = vst [vmem:[#allocation2 + $0xf4] sm:$0xf] %v1268
      %1341 = vst [vmem:[#allocation2 + $0xf8] sm:$0xf] %v1269
      %1342 = vst [vmem:[#allocation2 + $0xfc] sm:$0xf] %v1270
      %1343 = vst [vmem:[#allocation2 + $0x100] sm:$0xf] %v1271
      %1344 = vst [vmem:[#allocation2 + $0x104] sm:$0xf] %v1272
      %1345 = vst [vmem:[#allocation2 + $0x108] sm:$0xf] %v1273
      %1346 = vst [vmem:[#allocation2 + $0x10c] sm:$0xf] %v1274
      %1347 = vst [vmem:[#allocation2 + $0x110] sm:$0xf] %v1275
      %1348 = vst [vmem:[#allocation2 + $0x114] sm:$0xf] %v1276
      %1349 = vst [vmem:[#allocation2 + $0x118] sm:$0xf] %v1277
      %1350 = vst [vmem:[#allocation2 + $0x11c] sm:$0xf] %v1278
      %1351 = vst [vmem:[#allocation2] sm:$0xf] 0
      %1352 = vst [vmem:[#allocation2 + $0x4] sm:$0xf] 0
      %vm1353 = vcmask 1040384
      %vm1354 = vsmask.f32 256
      %vm1355 = vmand %vm1353, %vm1354
      %v1356 = vld [vmem:[#allocation2] sm:$0x1]
      %v1357 = vsel %vm1355, 0, %v1356
      %1358 = vst [vmem:[#allocation2] sm:$0x1] %v1357
      %v1359 = vld [vmem:[#allocation2 + $0x8] sm:$0x1]
      %v1360 = vsel %vm1355, 0, %v1359
      %1361 = vst [vmem:[#allocation2 + $0x8] sm:$0x1] %v1360
      %v1362 = vld [vmem:[#allocation2 + $0x10] sm:$0x1]
      %v1363 = vsel %vm1355, 0, %v1362
      %1364 = vst [vmem:[#allocation2 + $0x10] sm:$0x1] %v1363
      %v1365 = vld [vmem:[#allocation2 + $0x18] sm:$0x1]
      %v1366 = vsel %vm1355, 0, %v1365
      %1367 = vst [vmem:[#allocation2 + $0x18] sm:$0x1] %v1366
      %v1368 = vld [vmem:[#allocation2 + $0x20] sm:$0x1]
      %v1369 = vsel %vm1355, 0, %v1368
      %1370 = vst [vmem:[#allocation2 + $0x20] sm:$0x1] %v1369
      %v1371 = vld [vmem:[#allocation2 + $0x28] sm:$0x1]
      %v1372 = vsel %vm1355, 0, %v1371
      %1373 = vst [vmem:[#allocation2 + $0x28] sm:$0x1] %v1372
      %v1374 = vld [vmem:[#allocation2 + $0x30] sm:$0x1]
      %v1375 = vsel %vm1355, 0, %v1374
      %1376 = vst [vmem:[#allocation2 + $0x30] sm:$0x1] %v1375
      %v1377 = vld [vmem:[#allocation2 + $0x38] sm:$0x1]
      %v1378 = vsel %vm1355, 0, %v1377
      %1379 = vst [vmem:[#allocation2 + $0x38] sm:$0x1] %v1378
      %v1380 = vld [vmem:[#allocation2 + $0x40] sm:$0x1]
      %v1381 = vsel %vm1355, 0, %v1380
      %1382 = vst [vmem:[#allocation2 + $0x40] sm:$0x1] %v1381
      %vm1383 = vcmask 1043456
      %vm1384 = vsmask.f32 7938
      %vm1385 = vmand %vm1383, %vm1384
      %v1386 = vld [vmem:[#allocation2 + $0x4] sm:$0xf]
      %v1387 = vsel %vm1385, 0, %v1386
      %1388 = vst [vmem:[#allocation2 + $0x4] sm:$0xf] %v1387
      %v1389 = vld [vmem:[#allocation2 + $0xc] sm:$0xf]
      %v1390 = vsel %vm1385, 0, %v1389
      %1391 = vst [vmem:[#allocation2 + $0xc] sm:$0xf] %v1390
      %v1392 = vld [vmem:[#allocation2 + $0x14] sm:$0xf]
      %v1393 = vsel %vm1385, 0, %v1392
      %1394 = vst [vmem:[#allocation2 + $0x14] sm:$0xf] %v1393
      %v1395 = vld [vmem:[#allocation2 + $0x1c] sm:$0xf]
      %v1396 = vsel %vm1385, 0, %v1395
      %1397 = vst [vmem:[#allocation2 + $0x1c] sm:$0xf] %v1396
      %v1398 = vld [vmem:[#allocation2 + $0x24] sm:$0xf]
      %v1399 = vsel %vm1385, 0, %v1398
      %1400 = vst [vmem:[#allocation2 + $0x24] sm:$0xf] %v1399
      %v1401 = vld [vmem:[#allocation2 + $0x2c] sm:$0xf]
      %v1402 = vsel %vm1385, 0, %v1401
      %1403 = vst [vmem:[#allocation2 + $0x2c] sm:$0xf] %v1402
      %v1404 = vld [vmem:[#allocation2 + $0x34] sm:$0xf]
      %v1405 = vsel %vm1385, 0, %v1404
      %1406 = vst [vmem:[#allocation2 + $0x34] sm:$0xf] %v1405
      %v1407 = vld [vmem:[#allocation2 + $0x3c] sm:$0xf]
      %v1408 = vsel %vm1385, 0, %v1407
      %1409 = vst [vmem:[#allocation2 + $0x3c] sm:$0xf] %v1408
      %v1410 = vld [vmem:[#allocation2 + $0x44] sm:$0xf]
      %v1411 = vsel %vm1385, 0, %v1410
      %1412 = vst [vmem:[#allocation2 + $0x44] sm:$0xf] %v1411
      %s1413 = scalar_lea.vmem [#allocation2], 72
      %1414 = vst [vmem:[%s1413] sm:$0xf] 0
      %1415 = vst [vmem:[%s1413 + $0x4] sm:$0xf] 0
      %1416 = vst [vmem:[%s1413 + $0x4] sm:$0xf] 0
      %1417 = vst [vmem:[%s1413 + $0xc] sm:$0xf] 0
      %1418 = vst [vmem:[%s1413 + $0x14] sm:$0xf] 0
      %1419 = vst [vmem:[%s1413 + $0x1c] sm:$0xf] 0
      %1420 = vst [vmem:[%s1413 + $0x24] sm:$0xf] 0
      %1421 = vst [vmem:[%s1413 + $0x2c] sm:$0xf] 0
      %1422 = vst [vmem:[%s1413 + $0x34] sm:$0xf] 0
      %1423 = vst [vmem:[%s1413 + $0x3c] sm:$0xf] 0
      %1424 = vst [vmem:[%s1413 + $0x44] sm:$0xf] 0
      %s1425 = scalar_lea.vmem [#allocation2], 208
      %1426 = vst [vmem:[%s1425] sm:$0xf] 0
      %1427 = vst [vmem:[%s1425 + $0x4] sm:$0xf] 0
      %s1428 = scalar_lea.vmem [#allocation2], 144
      %v1429 = vld [vmem:[%s1428] sm:$0x1]
      %v1430 = vsel %vm1355, 0, %v1429
      %1431 = vst [vmem:[%s1428] sm:$0x1] %v1430
      %v1432 = vld [vmem:[%s1428 + $0x8] sm:$0x1]
      %v1433 = vsel %vm1355, 0, %v1432
      %1434 = vst [vmem:[%s1428 + $0x8] sm:$0x1] %v1433
      %v1435 = vld [vmem:[%s1428 + $0x10] sm:$0x1]
      %v1436 = vsel %vm1355, 0, %v1435
      %1437 = vst [vmem:[%s1428 + $0x10] sm:$0x1] %v1436
      %v1438 = vld [vmem:[%s1428 + $0x18] sm:$0x1]
      %v1439 = vsel %vm1355, 0, %v1438
      %1440 = vst [vmem:[%s1428 + $0x18] sm:$0x1] %v1439
      %v1441 = vld [vmem:[%s1428 + $0x20] sm:$0x1]
      %v1442 = vsel %vm1355, 0, %v1441
      %1443 = vst [vmem:[%s1428 + $0x20] sm:$0x1] %v1442
      %v1444 = vld [vmem:[%s1428 + $0x28] sm:$0x1]
      %v1445 = vsel %vm1355, 0, %v1444
      %1446 = vst [vmem:[%s1428 + $0x28] sm:$0x1] %v1445
      %v1447 = vld [vmem:[%s1428 + $0x30] sm:$0x1]
      %v1448 = vsel %vm1355, 0, %v1447
      %1449 = vst [vmem:[%s1428 + $0x30] sm:$0x1] %v1448
      %v1450 = vld [vmem:[%s1428 + $0x38] sm:$0x1]
      %v1451 = vsel %vm1355, 0, %v1450
      %1452 = vst [vmem:[%s1428 + $0x38] sm:$0x1] %v1451
      %v1453 = vld [vmem:[%s1428 + $0x40] sm:$0x1]
      %v1454 = vsel %vm1355, 0, %v1453
      %1455 = vst [vmem:[%s1428 + $0x40] sm:$0x1] %v1454
      %v1456 = vld [vmem:[%s1428 + $0x4] sm:$0xf]
      %v1457 = vsel %vm1385, 0, %v1456
      %1458 = vst [vmem:[%s1428 + $0x4] sm:$0xf] %v1457
      %v1459 = vld [vmem:[%s1428 + $0xc] sm:$0xf]
      %v1460 = vsel %vm1385, 0, %v1459
      %1461 = vst [vmem:[%s1428 + $0xc] sm:$0xf] %v1460
      %v1462 = vld [vmem:[%s1428 + $0x14] sm:$0xf]
      %v1463 = vsel %vm1385, 0, %v1462
      %1464 = vst [vmem:[%s1428 + $0x14] sm:$0xf] %v1463
      %v1465 = vld [vmem:[%s1428 + $0x1c] sm:$0xf]
      %v1466 = vsel %vm1385, 0, %v1465
      %1467 = vst [vmem:[%s1428 + $0x1c] sm:$0xf] %v1466
      %v1468 = vld [vmem:[%s1428 + $0x24] sm:$0xf]
      %v1469 = vsel %vm1385, 0, %v1468
      %1470 = vst [vmem:[%s1428 + $0x24] sm:$0xf] %v1469
      %v1471 = vld [vmem:[%s1428 + $0x2c] sm:$0xf]
      %v1472 = vsel %vm1385, 0, %v1471
      %1473 = vst [vmem:[%s1428 + $0x2c] sm:$0xf] %v1472
      %v1474 = vld [vmem:[%s1428 + $0x34] sm:$0xf]
      %v1475 = vsel %vm1385, 0, %v1474
      %1476 = vst [vmem:[%s1428 + $0x34] sm:$0xf] %v1475
      %v1477 = vld [vmem:[%s1428 + $0x3c] sm:$0xf]
      %v1478 = vsel %vm1385, 0, %v1477
      %1479 = vst [vmem:[%s1428 + $0x3c] sm:$0xf] %v1478
      %v1480 = vld [vmem:[%s1428 + $0x44] sm:$0xf]
      %v1481 = vsel %vm1385, 0, %v1480
      %1482 = vst [vmem:[%s1428 + $0x44] sm:$0xf] %v1481
      %s1483 = scalar_lea.vmem [#allocation2], 280
      %1484 = vst [vmem:[%s1483] sm:$0xf] 0
      %1485 = vst [vmem:[%s1483 + $0x4] sm:$0xf] 0
      %s1486 = scalar_lea.vmem [#allocation2], 216
      %1487 = vst [vmem:[%s1486 + $0x4] sm:$0xf] 0
      %1488 = vst [vmem:[%s1486 + $0xc] sm:$0xf] 0
      %1489 = vst [vmem:[%s1486 + $0x14] sm:$0xf] 0
      %1490 = vst [vmem:[%s1486 + $0x1c] sm:$0xf] 0
      %1491 = vst [vmem:[%s1486 + $0x24] sm:$0xf] 0
      %1492 = vst [vmem:[%s1486 + $0x2c] sm:$0xf] 0
      %1493 = vst [vmem:[%s1486 + $0x34] sm:$0xf] 0
      %1494 = vst [vmem:[%s1486 + $0x3c] sm:$0xf] 0
      %1495 = vst [vmem:[%s1486 + $0x44] sm:$0xf] 0
      %v1496 = vld [vmem:[#allocation2] sm:$0xf]
      %v1497 = vld [vmem:[#allocation2 + $0x8] sm:$0xf]
      %v1498 = vld [vmem:[#allocation2 + $0x10] sm:$0xf]
      %v1499 = vld [vmem:[#allocation2 + $0x18] sm:$0xf]
      %v1500 = vld [vmem:[#allocation2 + $0x20] sm:$0xf]
      %v1501 = vld [vmem:[#allocation2 + $0x28] sm:$0xf]
      %v1502 = vld [vmem:[#allocation2 + $0x30] sm:$0xf]
      %v1503 = vld [vmem:[#allocation2 + $0x38] sm:$0xf]
      %v1504 = vld [vmem:[#allocation2 + $0x40] sm:$0xf]
      %v1505 = vld [vmem:[#allocation2 + $0x4] sm:$0x1]
      %v1506 = vld [vmem:[#allocation2 + $0xc] sm:$0x1]
      %v1507 = vld [vmem:[#allocation2 + $0x14] sm:$0x1]
      %v1508 = vld [vmem:[#allocation2 + $0x1c] sm:$0x1]
      %v1509 = vld [vmem:[#allocation2 + $0x24] sm:$0x1]
      %v1510 = vld [vmem:[#allocation2 + $0x2c] sm:$0x1]
      %v1511 = vld [vmem:[#allocation2 + $0x34] sm:$0x1]
      %v1512 = vld [vmem:[#allocation2 + $0x3c] sm:$0x1]
      %v1513 = vld [vmem:[#allocation2 + $0x44] sm:$0x1]
      %v1532 = vunpack.c.l.b16 %v1496
      %v1533 = vunpack.c.l.b16 %v1505
      %v1534 = vunpack.c.l.b16 %v1497
      %v1535 = vunpack.c.l.b16 %v1506
      %v1536 = vunpack.c.l.b16 %v1498
      %v1537 = vunpack.c.l.b16 %v1507
      %v1538 = vunpack.c.l.b16 %v1499
      %v1539 = vunpack.c.l.b16 %v1508
      %v1540 = vunpack.c.l.b16 %v1500
      %v1541 = vunpack.c.l.b16 %v1509
      %v1542 = vunpack.c.l.b16 %v1501
      %v1543 = vunpack.c.l.b16 %v1510
      %v1544 = vunpack.c.l.b16 %v1502
      %v1545 = vunpack.c.l.b16 %v1511
      %v1546 = vunpack.c.l.b16 %v1503
      %v1547 = vunpack.c.l.b16 %v1512
      %v1548 = vunpack.c.l.b16 %v1504
      %v1549 = vunpack.c.l.b16 %v1513
      %v1550 = vpack.c.b16 %v1533, %v1532
      %v1551 = vpack.c.b16 %v1535, %v1534
      %v1552 = vpack.c.b16 %v1537, %v1536
      %v1553 = vpack.c.b16 %v1539, %v1538
      %v1554 = vpack.c.b16 %v1541, %v1540
      %v1555 = vpack.c.b16 %v1543, %v1542
      %v1556 = vpack.c.b16 %v1545, %v1544
      %v1557 = vpack.c.b16 %v1547, %v1546
      %v1558 = vpack.c.b16 %v1549, %v1548
      %v1560 = vshrl.u32 %v1550, 16
      %v1562 = vshll.u32 %v1550, 16
      %v1564 = vrot.slane %v1562, 1
      %v1565 = vor.u32 %v1560, %v1564
      %v1567 = vshrl.u32 %v1551, 16
      %v1569 = vshll.u32 %v1551, 16
      %v1571 = vrot.slane %v1569, 1
      %v1572 = vor.u32 %v1567, %v1571
      %v1574 = vshrl.u32 %v1552, 16
      %v1576 = vshll.u32 %v1552, 16
      %v1578 = vrot.slane %v1576, 1
      %v1579 = vor.u32 %v1574, %v1578
      %v1581 = vshrl.u32 %v1553, 16
      %v1583 = vshll.u32 %v1553, 16
      %v1585 = vrot.slane %v1583, 1
      %v1586 = vor.u32 %v1581, %v1585
      %v1588 = vshrl.u32 %v1554, 16
      %v1590 = vshll.u32 %v1554, 16
      %v1592 = vrot.slane %v1590, 1
      %v1593 = vor.u32 %v1588, %v1592
      %v1595 = vshrl.u32 %v1555, 16
      %v1597 = vshll.u32 %v1555, 16
      %v1599 = vrot.slane %v1597, 1
      %v1600 = vor.u32 %v1595, %v1599
      %v1602 = vshrl.u32 %v1556, 16
      %v1604 = vshll.u32 %v1556, 16
      %v1606 = vrot.slane %v1604, 1
      %v1607 = vor.u32 %v1602, %v1606
      %v1609 = vshrl.u32 %v1557, 16
      %v1611 = vshll.u32 %v1557, 16
      %v1613 = vrot.slane %v1611, 1
      %v1614 = vor.u32 %v1609, %v1613
      %v1616 = vshrl.u32 %v1558, 16
      %v1618 = vshll.u32 %v1558, 16
      %v1620 = vrot.slane %v1618, 1
      %v1621 = vor.u32 %v1616, %v1620
      %v1622 = vunpack.c.l.b16 %v1565
      %v1623 = vunpack.c.l.b16 %v1572
      %v1624 = vunpack.c.l.b16 %v1579
      %v1625 = vunpack.c.l.b16 %v1586
      %v1626 = vunpack.c.l.b16 %v1593
      %v1627 = vunpack.c.l.b16 %v1600
      %v1628 = vunpack.c.l.b16 %v1607
      %v1629 = vunpack.c.l.b16 %v1614
      %v1630 = vld [vmem:[%s4] sm:$0xf]
      %v1631 = vld [vmem:[%s4 + $0x4] sm:$0xf]
      %v1632 = vld [vmem:[%s4 + $0x8] sm:$0xf]
      %v1633 = vld [vmem:[%s4 + $0xc] sm:$0xf]
      %v1634 = vld [vmem:[%s4 + $0x10] sm:$0xf]
      %v1635 = vld [vmem:[%s4 + $0x14] sm:$0xf]
      %v1636 = vld [vmem:[%s4 + $0x18] sm:$0xf]
      %v1637 = vld [vmem:[%s4 + $0x1c] sm:$0xf]
      %v1638 = vld [vmem:[%s4 + $0x20] sm:$0xf]
      %v1639 = vld [vmem:[%s4 + $0x24] sm:$0xf]
      %v1640 = vld [vmem:[%s4 + $0x28] sm:$0xf]
      %v1641 = vld [vmem:[%s4 + $0x2c] sm:$0xf]
      %v1642 = vld [vmem:[%s4 + $0x30] sm:$0xf]
      %v1643 = vld [vmem:[%s4 + $0x34] sm:$0xf]
      %v1644 = vld [vmem:[%s4 + $0x38] sm:$0xf]
      %v1645 = vld [vmem:[%s4 + $0x3c] sm:$0xf]
      %v1646 = vld [vmem:[%s4 + $0x40] sm:$0xf]
      %v1647 = vld [vmem:[%s4 + $0x44] sm:$0xf]
      %v1648 = vld [vmem:[%s4 + $0x48] sm:$0xf]
      %v1649 = vld [vmem:[%s4 + $0x4c] sm:$0xf]
      %v1650 = vld [vmem:[%s4 + $0x50] sm:$0xf]
      %v1651 = vld [vmem:[%s4 + $0x54] sm:$0xf]
      %v1652 = vld [vmem:[%s4 + $0x58] sm:$0xf]
      %v1653 = vld [vmem:[%s4 + $0x5c] sm:$0xf]
      %v1654 = vld [vmem:[%s4 + $0x60] sm:$0xf]
      %v1655 = vld [vmem:[%s4 + $0x64] sm:$0xf]
      %v1656 = vld [vmem:[%s4 + $0x68] sm:$0xf]
      %v1657 = vld [vmem:[%s4 + $0x6c] sm:$0xf]
      %v1658 = vld [vmem:[%s4 + $0x70] sm:$0xf]
      %v1659 = vld [vmem:[%s4 + $0x74] sm:$0xf]
      %v1660 = vld [vmem:[%s4 + $0x78] sm:$0xf]
      %v1661 = vld [vmem:[%s4 + $0x7c] sm:$0xf]
      %v1662 = vunpack.c.l.b16 %v1621
      %v1663 = vld [vmem:[%s4 + $0x80] sm:$0xf]
      %v1664 = vld [vmem:[%s4 + $0x84] sm:$0xf]
      %v1665 = vld [vmem:[%s4 + $0x88] sm:$0xf]
      %v1666 = vld [vmem:[%s4 + $0x8c] sm:$0xf]
      %v1667 = vld [vmem:[%s4 + $0x90] sm:$0xf]
      %v1668 = vld [vmem:[%s4 + $0x94] sm:$0xf]
      %v1669 = vld [vmem:[%s4 + $0x98] sm:$0xf]
      %v1670 = vld [vmem:[%s4 + $0x9c] sm:$0xf]
      %v1671 = vld [vmem:[%s4 + $0xa0] sm:$0xf]
      %v1672 = vld [vmem:[%s4 + $0xa4] sm:$0xf]
      %v1673 = vld [vmem:[%s4 + $0xa8] sm:$0xf]
      %v1674 = vld [vmem:[%s4 + $0xac] sm:$0xf]
      %v1675 = vld [vmem:[%s4 + $0xb0] sm:$0xf]
      %v1676 = vld [vmem:[%s4 + $0xb4] sm:$0xf]
      %v1677 = vld [vmem:[%s4 + $0xb8] sm:$0xf]
      %v1678 = vld [vmem:[%s4 + $0xbc] sm:$0xf]
      %v1679 = vld [vmem:[%s4 + $0xc0] sm:$0xf]
      %v1680 = vld [vmem:[%s4 + $0xc4] sm:$0xf]
      %v1681 = vld [vmem:[%s4 + $0xc8] sm:$0xf]
      %v1682 = vld [vmem:[%s4 + $0xcc] sm:$0xf]
      %v1683 = vld [vmem:[%s4 + $0xd0] sm:$0xf]
      %v1684 = vld [vmem:[%s4 + $0xd4] sm:$0xf]
      %v1685 = vld [vmem:[%s4 + $0xd8] sm:$0xf]
      %v1686 = vld [vmem:[%s4 + $0xdc] sm:$0xf]
      %v1687 = vld [vmem:[%s4 + $0xe0] sm:$0xf]
      %v1688 = vld [vmem:[%s4 + $0xe4] sm:$0xf]
      %v1689 = vld [vmem:[%s4 + $0xe8] sm:$0xf]
      %v1690 = vld [vmem:[%s4 + $0xec] sm:$0xf]
      %v1691 = vld [vmem:[%s4 + $0xf0] sm:$0xf]
      %v1692 = vld [vmem:[%s4 + $0xf4] sm:$0xf]
      %v1693 = vld [vmem:[%s4 + $0xf8] sm:$0xf]
      %v1694 = vld [vmem:[%s4 + $0xfc] sm:$0xf]
      %v1695 = vpack.c.b16 %v1536, %v1534
      %v1696 = vpack.c.b16 %v1624, %v1623
      %v1697 = vpack.c.b16 %v1540, %v1538
      %v1698 = vpack.c.b16 %v1626, %v1625
      %v1699 = vpack.c.b16 %v1544, %v1542
      %v1700 = vpack.c.b16 %v1628, %v1627
      %v1701 = vpack.c.b16 %v1548, %v1546
      %v1702 = vpack.c.b16 %v1662, %v1629
      %v1743 = vunpack.c.l.b16 %v1663
      %v1744 = vunpack.c.l.b16 %v1664
      %v1745 = vunpack.c.l.b16 %v1665
      %v1746 = vunpack.c.l.b16 %v1666
      %v1747 = vunpack.c.l.b16 %v1667
      %v1748 = vunpack.c.l.b16 %v1668
      %v1749 = vunpack.c.l.b16 %v1669
      %v1750 = vunpack.c.l.b16 %v1670
      %v1751 = vunpack.c.l.b16 %v1671
      %v1752 = vunpack.c.l.b16 %v1672
      %v1753 = vunpack.c.l.b16 %v1673
      %v1754 = vunpack.c.l.b16 %v1674
      %v1755 = vunpack.c.l.b16 %v1675
      %v1756 = vunpack.c.l.b16 %v1676
      %v1757 = vunpack.c.l.b16 %v1677
      %v1758 = vunpack.c.l.b16 %v1678
      %v1759 = vunpack.c.l.b16 %v1679
      %v1760 = vunpack.c.l.b16 %v1680
      %v1761 = vunpack.c.l.b16 %v1681
      %v1762 = vunpack.c.l.b16 %v1682
      %v1763 = vunpack.c.l.b16 %v1683
      %v1764 = vunpack.c.l.b16 %v1684
      %v1765 = vunpack.c.l.b16 %v1685
      %v1766 = vunpack.c.l.b16 %v1686
      %v1767 = vunpack.c.l.b16 %v1687
      %v1768 = vunpack.c.l.b16 %v1688
      %v1769 = vunpack.c.l.b16 %v1689
      %v1770 = vunpack.c.l.b16 %v1690
      %v1771 = vunpack.c.l.b16 %v1691
      %v1772 = vunpack.c.l.b16 %v1692
      %v1773 = vunpack.c.l.b16 %v1693
      %v1774 = vunpack.c.l.b16 %v1694
      %v1775 = vpack.c.b16 %v1744, %v1743
      %v1776 = vpack.c.b16 %v1746, %v1745
      %v1777 = vpack.c.b16 %v1748, %v1747
      %v1778 = vpack.c.b16 %v1750, %v1749
      %v1779 = vpack.c.b16 %v1752, %v1751
      %v1780 = vpack.c.b16 %v1754, %v1753
      %v1781 = vpack.c.b16 %v1756, %v1755
      %v1782 = vpack.c.b16 %v1758, %v1757
      %v1783 = vpack.c.b16 %v1760, %v1759
      %v1784 = vpack.c.b16 %v1762, %v1761
      %v1785 = vpack.c.b16 %v1764, %v1763
      %v1786 = vpack.c.b16 %v1766, %v1765
      %v1787 = vpack.c.b16 %v1768, %v1767
      %v1788 = vpack.c.b16 %v1770, %v1769
      %v1789 = vpack.c.b16 %v1772, %v1771
      %v1790 = vpack.c.b16 %v1774, %v1773
      %1807 = vmatpush.bf16.msra.mxu0 %v1782
      %1808 = vmatpush.bf16.msra.mxu0 %v1781
      %1809 = vmatpush.bf16.msra.mxu0 %v1780
      %1810 = vmatpush.bf16.msra.mxu0 %v1779
      %1811 = vmatpush.bf16.msra.mxu0 %v1778
      %1812 = vmatpush.bf16.msra.mxu0 %v1777
      %1813 = vmatpush.bf16.msra.mxu0 %v1776
      %1814 = vmatpush.bf16.msra.mxu0 %v1775
      %1815 = vmatmul.bf16.gmra.mxu0 %v1695
      %v1816 = vpop.f32.mrf.mxu0
      %v1817 = vadd.f32 0.0, %v1816
      %v1818 = vpop.f32.mrf.mxu0
      %v1819 = vadd.f32 0.0, %v1818
      %1820 = vmatmul.bf16.gmra.mxu0 %v1697
      %v1821 = vpop.f32.mrf.mxu0
      %v1822 = vadd.f32 0.0, %v1821
      %v1823 = vpop.f32.mrf.mxu0
      %v1824 = vadd.f32 0.0, %v1823
      %1825 = vmatmul.bf16.gmra.mxu0 %v1699
      %v1826 = vpop.f32.mrf.mxu0
      %v1827 = vadd.f32 0.0, %v1826
      %v1828 = vpop.f32.mrf.mxu0
      %v1829 = vadd.f32 0.0, %v1828
      %1830 = vmatmul.bf16.gmra.mxu0 %v1701
      %v1831 = vpop.f32.mrf.mxu0
      %v1832 = vadd.f32 0.0, %v1831
      %v1833 = vpop.f32.mrf.mxu0
      %v1834 = vadd.f32 0.0, %v1833
      %1835 = vdwg.mxu0
      %1836 = vmatpush.bf16.msra.mxu0 %v1790
      %1837 = vmatpush.bf16.msra.mxu0 %v1789
      %1838 = vmatpush.bf16.msra.mxu0 %v1788
      %1839 = vmatpush.bf16.msra.mxu0 %v1787
      %1840 = vmatpush.bf16.msra.mxu0 %v1786
      %1841 = vmatpush.bf16.msra.mxu0 %v1785
      %1842 = vmatpush.bf16.msra.mxu0 %v1784
      %1843 = vmatpush.bf16.msra.mxu0 %v1783
      %1844 = vmatmul.bf16.gmra.mxu0 %v1696
      %v1845 = vpop.f32.mrf.mxu0
      %v1846 = vadd.f32 %v1817, %v1845
      %v1847 = vpop.f32.mrf.mxu0
      %v1848 = vadd.f32 %v1819, %v1847
      %1849 = vmatmul.bf16.gmra.mxu0 %v1698
      %v1850 = vpop.f32.mrf.mxu0
      %v1851 = vadd.f32 %v1822, %v1850
      %v1852 = vpop.f32.mrf.mxu0
      %v1853 = vadd.f32 %v1824, %v1852
      %1854 = vmatmul.bf16.gmra.mxu0 %v1700
      %v1855 = vpop.f32.mrf.mxu0
      %v1856 = vadd.f32 %v1827, %v1855
      %v1857 = vpop.f32.mrf.mxu0
      %v1858 = vadd.f32 %v1829, %v1857
      %1859 = vmatmul.bf16.gmra.mxu0 %v1702
      %v1860 = vpop.f32.mrf.mxu0
      %v1861 = vadd.f32 %v1832, %v1860
      %v1862 = vpop.f32.mrf.mxu0
      %v1863 = vadd.f32 %v1834, %v1862
      %1864 = vdwg.mxu0
      %v1865 = vpack.c.b16 %v1534, %v1532
      %v1866 = vpack.c.b16 %v1623, %v1622
      %v1867 = vpack.c.b16 %v1538, %v1536
      %v1868 = vpack.c.b16 %v1625, %v1624
      %v1869 = vpack.c.b16 %v1542, %v1540
      %v1870 = vpack.c.b16 %v1627, %v1626
      %v1871 = vpack.c.b16 %v1546, %v1544
      %v1872 = vpack.c.b16 %v1629, %v1628
      %v1913 = vunpack.c.l.b16 %v1630
      %v1914 = vunpack.c.l.b16 %v1631
      %v1915 = vunpack.c.l.b16 %v1632
      %v1916 = vunpack.c.l.b16 %v1633
      %v1917 = vunpack.c.l.b16 %v1634
      %v1918 = vunpack.c.l.b16 %v1635
      %v1919 = vunpack.c.l.b16 %v1636
      %v1920 = vunpack.c.l.b16 %v1637
      %v1921 = vunpack.c.l.b16 %v1638
      %v1922 = vunpack.c.l.b16 %v1639
      %v1923 = vunpack.c.l.b16 %v1640
      %v1924 = vunpack.c.l.b16 %v1641
      %v1925 = vunpack.c.l.b16 %v1642
      %v1926 = vunpack.c.l.b16 %v1643
      %v1927 = vunpack.c.l.b16 %v1644
      %v1928 = vunpack.c.l.b16 %v1645
      %v1929 = vunpack.c.l.b16 %v1646
      %v1930 = vunpack.c.l.b16 %v1647
      %v1931 = vunpack.c.l.b16 %v1648
      %v1932 = vunpack.c.l.b16 %v1649
      %v1933 = vunpack.c.l.b16 %v1650
      %v1934 = vunpack.c.l.b16 %v1651
      %v1935 = vunpack.c.l.b16 %v1652
      %v1936 = vunpack.c.l.b16 %v1653
      %v1937 = vunpack.c.l.b16 %v1654
      %v1938 = vunpack.c.l.b16 %v1655
      %v1939 = vunpack.c.l.b16 %v1656
      %v1940 = vunpack.c.l.b16 %v1657
      %v1941 = vunpack.c.l.b16 %v1658
      %v1942 = vunpack.c.l.b16 %v1659
      %v1943 = vunpack.c.l.b16 %v1660
      %v1944 = vunpack.c.l.b16 %v1661
      %v1945 = vpack.c.b16 %v1914, %v1913
      %v1946 = vpack.c.b16 %v1916, %v1915
      %v1947 = vpack.c.b16 %v1918, %v1917
      %v1948 = vpack.c.b16 %v1920, %v1919
      %v1949 = vpack.c.b16 %v1922, %v1921
      %v1950 = vpack.c.b16 %v1924, %v1923
      %v1951 = vpack.c.b16 %v1926, %v1925
      %v1952 = vpack.c.b16 %v1928, %v1927
      %v1953 = vpack.c.b16 %v1930, %v1929
      %v1954 = vpack.c.b16 %v1932, %v1931
      %v1955 = vpack.c.b16 %v1934, %v1933
      %v1956 = vpack.c.b16 %v1936, %v1935
      %v1957 = vpack.c.b16 %v1938, %v1937
      %v1958 = vpack.c.b16 %v1940, %v1939
      %v1959 = vpack.c.b16 %v1942, %v1941
      %v1960 = vpack.c.b16 %v1944, %v1943
      %1977 = vmatpush.bf16.msra.mxu0 %v1952
      %1978 = vmatpush.bf16.msra.mxu0 %v1951
      %1979 = vmatpush.bf16.msra.mxu0 %v1950
      %1980 = vmatpush.bf16.msra.mxu0 %v1949
      %1981 = vmatpush.bf16.msra.mxu0 %v1948
      %1982 = vmatpush.bf16.msra.mxu0 %v1947
      %1983 = vmatpush.bf16.msra.mxu0 %v1946
      %1984 = vmatpush.bf16.msra.mxu0 %v1945
      %1985 = vmatmul.bf16.gmra.mxu0 %v1865
      %v1986 = vpop.f32.mrf.mxu0
      %v1987 = vadd.f32 %v1846, %v1986
      %v1988 = vpop.f32.mrf.mxu0
      %v1989 = vadd.f32 %v1848, %v1988
      %1990 = vmatmul.bf16.gmra.mxu0 %v1867
      %v1991 = vpop.f32.mrf.mxu0
      %v1992 = vadd.f32 %v1851, %v1991
      %v1993 = vpop.f32.mrf.mxu0
      %v1994 = vadd.f32 %v1853, %v1993
      %1995 = vmatmul.bf16.gmra.mxu0 %v1869
      %v1996 = vpop.f32.mrf.mxu0
      %v1997 = vadd.f32 %v1856, %v1996
      %v1998 = vpop.f32.mrf.mxu0
      %v1999 = vadd.f32 %v1858, %v1998
      %2000 = vmatmul.bf16.gmra.mxu0 %v1871
      %v2001 = vpop.f32.mrf.mxu0
      %v2002 = vadd.f32 %v1861, %v2001
      %v2003 = vpop.f32.mrf.mxu0
      %v2004 = vadd.f32 %v1863, %v2003
      %2005 = vdwg.mxu0
      %2006 = vmatpush.bf16.msra.mxu0 %v1960
      %2007 = vmatpush.bf16.msra.mxu0 %v1959
      %2008 = vmatpush.bf16.msra.mxu0 %v1958
      %2009 = vmatpush.bf16.msra.mxu0 %v1957
      %2010 = vmatpush.bf16.msra.mxu0 %v1956
      %2011 = vmatpush.bf16.msra.mxu0 %v1955
      %2012 = vmatpush.bf16.msra.mxu0 %v1954
      %2013 = vmatpush.bf16.msra.mxu0 %v1953
      %2014 = vmatmul.bf16.gmra.mxu0 %v1866
      %v2015 = vpop.f32.mrf.mxu0
      %v2016 = vadd.f32 %v1987, %v2015
      %v2017 = vpop.f32.mrf.mxu0
      %v2018 = vadd.f32 %v1989, %v2017
      %2019 = vmatmul.bf16.gmra.mxu0 %v1868
      %v2020 = vpop.f32.mrf.mxu0
      %v2021 = vadd.f32 %v1992, %v2020
      %v2022 = vpop.f32.mrf.mxu0
      %v2023 = vadd.f32 %v1994, %v2022
      %2024 = vmatmul.bf16.gmra.mxu0 %v1870
      %v2025 = vpop.f32.mrf.mxu0
      %v2026 = vadd.f32 %v1997, %v2025
      %v2027 = vpop.f32.mrf.mxu0
      %v2028 = vadd.f32 %v1999, %v2027
      %2029 = vmatmul.bf16.gmra.mxu0 %v1872
      %v2030 = vpop.f32.mrf.mxu0
      %v2031 = vadd.f32 %v2002, %v2030
      %v2032 = vpop.f32.mrf.mxu0
      %v2033 = vadd.f32 %v2004, %v2032
      %2034 = vdwg.mxu0
      %v2035 = vld [vmem:[%s1413] sm:$0xf]
      %v2036 = vld [vmem:[%s1413 + $0x8] sm:$0xf]
      %v2037 = vld [vmem:[%s1413 + $0x10] sm:$0xf]
      %v2038 = vld [vmem:[%s1413 + $0x18] sm:$0xf]
      %v2039 = vld [vmem:[%s1413 + $0x20] sm:$0xf]
      %v2040 = vld [vmem:[%s1413 + $0x28] sm:$0xf]
      %v2041 = vld [vmem:[%s1413 + $0x30] sm:$0xf]
      %v2042 = vld [vmem:[%s1413 + $0x38] sm:$0xf]
      %v2043 = vld [vmem:[%s1413 + $0x40] sm:$0xf]
      %v2044 = vld [vmem:[%s4 + $0x100] sm:$0xf]
      %v2045 = vld [vmem:[%s4 + $0x104] sm:$0xf]
      %v2046 = vld [vmem:[%s4 + $0x108] sm:$0xf]
      %v2047 = vld [vmem:[%s4 + $0x10c] sm:$0xf]
      %v2048 = vld [vmem:[%s4 + $0x110] sm:$0xf]
      %v2049 = vld [vmem:[%s4 + $0x114] sm:$0xf]
      %v2050 = vld [vmem:[%s4 + $0x118] sm:$0xf]
      %v2051 = vld [vmem:[%s4 + $0x11c] sm:$0xf]
      %v2052 = vld [vmem:[%s4 + $0x120] sm:$0xf]
      %v2053 = vld [vmem:[%s4 + $0x124] sm:$0xf]
      %v2054 = vld [vmem:[%s4 + $0x128] sm:$0xf]
      %v2055 = vld [vmem:[%s4 + $0x12c] sm:$0xf]
      %v2056 = vld [vmem:[%s4 + $0x130] sm:$0xf]
      %v2057 = vld [vmem:[%s4 + $0x134] sm:$0xf]
      %v2058 = vld [vmem:[%s4 + $0x138] sm:$0xf]
      %v2059 = vld [vmem:[%s4 + $0x13c] sm:$0xf]
      %v2068 = vunpack.c.l.b16 %v2035
      %v2069 = vunpack.c.l.b16 %v2036
      %v2070 = vunpack.c.l.b16 %v2037
      %v2071 = vunpack.c.l.b16 %v2038
      %v2072 = vunpack.c.l.b16 %v2039
      %v2073 = vunpack.c.l.b16 %v2040
      %v2074 = vunpack.c.l.b16 %v2041
      %v2075 = vunpack.c.l.b16 %v2042
      %v2076 = vpack.c.b16 %v2069, %v2068
      %v2077 = vpack.c.b16 %v2071, %v2070
      %v2078 = vpack.c.b16 %v2073, %v2072
      %v2079 = vpack.c.b16 %v2075, %v2074
      %v2100 = vunpack.c.l.b16 %v2044
      %v2101 = vunpack.c.l.b16 %v2045
      %v2102 = vunpack.c.l.b16 %v2046
      %v2103 = vunpack.c.l.b16 %v2047
      %v2104 = vunpack.c.l.b16 %v2048
      %v2105 = vunpack.c.l.b16 %v2049
      %v2106 = vunpack.c.l.b16 %v2050
      %v2107 = vunpack.c.l.b16 %v2051
      %v2108 = vunpack.c.l.b16 %v2052
      %v2109 = vunpack.c.l.b16 %v2053
      %v2110 = vunpack.c.l.b16 %v2054
      %v2111 = vunpack.c.l.b16 %v2055
      %v2112 = vunpack.c.l.b16 %v2056
      %v2113 = vunpack.c.l.b16 %v2057
      %v2114 = vunpack.c.l.b16 %v2058
      %v2115 = vunpack.c.l.b16 %v2059
      %v2116 = vpack.c.b16 %v2101, %v2100
      %v2117 = vpack.c.b16 %v2103, %v2102
      %v2118 = vpack.c.b16 %v2105, %v2104
      %v2119 = vpack.c.b16 %v2107, %v2106
      %v2120 = vpack.c.b16 %v2109, %v2108
      %v2121 = vpack.c.b16 %v2111, %v2110
      %v2122 = vpack.c.b16 %v2113, %v2112
      %v2123 = vpack.c.b16 %v2115, %v2114
      %2132 = vmatpush.bf16.msra.mxu0 %v2123
      %2133 = vmatpush.bf16.msra.mxu0 %v2122
      %2134 = vmatpush.bf16.msra.mxu0 %v2121
      %2135 = vmatpush.bf16.msra.mxu0 %v2120
      %2136 = vmatpush.bf16.msra.mxu0 %v2119
      %2137 = vmatpush.bf16.msra.mxu0 %v2118
      %2138 = vmatpush.bf16.msra.mxu0 %v2117
      %2139 = vmatpush.bf16.msra.mxu0 %v2116
      %2140 = vmatmul.bf16.gmra.mxu0 %v2076
      %v2141 = vpop.f32.mrf.mxu0
      %v2142 = vadd.f32 0.0, %v2141
      %v2143 = vpop.f32.mrf.mxu0
      %v2144 = vadd.f32 0.0, %v2143
      %2145 = vmatmul.bf16.gmra.mxu0 %v2077
      %v2146 = vpop.f32.mrf.mxu0
      %v2147 = vadd.f32 0.0, %v2146
      %v2148 = vpop.f32.mrf.mxu0
      %v2149 = vadd.f32 0.0, %v2148
      %2150 = vmatmul.bf16.gmra.mxu0 %v2078
      %v2151 = vpop.f32.mrf.mxu0
      %v2152 = vadd.f32 0.0, %v2151
      %v2153 = vpop.f32.mrf.mxu0
      %v2154 = vadd.f32 0.0, %v2153
      %2155 = vmatmul.bf16.gmra.mxu0 %v2079
      %v2156 = vpop.f32.mrf.mxu0
      %v2157 = vadd.f32 0.0, %v2156
      %v2158 = vpop.f32.mrf.mxu0
      %v2159 = vadd.f32 0.0, %v2158
      %2160 = vdwg.mxu0
      %v2161 = vadd.f32 %v2016, %v2142
      %v2162 = vadd.f32 %v2018, %v2144
      %v2163 = vadd.f32 %v2021, %v2147
      %v2164 = vadd.f32 %v2023, %v2149
      %v2165 = vadd.f32 %v2026, %v2152
      %v2166 = vadd.f32 %v2028, %v2154
      %v2167 = vadd.f32 %v2031, %v2157
      %v2168 = vadd.f32 %v2033, %v2159
      %v2169 = vld [vmem:[%s4 + $0x140] sm:$0xf]
      %v2170 = vld [vmem:[%s4 + $0x144] sm:$0xf]
      %v2171 = vld [vmem:[%s4 + $0x148] sm:$0xf]
      %v2172 = vld [vmem:[%s4 + $0x14c] sm:$0xf]
      %v2173 = vld [vmem:[%s4 + $0x150] sm:$0xf]
      %v2174 = vld [vmem:[%s4 + $0x154] sm:$0xf]
      %v2175 = vld [vmem:[%s4 + $0x158] sm:$0xf]
      %v2176 = vld [vmem:[%s4 + $0x15c] sm:$0xf]
      %v2177 = vld [vmem:[%s4 + $0x160] sm:$0xf]
      %v2178 = vld [vmem:[%s4 + $0x164] sm:$0xf]
      %v2179 = vld [vmem:[%s4 + $0x168] sm:$0xf]
      %v2180 = vld [vmem:[%s4 + $0x16c] sm:$0xf]
      %v2181 = vld [vmem:[%s4 + $0x170] sm:$0xf]
      %v2182 = vld [vmem:[%s4 + $0x174] sm:$0xf]
      %v2183 = vld [vmem:[%s4 + $0x178] sm:$0xf]
      %v2184 = vld [vmem:[%s4 + $0x17c] sm:$0xf]
      %v2186 = vunpack.c.l.b16 %v2043
      %v2187 = vpack.c.b16 %v2070, %v2069
      %v2188 = vpack.c.b16 %v2072, %v2071
      %v2189 = vpack.c.b16 %v2074, %v2073
      %v2190 = vpack.c.b16 %v2186, %v2075
      %v2211 = vunpack.c.l.b16 %v2169
      %v2212 = vunpack.c.l.b16 %v2170
      %v2213 = vunpack.c.l.b16 %v2171
      %v2214 = vunpack.c.l.b16 %v2172
      %v2215 = vunpack.c.l.b16 %v2173
      %v2216 = vunpack.c.l.b16 %v2174
      %v2217 = vunpack.c.l.b16 %v2175
      %v2218 = vunpack.c.l.b16 %v2176
      %v2219 = vunpack.c.l.b16 %v2177
      %v2220 = vunpack.c.l.b16 %v2178
      %v2221 = vunpack.c.l.b16 %v2179
      %v2222 = vunpack.c.l.b16 %v2180
      %v2223 = vunpack.c.l.b16 %v2181
      %v2224 = vunpack.c.l.b16 %v2182
      %v2225 = vunpack.c.l.b16 %v2183
      %v2226 = vunpack.c.l.b16 %v2184
      %v2227 = vpack.c.b16 %v2212, %v2211
      %v2228 = vpack.c.b16 %v2214, %v2213
      %v2229 = vpack.c.b16 %v2216, %v2215
      %v2230 = vpack.c.b16 %v2218, %v2217
      %v2231 = vpack.c.b16 %v2220, %v2219
      %v2232 = vpack.c.b16 %v2222, %v2221
      %v2233 = vpack.c.b16 %v2224, %v2223
      %v2234 = vpack.c.b16 %v2226, %v2225
      %2243 = vmatpush.bf16.msra.mxu0 %v2234
      %2244 = vmatpush.bf16.msra.mxu0 %v2233
      %2245 = vmatpush.bf16.msra.mxu0 %v2232
      %2246 = vmatpush.bf16.msra.mxu0 %v2231
      %2247 = vmatpush.bf16.msra.mxu0 %v2230
      %2248 = vmatpush.bf16.msra.mxu0 %v2229
      %2249 = vmatpush.bf16.msra.mxu0 %v2228
      %2250 = vmatpush.bf16.msra.mxu0 %v2227
      %2251 = vmatmul.bf16.gmra.mxu0 %v2187
      %v2252 = vpop.f32.mrf.mxu0
      %v2253 = vadd.f32 0.0, %v2252
      %v2254 = vpop.f32.mrf.mxu0
      %v2255 = vadd.f32 0.0, %v2254
      %2256 = vmatmul.bf16.gmra.mxu0 %v2188
      %v2257 = vpop.f32.mrf.mxu0
      %v2258 = vadd.f32 0.0, %v2257
      %v2259 = vpop.f32.mrf.mxu0
      %v2260 = vadd.f32 0.0, %v2259
      %2261 = vmatmul.bf16.gmra.mxu0 %v2189
      %v2262 = vpop.f32.mrf.mxu0
      %v2263 = vadd.f32 0.0, %v2262
      %v2264 = vpop.f32.mrf.mxu0
      %v2265 = vadd.f32 0.0, %v2264
      %2266 = vmatmul.bf16.gmra.mxu0 %v2190
      %v2267 = vpop.f32.mrf.mxu0
      %v2268 = vadd.f32 0.0, %v2267
      %v2269 = vpop.f32.mrf.mxu0
      %v2270 = vadd.f32 0.0, %v2269
      %2271 = vdwg.mxu0
      %v2272 = vadd.f32 %v2161, %v2253
      %v2273 = vadd.f32 %v2162, %v2255
      %v2274 = vadd.f32 %v2163, %v2258
      %v2275 = vadd.f32 %v2164, %v2260
      %v2276 = vadd.f32 %v2165, %v2263
      %v2277 = vadd.f32 %v2166, %v2265
      %v2278 = vadd.f32 %v2167, %v2268
      %v2279 = vadd.f32 %v2168, %v2270
      %v2280 = vld [vmem:[%s1428] sm:$0xf]
      %v2281 = vld [vmem:[%s1428 + $0x8] sm:$0xf]
      %v2282 = vld [vmem:[%s1428 + $0x10] sm:$0xf]
      %v2283 = vld [vmem:[%s1428 + $0x18] sm:$0xf]
      %v2284 = vld [vmem:[%s1428 + $0x20] sm:$0xf]
      %v2285 = vld [vmem:[%s1428 + $0x28] sm:$0xf]
      %v2286 = vld [vmem:[%s1428 + $0x30] sm:$0xf]
      %v2287 = vld [vmem:[%s1428 + $0x38] sm:$0xf]
      %v2288 = vld [vmem:[%s1428 + $0x4] sm:$0x1]
      %v2289 = vld [vmem:[%s1428 + $0xc] sm:$0x1]
      %v2290 = vld [vmem:[%s1428 + $0x14] sm:$0x1]
      %v2291 = vld [vmem:[%s1428 + $0x1c] sm:$0x1]
      %v2292 = vld [vmem:[%s1428 + $0x24] sm:$0x1]
      %v2293 = vld [vmem:[%s1428 + $0x2c] sm:$0x1]
      %v2294 = vld [vmem:[%s1428 + $0x34] sm:$0x1]
      %v2295 = vld [vmem:[%s1428 + $0x3c] sm:$0x1]
      %v2312 = vunpack.c.l.b16 %v2280
      %v2313 = vunpack.c.l.b16 %v2288
      %v2314 = vunpack.c.l.b16 %v2281
      %v2315 = vunpack.c.l.b16 %v2289
      %v2316 = vunpack.c.l.b16 %v2282
      %v2317 = vunpack.c.l.b16 %v2290
      %v2318 = vunpack.c.l.b16 %v2283
      %v2319 = vunpack.c.l.b16 %v2291
      %v2320 = vunpack.c.l.b16 %v2284
      %v2321 = vunpack.c.l.b16 %v2292
      %v2322 = vunpack.c.l.b16 %v2285
      %v2323 = vunpack.c.l.b16 %v2293
      %v2324 = vunpack.c.l.b16 %v2286
      %v2325 = vunpack.c.l.b16 %v2294
      %v2326 = vunpack.c.l.b16 %v2287
      %v2327 = vunpack.c.l.b16 %v2295
      %v2328 = vpack.c.b16 %v2313, %v2312
      %v2329 = vpack.c.b16 %v2315, %v2314
      %v2330 = vpack.c.b16 %v2317, %v2316
      %v2331 = vpack.c.b16 %v2319, %v2318
      %v2332 = vpack.c.b16 %v2321, %v2320
      %v2333 = vpack.c.b16 %v2323, %v2322
      %v2334 = vpack.c.b16 %v2325, %v2324
      %v2335 = vpack.c.b16 %v2327, %v2326
      %v2337 = vshrl.u32 %v2328, 16
      %v2339 = vshll.u32 %v2328, 16
      %v2341 = vrot.slane %v2339, 1
      %v2342 = vor.u32 %v2337, %v2341
      %v2344 = vshrl.u32 %v2329, 16
      %v2346 = vshll.u32 %v2329, 16
      %v2348 = vrot.slane %v2346, 1
      %v2349 = vor.u32 %v2344, %v2348
      %v2351 = vshrl.u32 %v2330, 16
      %v2353 = vshll.u32 %v2330, 16
      %v2355 = vrot.slane %v2353, 1
      %v2356 = vor.u32 %v2351, %v2355
      %v2358 = vshrl.u32 %v2331, 16
      %v2360 = vshll.u32 %v2331, 16
      %v2362 = vrot.slane %v2360, 1
      %v2363 = vor.u32 %v2358, %v2362
      %v2365 = vshrl.u32 %v2332, 16
      %v2367 = vshll.u32 %v2332, 16
      %v2369 = vrot.slane %v2367, 1
      %v2370 = vor.u32 %v2365, %v2369
      %v2372 = vshrl.u32 %v2333, 16
      %v2374 = vshll.u32 %v2333, 16
      %v2376 = vrot.slane %v2374, 1
      %v2377 = vor.u32 %v2372, %v2376
      %v2379 = vshrl.u32 %v2334, 16
      %v2381 = vshll.u32 %v2334, 16
      %v2383 = vrot.slane %v2381, 1
      %v2384 = vor.u32 %v2379, %v2383
      %v2386 = vshrl.u32 %v2335, 16
      %v2388 = vshll.u32 %v2335, 16
      %v2390 = vrot.slane %v2388, 1
      %v2391 = vor.u32 %v2386, %v2390
      %v2392 = vunpack.c.l.b16 %v2342
      %v2393 = vunpack.c.l.b16 %v2349
      %v2394 = vunpack.c.l.b16 %v2356
      %v2395 = vunpack.c.l.b16 %v2363
      %v2396 = vunpack.c.l.b16 %v2370
      %v2397 = vunpack.c.l.b16 %v2377
      %v2398 = vunpack.c.l.b16 %v2384
      %v2399 = vunpack.c.l.b16 %v2391
      %v2400 = vld [vmem:[%s4 + $0x180] sm:$0xf]
      %v2401 = vld [vmem:[%s4 + $0x184] sm:$0xf]
      %v2402 = vld [vmem:[%s4 + $0x188] sm:$0xf]
      %v2403 = vld [vmem:[%s4 + $0x18c] sm:$0xf]
      %v2404 = vld [vmem:[%s4 + $0x190] sm:$0xf]
      %v2405 = vld [vmem:[%s4 + $0x194] sm:$0xf]
      %v2406 = vld [vmem:[%s4 + $0x198] sm:$0xf]
      %v2407 = vld [vmem:[%s4 + $0x19c] sm:$0xf]
      %v2408 = vld [vmem:[%s4 + $0x1a0] sm:$0xf]
      %v2409 = vld [vmem:[%s4 + $0x1a4] sm:$0xf]
      %v2410 = vld [vmem:[%s4 + $0x1a8] sm:$0xf]
      %v2411 = vld [vmem:[%s4 + $0x1ac] sm:$0xf]
      %v2412 = vld [vmem:[%s4 + $0x1b0] sm:$0xf]
      %v2413 = vld [vmem:[%s4 + $0x1b4] sm:$0xf]
      %v2414 = vld [vmem:[%s4 + $0x1b8] sm:$0xf]
      %v2415 = vld [vmem:[%s4 + $0x1bc] sm:$0xf]
      %v2416 = vld [vmem:[%s4 + $0x1c0] sm:$0xf]
      %v2417 = vld [vmem:[%s4 + $0x1c4] sm:$0xf]
      %v2418 = vld [vmem:[%s4 + $0x1c8] sm:$0xf]
      %v2419 = vld [vmem:[%s4 + $0x1cc] sm:$0xf]
      %v2420 = vld [vmem:[%s4 + $0x1d0] sm:$0xf]
      %v2421 = vld [vmem:[%s4 + $0x1d4] sm:$0xf]
      %v2422 = vld [vmem:[%s4 + $0x1d8] sm:$0xf]
      %v2423 = vld [vmem:[%s4 + $0x1dc] sm:$0xf]
      %v2424 = vld [vmem:[%s4 + $0x1e0] sm:$0xf]
      %v2425 = vld [vmem:[%s4 + $0x1e4] sm:$0xf]
      %v2426 = vld [vmem:[%s4 + $0x1e8] sm:$0xf]
      %v2427 = vld [vmem:[%s4 + $0x1ec] sm:$0xf]
      %v2428 = vld [vmem:[%s4 + $0x1f0] sm:$0xf]
      %v2429 = vld [vmem:[%s4 + $0x1f4] sm:$0xf]
      %v2430 = vld [vmem:[%s4 + $0x1f8] sm:$0xf]
      %v2431 = vld [vmem:[%s4 + $0x1fc] sm:$0xf]
      %v2432 = vpack.c.b16 %v2314, %v2312
      %v2433 = vpack.c.b16 %v2393, %v2392
      %v2434 = vpack.c.b16 %v2318, %v2316
      %v2435 = vpack.c.b16 %v2395, %v2394
      %v2436 = vpack.c.b16 %v2322, %v2320
      %v2437 = vpack.c.b16 %v2397, %v2396
      %v2438 = vpack.c.b16 %v2326, %v2324
      %v2439 = vpack.c.b16 %v2399, %v2398
      %v2480 = vunpack.c.l.b16 %v2400
      %v2481 = vunpack.c.l.b16 %v2401
      %v2482 = vunpack.c.l.b16 %v2402
      %v2483 = vunpack.c.l.b16 %v2403
      %v2484 = vunpack.c.l.b16 %v2404
      %v2485 = vunpack.c.l.b16 %v2405
      %v2486 = vunpack.c.l.b16 %v2406
      %v2487 = vunpack.c.l.b16 %v2407
      %v2488 = vunpack.c.l.b16 %v2408
      %v2489 = vunpack.c.l.b16 %v2409
      %v2490 = vunpack.c.l.b16 %v2410
      %v2491 = vunpack.c.l.b16 %v2411
      %v2492 = vunpack.c.l.b16 %v2412
      %v2493 = vunpack.c.l.b16 %v2413
      %v2494 = vunpack.c.l.b16 %v2414
      %v2495 = vunpack.c.l.b16 %v2415
      %v2496 = vunpack.c.l.b16 %v2416
      %v2497 = vunpack.c.l.b16 %v2417
      %v2498 = vunpack.c.l.b16 %v2418
      %v2499 = vunpack.c.l.b16 %v2419
      %v2500 = vunpack.c.l.b16 %v2420
      %v2501 = vunpack.c.l.b16 %v2421
      %v2502 = vunpack.c.l.b16 %v2422
      %v2503 = vunpack.c.l.b16 %v2423
      %v2504 = vunpack.c.l.b16 %v2424
      %v2505 = vunpack.c.l.b16 %v2425
      %v2506 = vunpack.c.l.b16 %v2426
      %v2507 = vunpack.c.l.b16 %v2427
      %v2508 = vunpack.c.l.b16 %v2428
      %v2509 = vunpack.c.l.b16 %v2429
      %v2510 = vunpack.c.l.b16 %v2430
      %v2511 = vunpack.c.l.b16 %v2431
      %v2512 = vpack.c.b16 %v2481, %v2480
      %v2513 = vpack.c.b16 %v2483, %v2482
      %v2514 = vpack.c.b16 %v2485, %v2484
      %v2515 = vpack.c.b16 %v2487, %v2486
      %v2516 = vpack.c.b16 %v2489, %v2488
      %v2517 = vpack.c.b16 %v2491, %v2490
      %v2518 = vpack.c.b16 %v2493, %v2492
      %v2519 = vpack.c.b16 %v2495, %v2494
      %v2520 = vpack.c.b16 %v2497, %v2496
      %v2521 = vpack.c.b16 %v2499, %v2498
      %v2522 = vpack.c.b16 %v2501, %v2500
      %v2523 = vpack.c.b16 %v2503, %v2502
      %v2524 = vpack.c.b16 %v2505, %v2504
      %v2525 = vpack.c.b16 %v2507, %v2506
      %v2526 = vpack.c.b16 %v2509, %v2508
      %v2527 = vpack.c.b16 %v2511, %v2510
      %2544 = vmatpush.bf16.msra.mxu0 %v2519
      %2545 = vmatpush.bf16.msra.mxu0 %v2518
      %2546 = vmatpush.bf16.msra.mxu0 %v2517
      %2547 = vmatpush.bf16.msra.mxu0 %v2516
      %2548 = vmatpush.bf16.msra.mxu0 %v2515
      %2549 = vmatpush.bf16.msra.mxu0 %v2514
      %2550 = vmatpush.bf16.msra.mxu0 %v2513
      %2551 = vmatpush.bf16.msra.mxu0 %v2512
      %2552 = vmatmul.bf16.gmra.mxu0 %v2432
      %v2553 = vpop.f32.mrf.mxu0
      %v2554 = vadd.f32 0.0, %v2553
      %v2555 = vpop.f32.mrf.mxu0
      %v2556 = vadd.f32 0.0, %v2555
      %2557 = vmatmul.bf16.gmra.mxu0 %v2434
      %v2558 = vpop.f32.mrf.mxu0
      %v2559 = vadd.f32 0.0, %v2558
      %v2560 = vpop.f32.mrf.mxu0
      %v2561 = vadd.f32 0.0, %v2560
      %2562 = vmatmul.bf16.gmra.mxu0 %v2436
      %v2563 = vpop.f32.mrf.mxu0
      %v2564 = vadd.f32 0.0, %v2563
      %v2565 = vpop.f32.mrf.mxu0
      %v2566 = vadd.f32 0.0, %v2565
      %2567 = vmatmul.bf16.gmra.mxu0 %v2438
      %v2568 = vpop.f32.mrf.mxu0
      %v2569 = vadd.f32 0.0, %v2568
      %v2570 = vpop.f32.mrf.mxu0
      %v2571 = vadd.f32 0.0, %v2570
      %2572 = vdwg.mxu0
      %2573 = vmatpush.bf16.msra.mxu0 %v2527
      %2574 = vmatpush.bf16.msra.mxu0 %v2526
      %2575 = vmatpush.bf16.msra.mxu0 %v2525
      %2576 = vmatpush.bf16.msra.mxu0 %v2524
      %2577 = vmatpush.bf16.msra.mxu0 %v2523
      %2578 = vmatpush.bf16.msra.mxu0 %v2522
      %2579 = vmatpush.bf16.msra.mxu0 %v2521
      %2580 = vmatpush.bf16.msra.mxu0 %v2520
      %2581 = vmatmul.bf16.gmra.mxu0 %v2433
      %v2582 = vpop.f32.mrf.mxu0
      %v2583 = vadd.f32 %v2554, %v2582
      %v2584 = vpop.f32.mrf.mxu0
      %v2585 = vadd.f32 %v2556, %v2584
      %2586 = vmatmul.bf16.gmra.mxu0 %v2435
      %v2587 = vpop.f32.mrf.mxu0
      %v2588 = vadd.f32 %v2559, %v2587
      %v2589 = vpop.f32.mrf.mxu0
      %v2590 = vadd.f32 %v2561, %v2589
      %2591 = vmatmul.bf16.gmra.mxu0 %v2437
      %v2592 = vpop.f32.mrf.mxu0
      %v2593 = vadd.f32 %v2564, %v2592
      %v2594 = vpop.f32.mrf.mxu0
      %v2595 = vadd.f32 %v2566, %v2594
      %2596 = vmatmul.bf16.gmra.mxu0 %v2439
      %v2597 = vpop.f32.mrf.mxu0
      %v2598 = vadd.f32 %v2569, %v2597
      %v2599 = vpop.f32.mrf.mxu0
      %v2600 = vadd.f32 %v2571, %v2599
      %2601 = vdwg.mxu0
      %v2602 = vadd.f32 %v2272, %v2583
      %v2603 = vadd.f32 %v2273, %v2585
      %v2604 = vadd.f32 %v2274, %v2588
      %v2605 = vadd.f32 %v2275, %v2590
      %v2606 = vadd.f32 %v2276, %v2593
      %v2607 = vadd.f32 %v2277, %v2595
      %v2608 = vadd.f32 %v2278, %v2598
      %v2609 = vadd.f32 %v2279, %v2600
      %v2610 = vld [vmem:[%s1486] sm:$0xf]
      %v2611 = vld [vmem:[%s1486 + $0x8] sm:$0xf]
      %v2612 = vld [vmem:[%s1486 + $0x10] sm:$0xf]
      %v2613 = vld [vmem:[%s1486 + $0x18] sm:$0xf]
      %v2614 = vld [vmem:[%s1486 + $0x20] sm:$0xf]
      %v2615 = vld [vmem:[%s1486 + $0x28] sm:$0xf]
      %v2616 = vld [vmem:[%s1486 + $0x30] sm:$0xf]
      %v2617 = vld [vmem:[%s1486 + $0x38] sm:$0xf]
      %v2618 = vld [vmem:[%s4 + $0x200] sm:$0xf]
      %v2619 = vld [vmem:[%s4 + $0x204] sm:$0xf]
      %v2620 = vld [vmem:[%s4 + $0x208] sm:$0xf]
      %v2621 = vld [vmem:[%s4 + $0x20c] sm:$0xf]
      %v2622 = vld [vmem:[%s4 + $0x210] sm:$0xf]
      %v2623 = vld [vmem:[%s4 + $0x214] sm:$0xf]
      %v2624 = vld [vmem:[%s4 + $0x218] sm:$0xf]
      %v2625 = vld [vmem:[%s4 + $0x21c] sm:$0xf]
      %v2626 = vld [vmem:[%s4 + $0x220] sm:$0xf]
      %v2627 = vld [vmem:[%s4 + $0x224] sm:$0xf]
      %v2628 = vld [vmem:[%s4 + $0x228] sm:$0xf]
      %v2629 = vld [vmem:[%s4 + $0x22c] sm:$0xf]
      %v2630 = vld [vmem:[%s4 + $0x230] sm:$0xf]
      %v2631 = vld [vmem:[%s4 + $0x234] sm:$0xf]
      %v2632 = vld [vmem:[%s4 + $0x238] sm:$0xf]
      %v2633 = vld [vmem:[%s4 + $0x23c] sm:$0xf]
      %v2642 = vunpack.c.l.b16 %v2610
      %v2643 = vunpack.c.l.b16 %v2611
      %v2644 = vunpack.c.l.b16 %v2612
      %v2645 = vunpack.c.l.b16 %v2613
      %v2646 = vunpack.c.l.b16 %v2614
      %v2647 = vunpack.c.l.b16 %v2615
      %v2648 = vunpack.c.l.b16 %v2616
      %v2649 = vunpack.c.l.b16 %v2617
      %v2650 = vpack.c.b16 %v2643, %v2642
      %v2651 = vpack.c.b16 %v2645, %v2644
      %v2652 = vpack.c.b16 %v2647, %v2646
      %v2653 = vpack.c.b16 %v2649, %v2648
      %v2674 = vunpack.c.l.b16 %v2618
      %v2675 = vunpack.c.l.b16 %v2619
      %v2676 = vunpack.c.l.b16 %v2620
      %v2677 = vunpack.c.l.b16 %v2621
      %v2678 = vunpack.c.l.b16 %v2622
      %v2679 = vunpack.c.l.b16 %v2623
      %v2680 = vunpack.c.l.b16 %v2624
      %v2681 = vunpack.c.l.b16 %v2625
      %v2682 = vunpack.c.l.b16 %v2626
      %v2683 = vunpack.c.l.b16 %v2627
      %v2684 = vunpack.c.l.b16 %v2628
      %v2685 = vunpack.c.l.b16 %v2629
      %v2686 = vunpack.c.l.b16 %v2630
      %v2687 = vunpack.c.l.b16 %v2631
      %v2688 = vunpack.c.l.b16 %v2632
      %v2689 = vunpack.c.l.b16 %v2633
      %v2690 = vpack.c.b16 %v2675, %v2674
      %v2691 = vpack.c.b16 %v2677, %v2676
      %v2692 = vpack.c.b16 %v2679, %v2678
      %v2693 = vpack.c.b16 %v2681, %v2680
      %v2694 = vpack.c.b16 %v2683, %v2682
      %v2695 = vpack.c.b16 %v2685, %v2684
      %v2696 = vpack.c.b16 %v2687, %v2686
      %v2697 = vpack.c.b16 %v2689, %v2688
      %2706 = vmatpush.bf16.msra.mxu0 %v2697
      %2707 = vmatpush.bf16.msra.mxu0 %v2696
      %2708 = vmatpush.bf16.msra.mxu0 %v2695
      %2709 = vmatpush.bf16.msra.mxu0 %v2694
      %2710 = vmatpush.bf16.msra.mxu0 %v2693
      %2711 = vmatpush.bf16.msra.mxu0 %v2692
      %2712 = vmatpush.bf16.msra.mxu0 %v2691
      %2713 = vmatpush.bf16.msra.mxu0 %v2690
      %2714 = vmatmul.bf16.gmra.mxu0 %v2650
      %v2715 = vpop.f32.mrf.mxu0
      %v2716 = vadd.f32 0.0, %v2715
      %v2717 = vpop.f32.mrf.mxu0
      %v2718 = vadd.f32 0.0, %v2717
      %2719 = vmatmul.bf16.gmra.mxu0 %v2651
      %v2720 = vpop.f32.mrf.mxu0
      %v2721 = vadd.f32 0.0, %v2720
      %v2722 = vpop.f32.mrf.mxu0
      %v2723 = vadd.f32 0.0, %v2722
      %2724 = vmatmul.bf16.gmra.mxu0 %v2652
      %v2725 = vpop.f32.mrf.mxu0
      %v2726 = vadd.f32 0.0, %v2725
      %v2727 = vpop.f32.mrf.mxu0
      %v2728 = vadd.f32 0.0, %v2727
      %2729 = vmatmul.bf16.gmra.mxu0 %v2653
      %v2730 = vpop.f32.mrf.mxu0
      %v2731 = vadd.f32 0.0, %v2730
      %v2732 = vpop.f32.mrf.mxu0
      %v2733 = vadd.f32 0.0, %v2732
      %2734 = vdwg.mxu0
      %v2735 = vadd.f32 %v2602, %v2716
      %v2736 = vadd.f32 %v2603, %v2718
      %v2737 = vadd.f32 %v2604, %v2721
      %v2738 = vadd.f32 %v2605, %v2723
      %v2739 = vadd.f32 %v2606, %v2726
      %v2740 = vadd.f32 %v2607, %v2728
      %v2741 = vadd.f32 %v2608, %v2731
      %v2742 = vadd.f32 %v2609, %v2733
      %v2743 = vld [vmem:[%s5] sm:$0x1]
      %v2745 = vperm.slane %v2743, 0
      %v2747 = vmul.f32 %v2735, %v2745
      %v2748 = vmul.f32 %v2736, %v2745
      %v2749 = vmul.f32 %v2737, %v2745
      %v2750 = vmul.f32 %v2738, %v2745
      %v2751 = vmul.f32 %v2739, %v2745
      %v2752 = vmul.f32 %v2740, %v2745
      %v2753 = vmul.f32 %v2741, %v2745
      %v2754 = vmul.f32 %v2742, %v2745
      %v2755 = vld [vmem:[%s6] sm:$0x1]
      %v2757 = vperm.slane %v2755, 0
      %v2759 = vadd.f32 %v2747, %v2757
      %v2760 = vadd.f32 %v2748, %v2757
      %v2761 = vadd.f32 %v2749, %v2757
      %v2762 = vadd.f32 %v2750, %v2757
      %v2763 = vadd.f32 %v2751, %v2757
      %v2764 = vadd.f32 %v2752, %v2757
      %v2765 = vadd.f32 %v2753, %v2757
      %v2766 = vadd.f32 %v2754, %v2757
      %v2767 = vmax.f32 %v2759, 0.0
      %v2768 = vmax.f32 %v2760, 0.0
      %v2769 = vmax.f32 %v2761, 0.0
      %v2770 = vmax.f32 %v2762, 0.0
      %v2771 = vmax.f32 %v2763, 0.0
      %v2772 = vmax.f32 %v2764, 0.0
      %v2773 = vmax.f32 %v2765, 0.0
      %v2774 = vmax.f32 %v2766, 0.0
      %v2775 = vpack.c.bf16 %v2768, %v2767
      %v2776 = vpack.c.bf16 %v2770, %v2769
      %v2777 = vpack.c.bf16 %v2772, %v2771
      %v2778 = vpack.c.bf16 %v2774, %v2773
      %v2779 = vld [vmem:[%s7] sm:$0xf]
      %v2780 = vld [vmem:[%s7 + $0x4] sm:$0xf]
      %v2781 = vld [vmem:[%s7 + $0x8] sm:$0xf]
      %v2782 = vld [vmem:[%s7 + $0xc] sm:$0xf]
      %v2783 = vld [vmem:[%s7 + $0x10] sm:$0xf]
      %v2784 = vld [vmem:[%s7 + $0x14] sm:$0xf]
      %v2785 = vld [vmem:[%s7 + $0x18] sm:$0xf]
      %v2786 = vld [vmem:[%s7 + $0x1c] sm:$0xf]
      %v2787 = vld [vmem:[%s7 + $0x20] sm:$0xf]
      %v2788 = vld [vmem:[%s7 + $0x24] sm:$0xf]
      %v2789 = vld [vmem:[%s7 + $0x28] sm:$0xf]
      %v2790 = vld [vmem:[%s7 + $0x2c] sm:$0xf]
      %v2791 = vld [vmem:[%s7 + $0x30] sm:$0xf]
      %v2792 = vld [vmem:[%s7 + $0x34] sm:$0xf]
      %v2793 = vld [vmem:[%s7 + $0x38] sm:$0xf]
      %v2794 = vld [vmem:[%s7 + $0x3c] sm:$0xf]
      %v2811 = vunpack.c.l.b16 %v2779
      %v2812 = vunpack.c.l.b16 %v2780
      %v2813 = vunpack.c.l.b16 %v2781
      %v2814 = vunpack.c.l.b16 %v2782
      %v2815 = vunpack.c.l.b16 %v2783
      %v2816 = vunpack.c.l.b16 %v2784
      %v2817 = vunpack.c.l.b16 %v2785
      %v2818 = vunpack.c.l.b16 %v2786
      %v2819 = vunpack.c.l.b16 %v2787
      %v2820 = vunpack.c.l.b16 %v2788
      %v2821 = vunpack.c.l.b16 %v2789
      %v2822 = vunpack.c.l.b16 %v2790
      %v2823 = vunpack.c.l.b16 %v2791
      %v2824 = vunpack.c.l.b16 %v2792
      %v2825 = vunpack.c.l.b16 %v2793
      %v2826 = vunpack.c.l.b16 %v2794
      %v2827 = vpack.c.b16 %v2812, %v2811
      %v2828 = vpack.c.b16 %v2814, %v2813
      %v2829 = vpack.c.b16 %v2816, %v2815
      %v2830 = vpack.c.b16 %v2818, %v2817
      %v2831 = vpack.c.b16 %v2820, %v2819
      %v2832 = vpack.c.b16 %v2822, %v2821
      %v2833 = vpack.c.b16 %v2824, %v2823
      %v2834 = vpack.c.b16 %v2826, %v2825
      %2843 = vmatpush.bf16.msra.mxu0 %v2834
      %2844 = vmatpush.bf16.msra.mxu0 %v2833
      %2845 = vmatpush.bf16.msra.mxu0 %v2832
      %2846 = vmatpush.bf16.msra.mxu0 %v2831
      %2847 = vmatpush.bf16.msra.mxu0 %v2830
      %2848 = vmatpush.bf16.msra.mxu0 %v2829
      %2849 = vmatpush.bf16.msra.mxu0 %v2828
      %2850 = vmatpush.bf16.msra.mxu0 %v2827
      %2851 = vmatmul.bf16.gmra.mxu0 %v2775
      %v2852 = vpop.f32.mrf.mxu0
      %v2853 = vadd.f32 0.0, %v2852
      %v2854 = vpop.f32.mrf.mxu0
      %v2855 = vadd.f32 0.0, %v2854
      %2856 = vmatmul.bf16.gmra.mxu0 %v2776
      %v2857 = vpop.f32.mrf.mxu0
      %v2858 = vadd.f32 0.0, %v2857
      %v2859 = vpop.f32.mrf.mxu0
      %v2860 = vadd.f32 0.0, %v2859
      %2861 = vmatmul.bf16.gmra.mxu0 %v2777
      %v2862 = vpop.f32.mrf.mxu0
      %v2863 = vadd.f32 0.0, %v2862
      %v2864 = vpop.f32.mrf.mxu0
      %v2865 = vadd.f32 0.0, %v2864
      %2866 = vmatmul.bf16.gmra.mxu0 %v2778
      %v2867 = vpop.f32.mrf.mxu0
      %v2868 = vadd.f32 0.0, %v2867
      %v2869 = vpop.f32.mrf.mxu0
      %v2870 = vadd.f32 0.0, %v2869
      %2871 = vdwg.mxu0
      %v2872 = vld [vmem:[%s8] sm:$0x1]
      %v2874 = vperm.slane %v2872, 0
      %v2876 = vmul.f32 %v2853, %v2874
      %v2877 = vmul.f32 %v2855, %v2874
      %v2878 = vmul.f32 %v2858, %v2874
      %v2879 = vmul.f32 %v2860, %v2874
      %v2880 = vmul.f32 %v2863, %v2874
      %v2881 = vmul.f32 %v2865, %v2874
      %v2882 = vmul.f32 %v2868, %v2874
      %v2883 = vmul.f32 %v2870, %v2874
      %v2884 = vld [vmem:[%s9] sm:$0x1]
      %v2886 = vperm.slane %v2884, 0
      %v2888 = vadd.f32 %v2876, %v2886
      %v2889 = vadd.f32 %v2877, %v2886
      %v2890 = vadd.f32 %v2878, %v2886
      %v2891 = vadd.f32 %v2879, %v2886
      %v2892 = vadd.f32 %v2880, %v2886
      %v2893 = vadd.f32 %v2881, %v2886
      %v2894 = vadd.f32 %v2882, %v2886
      %v2895 = vadd.f32 %v2883, %v2886
      %s2896 = scalar_lea.vmem %s435, 216
      %v2897 = vld [vmem:[%s2896] sm:$0xf]
      %v2898 = vld [vmem:[%s2896 + $0x8] sm:$0xf]
      %v2899 = vld [vmem:[%s2896 + $0x10] sm:$0xf]
      %v2900 = vld [vmem:[%s2896 + $0x18] sm:$0xf]
      %v2901 = vld [vmem:[%s2896 + $0x20] sm:$0xf]
      %v2902 = vld [vmem:[%s2896 + $0x28] sm:$0xf]
      %v2903 = vld [vmem:[%s2896 + $0x30] sm:$0xf]
      %v2904 = vld [vmem:[%s2896 + $0x38] sm:$0xf]
      %v2905 = vld [vmem:[%s10] sm:$0xf]
      %v2906 = vld [vmem:[%s10 + $0x4] sm:$0xf]
      %v2907 = vld [vmem:[%s10 + $0x8] sm:$0xf]
      %v2908 = vld [vmem:[%s10 + $0xc] sm:$0xf]
      %v2909 = vld [vmem:[%s10 + $0x10] sm:$0xf]
      %v2910 = vld [vmem:[%s10 + $0x14] sm:$0xf]
      %v2911 = vld [vmem:[%s10 + $0x18] sm:$0xf]
      %v2912 = vld [vmem:[%s10 + $0x1c] sm:$0xf]
      %v2913 = vld [vmem:[%s10 + $0x20] sm:$0xf]
      %v2914 = vld [vmem:[%s10 + $0x24] sm:$0xf]
      %v2915 = vld [vmem:[%s10 + $0x28] sm:$0xf]
      %v2916 = vld [vmem:[%s10 + $0x2c] sm:$0xf]
      %v2917 = vld [vmem:[%s10 + $0x30] sm:$0xf]
      %v2918 = vld [vmem:[%s10 + $0x34] sm:$0xf]
      %v2919 = vld [vmem:[%s10 + $0x38] sm:$0xf]
      %v2920 = vld [vmem:[%s10 + $0x3c] sm:$0xf]
      %v2929 = vunpack.c.l.b16 %v2897
      %v2930 = vunpack.c.l.b16 %v2898
      %v2931 = vunpack.c.l.b16 %v2899
      %v2932 = vunpack.c.l.b16 %v2900
      %v2933 = vunpack.c.l.b16 %v2901
      %v2934 = vunpack.c.l.b16 %v2902
      %v2935 = vunpack.c.l.b16 %v2903
      %v2936 = vunpack.c.l.b16 %v2904
      %v2937 = vpack.c.b16 %v2930, %v2929
      %v2938 = vpack.c.b16 %v2932, %v2931
      %v2939 = vpack.c.b16 %v2934, %v2933
      %v2940 = vpack.c.b16 %v2936, %v2935
      %v2961 = vunpack.c.l.b16 %v2905
      %v2962 = vunpack.c.l.b16 %v2906
      %v2963 = vunpack.c.l.b16 %v2907
      %v2964 = vunpack.c.l.b16 %v2908
      %v2965 = vunpack.c.l.b16 %v2909
      %v2966 = vunpack.c.l.b16 %v2910
      %v2967 = vunpack.c.l.b16 %v2911
      %v2968 = vunpack.c.l.b16 %v2912
      %v2969 = vunpack.c.l.b16 %v2913
      %v2970 = vunpack.c.l.b16 %v2914
      %v2971 = vunpack.c.l.b16 %v2915
      %v2972 = vunpack.c.l.b16 %v2916
      %v2973 = vunpack.c.l.b16 %v2917
      %v2974 = vunpack.c.l.b16 %v2918
      %v2975 = vunpack.c.l.b16 %v2919
      %v2976 = vunpack.c.l.b16 %v2920
      %v2977 = vpack.c.b16 %v2962, %v2961
      %v2978 = vpack.c.b16 %v2964, %v2963
      %v2979 = vpack.c.b16 %v2966, %v2965
      %v2980 = vpack.c.b16 %v2968, %v2967
      %v2981 = vpack.c.b16 %v2970, %v2969
      %v2982 = vpack.c.b16 %v2972, %v2971
      %v2983 = vpack.c.b16 %v2974, %v2973
      %v2984 = vpack.c.b16 %v2976, %v2975
      %2993 = vmatpush.bf16.msra.mxu0 %v2984
      %2994 = vmatpush.bf16.msra.mxu0 %v2983
      %2995 = vmatpush.bf16.msra.mxu0 %v2982
      %2996 = vmatpush.bf16.msra.mxu0 %v2981
      %2997 = vmatpush.bf16.msra.mxu0 %v2980
      %2998 = vmatpush.bf16.msra.mxu0 %v2979
      %2999 = vmatpush.bf16.msra.mxu0 %v2978
      %3000 = vmatpush.bf16.msra.mxu0 %v2977
      %3001 = vmatmul.bf16.gmra.mxu0 %v2937
      %v3002 = vpop.f32.mrf.mxu0
      %v3003 = vadd.f32 0.0, %v3002
      %v3004 = vpop.f32.mrf.mxu0
      %v3005 = vadd.f32 0.0, %v3004
      %3006 = vmatmul.bf16.gmra.mxu0 %v2938
      %v3007 = vpop.f32.mrf.mxu0
      %v3008 = vadd.f32 0.0, %v3007
      %v3009 = vpop.f32.mrf.mxu0
      %v3010 = vadd.f32 0.0, %v3009
      %3011 = vmatmul.bf16.gmra.mxu0 %v2939
      %v3012 = vpop.f32.mrf.mxu0
      %v3013 = vadd.f32 0.0, %v3012
      %v3014 = vpop.f32.mrf.mxu0
      %v3015 = vadd.f32 0.0, %v3014
      %3016 = vmatmul.bf16.gmra.mxu0 %v2940
      %v3017 = vpop.f32.mrf.mxu0
      %v3018 = vadd.f32 0.0, %v3017
      %v3019 = vpop.f32.mrf.mxu0
      %v3020 = vadd.f32 0.0, %v3019
      %3021 = vdwg.mxu0
      %v3022 = vld [vmem:[%s11] sm:$0x1]
      %v3024 = vperm.slane %v3022, 0
      %v3026 = vmul.f32 %v3003, %v3024
      %v3027 = vmul.f32 %v3005, %v3024
      %v3028 = vmul.f32 %v3008, %v3024
      %v3029 = vmul.f32 %v3010, %v3024
      %v3030 = vmul.f32 %v3013, %v3024
      %v3031 = vmul.f32 %v3015, %v3024
      %v3032 = vmul.f32 %v3018, %v3024
      %v3033 = vmul.f32 %v3020, %v3024
      %v3034 = vld [vmem:[%s12] sm:$0x1]
      %v3036 = vperm.slane %v3034, 0
      %v3038 = vadd.f32 %v3026, %v3036
      %v3039 = vadd.f32 %v3027, %v3036
      %v3040 = vadd.f32 %v3028, %v3036
      %v3041 = vadd.f32 %v3029, %v3036
      %v3042 = vadd.f32 %v3030, %v3036
      %v3043 = vadd.f32 %v3031, %v3036
      %v3044 = vadd.f32 %v3032, %v3036
      %v3045 = vadd.f32 %v3033, %v3036
      %v3046 = vadd.f32 %v2888, %v3038
      %v3047 = vadd.f32 %v2889, %v3039
      %v3048 = vadd.f32 %v2890, %v3040
      %v3049 = vadd.f32 %v2891, %v3041
      %v3050 = vadd.f32 %v2892, %v3042
      %v3051 = vadd.f32 %v2893, %v3043
      %v3052 = vadd.f32 %v2894, %v3044
      %v3053 = vadd.f32 %v2895, %v3045
      %v3054 = vmax.f32 %v3046, 0.0
      %v3055 = vmax.f32 %v3047, 0.0
      %v3056 = vmax.f32 %v3048, 0.0
      %v3057 = vmax.f32 %v3049, 0.0
      %v3058 = vmax.f32 %v3050, 0.0
      %v3059 = vmax.f32 %v3051, 0.0
      %v3060 = vmax.f32 %v3052, 0.0
      %v3061 = vmax.f32 %v3053, 0.0
      %v3062 = vpack.c.bf16 %v3054, %v3054
      %v3063 = vpack.c.bf16 %v3055, %v3055
      %v3064 = vpack.c.bf16 %v3056, %v3056
      %v3065 = vpack.c.bf16 %v3057, %v3057
      %v3066 = vpack.c.bf16 %v3058, %v3058
      %v3067 = vpack.c.bf16 %v3059, %v3059
      %v3068 = vpack.c.bf16 %v3060, %v3060
      %v3069 = vpack.c.bf16 %v3061, %v3061
      %3070 = vst [vmem:[%s440] sm:$0xf] %v3062
      %3071 = vst [vmem:[%s440 + $0x4] sm:$0xf] %v3063
      %3072 = vst [vmem:[%s440 + $0x8] sm:$0xf] %v3064
      %3073 = vst [vmem:[%s440 + $0xc] sm:$0xf] %v3065
      %3074 = vst [vmem:[%s440 + $0x10] sm:$0xf] %v3066
      %3075 = vst [vmem:[%s440 + $0x14] sm:$0xf] %v3067
      %3076 = vst [vmem:[%s440 + $0x18] sm:$0xf] %v3068
      %3077 = vst [vmem:[%s440 + $0x1c] sm:$0xf] %v3069
      %p3078 = scmp.lt.s32.totalorder %s24, 1
      %s3079 = scalar_select %p3078, %s24, 1
      %s3080 = smul.addr %s3079, 8
      %s3081 = smul.addr %s3080, 4
      %s3082 = scalar_lea.vmem %s13, %s3081
      // Predicated region
      $region73: #{bottleneck_forward.1} parent=71 // pred_check
        %p3083 = pneg %p320
      $region74: #{bottleneck_forward.1} parent=71 // pred_check_branch
        %3085 = sbr.rel (%p3083) target = $region76
      $region75: #{bottleneck_forward.1} parent=71 // pred_region
        _
      $region76: #{bottleneck_forward.1} parent=71 // pred_fallthru
        _
    $region72: #{bottleneck_forward.1} parent=5 // pred_fallthru
      _
    %p3086 = scmp.le.s32.totalorder 2, %s19
    // Predicated region
    $region77: #{bottleneck_forward.1} parent=5 // pred_check
      %p3087 = pneg %p3086
    $region78: #{bottleneck_forward.1} parent=5 // pred_check_branch
      %3089 = sbr.rel (%p3087) target = $region80
    $region79: #{bottleneck_forward.1} parent=5 // pred_region
      %s3090 = ssub.s32 %s19, 2
      // Predicated region
      $region81: #{bottleneck_forward.1} parent=79 // pred_check
        %p3091 = pneg %p326
      $region82: #{bottleneck_forward.1} parent=79 // pred_check_branch
        %3093 = sbr.rel (%p3091) target = $region84
      $region83: #{bottleneck_forward.1} parent=79 // pred_region
        %p3094 = scmp.lt.s32.totalorder %s25, 1
        %s3095 = scalar_select %p3094, %s25, 1
        %s3096 = smul.addr %s3095, 8
        %s3097 = smul.addr %s3096, 4
        %s3098 = scalar_lea.vmem %s13, %s3097
      $region84: #{bottleneck_forward.1} parent=79 // pred_fallthru
        _
    $region80: #{bottleneck_forward.1} parent=5 // pred_fallthru
      _
  $region6: #{bottleneck_forward.1} parent=0 // loop_footer
    %s23 = sadd.s32 1, %s19
  $region7: #{bottleneck_forward.1} parent=0 // loop_footer_branch
    %18 = sbr.rel target = $region3
  $region8: #{bottleneck_forward.1} parent=0 // loop_exit
    _

</llo_original>
